<compile_context>
chip_gen: v7x
topology: tpu7x:2x2x1
jax: 0.10.0
libtpu: 0.0.40
codegen_flags: <defaults>
</compile_context>

<pallas_src>
import functools

import numpy as np
import jax
import jax.numpy as jnp
from jax.experimental import pallas as pl
from jax.experimental.pallas import tpu as pltpu

NEG_SLOPE = 0.3   # module explicitly uses LeakyReLU(negative_slope=0.3)
BN_EPS = 1e-5

# Matmul-operand / inter-kernel-activation dtype.  jnp.bfloat16 on v6e/v7x for
# bf16-native MXU peak (three chained bf16 convs may exceed the 5e-4 demo
# tolerance -- re-validate); keep f32 for v5e and for the strict demo check.
MXU_DTYPE = jnp.float32


def _lrelu(x):
    return jnp.where(x >= 0, x, NEG_SLOPE * x)


def _pick_block_images(N, H, target_rows=128):
    """Largest divisor of N with B*H <= target_rows (>=1)."""
    b = max(1, min(N, target_rows // max(H, 1)))
    while N % b:
        b -= 1
    return b


# ----------------------------------------------------------------------------
# Kernel A: fused conv1 + LReLU + conv2 + LReLU + conv3 (+ packed BN partials).
# B images per grid step.  Pad scratch = B stacked (H+2)-row slabs of width
# (W+2)*C; only the halo (2 rows per image + trailing 2*C columns) is zeroed
# per step -- compute never writes it.
# ----------------------------------------------------------------------------
def conv_chain_kernel(x_ref, wb_ref, act_ref, stat_ref, pad_ref, *, B, H, W, C):
    WC = W * C
    Hp = H + 2
    Lm = B * Hp - 2          # rows streamed per band matmul (~10% boundary waste)

    # --- halo-only zeroing (trailing width-pad columns + per-image halo rows)
    pad_ref[:, WC:] = jnp.zeros_like(pad_ref[:, WC:])
    zero_row = jnp.zeros((1, WC), jnp.float32)
    for i in range(B):
        pad_ref[i * Hp:i * Hp + 1, 0:WC] = zero_row
        pad_ref[i * Hp + H + 1:i * Hp + H + 2, 0:WC] = zero_row

    # --- load the B input images into the slab interiors
    for i in range(B):
        pad_ref[i * Hp + 1:i * Hp + 1 + H, 0:WC] = x_ref[i].astype(jnp.float32)

    def conv3x3(base):
        # 3 lane-dense band matmuls over the whole stacked slab.
        acc = jnp.zeros((Lm, WC), jnp.float32)
        for dy in range(3):
            lhs = pad_ref[dy:dy + Lm, :].astype(wb_ref.dtype)
            acc = acc + jnp.dot(lhs, wb_ref[base + dy],
                                preferred_element_type=jnp.float32)
        return acc

    a = _lrelu(conv3x3(0))                         # conv1 + LReLU
    for i in range(B):
        pad_ref[i * Hp + 1:i * Hp + 1 + H, 0:WC] = a[i * Hp:i * Hp + H]
    a = _lrelu(conv3x3(3))                         # conv2 + LReLU
    for i in range(B):
        pad_ref[i * Hp + 1:i * Hp + 1 + H, 0:WC] = a[i * Hp:i * Hp + H]
    a = conv3x3(6)                                 # conv3 (BN comes next)

    # --- write activations + packed per-step BN partial sums (valid rows only)
    s = jnp.zeros((1, WC), jnp.float32)
    sq = jnp.zeros((1, WC), jnp.float32)
    for i in range(B):
        blk = a[i * Hp:i * Hp + H]
        act_ref[i] = blk.astype(act_ref.dtype)
        s = s + jnp.sum(blk, axis=0, keepdims=True)
        sq = sq + jnp.sum(blk * blk, axis=0, keepdims=True)
    stat_ref[0] = jnp.concatenate([s, sq], axis=0)


def conv_chain(x2d, wb, *, B, H, W, C):
    N = x2d.shape[0]
    WC = W * C
    steps = N // B
    kern = functools.partial(conv_chain_kernel, B=B, H=H, W=W, C=C)
    return pl.pallas_call(
        kern,
        out_shape=(jax.ShapeDtypeStruct((N, H, WC), MXU_DTYPE),
                   jax.ShapeDtypeStruct((steps, 2, WC), jnp.float32)),
        grid=(steps,),
        in_specs=[pl.BlockSpec((B, H, WC), lambda n: (n, 0, 0)),
                  pl.BlockSpec((9, (W + 2) * C, WC), lambda n: (0, 0, 0))],
        out_specs=(pl.BlockSpec((B, H, WC), lambda n: (n, 0, 0)),
                   pl.BlockSpec((1, 2, WC), lambda n: (n, 0, 0))),
        scratch_shapes=[pltpu.VMEM((B * (H + 2), (W + 2) * C), jnp.float32)],
        compiler_params=pltpu.CompilerParams(
            dimension_semantics=("parallel",),
            vmem_limit_bytes=32 * 1024 * 1024),
    )(x2d, wb)


# ----------------------------------------------------------------------------
# Kernel B: fused BN-normalize + LReLU + ConvTranspose2d(k=2, s=2, bias).
# B images flattened to one (B*H, W*Cin) @ (W*Cin, 2*W*2*Cout) matmul; output
# kept in (H, 2*W*2*Cout) column order (ky, w, kx, co) -- no in-kernel reshape.
# ----------------------------------------------------------------------------
def bn_lrelu_upsample_kernel(a_ref, scale_ref, shift_ref, wblk_ref, bias_ref,
                             out_ref, *, B, H):
    WC = a_ref.shape[-1]
    a = a_ref[...].reshape(B * H, WC).astype(jnp.float32)     # free merge
    xn = _lrelu(a * scale_ref[...] + shift_ref[...])          # BN + LReLU (VPU)
    y = jnp.dot(xn.astype(wblk_ref.dtype), wblk_ref[...],
                preferred_element_type=jnp.float32) + bias_ref[...]
    out_ref[...] = y.reshape(B, H, -1).astype(out_ref.dtype)  # free split


def bn_lrelu_upsample(act, scale_l, shift_l, wblock, bias_l, *, B, H, W, C_out):
    N, _, WC = act.shape
    OUTC = 2 * W * 2 * C_out
    kern = functools.partial(bn_lrelu_upsample_kernel, B=B, H=H)
    return pl.pallas_call(
        kern,
        out_shape=jax.ShapeDtypeStruct((N, H, OUTC), jnp.float32),
        grid=(N // B,),
        in_specs=[pl.BlockSpec((B, H, WC), lambda n: (n, 0, 0)),
                  pl.BlockSpec((1, WC), lambda n: (0, 0)),
                  pl.BlockSpec((1, WC), lambda n: (0, 0)),
                  pl.BlockSpec((WC, OUTC), lambda n: (0, 0)),
                  pl.BlockSpec((1, OUTC), lambda n: (0, 0))],
        out_specs=pl.BlockSpec((B, H, OUTC), lambda n: (n, 0, 0)),
        compiler_params=pltpu.CompilerParams(
            dimension_semantics=("parallel",),
            vmem_limit_bytes=32 * 1024 * 1024),
    )(act, scale_l, shift_l, wblock, bias_l)


# ----------------------------------------------------------------------------
# One-time weight reshuffles (plain JAX / numpy, outside the kernels).
# ----------------------------------------------------------------------------
def _conv_band_weights(w_oihw, W):
    """PyTorch OIHW (Cout,Cin,3,3) -> (3, (W+2)*Cin, W*Cout) banded matrices
    matching the lane-dense (H, W*C) activation layout.  Column block W of the
    padded buffer is the always-zero width padding."""
    w = jnp.transpose(w_oihw, (2, 3, 1, 0)).astype(jnp.float32)  # (3,3,Cin,Cout)
    Cin, Cout = w.shape[2], w.shape[3]
    bands = []
    for dy in range(3):
        acc = jnp.zeros(((W + 2) * Cin, W * Cout), jnp.float32)
        for dx in range(3):
            sel = np.zeros((W + 2, W), np.float32)
            for wo in range(W):
                col = wo - 1 + dx                  # input column for output wo
                b = col if 0 <= col < W else W     # out-of-range -> zero block
                sel[b, wo] = 1.0
            blk = jnp.einsum('pw,io->piwo', jnp.asarray(sel), w[dy, dx])
            acc = acc + blk.reshape((W + 2) * Cin, W * Cout)
        bands.append(acc)
    return jnp.stack(bands, axis=0)


def _upsample_block_weight(wt_pt, W):
    """PyTorch ConvTranspose2d weight (Cin,Cout,2,2) -> block-diagonal
    (W*Cin, 2*W*2*Cout) so a single matmul emits all 4 taps in
    (ky, w, kx, co) column order."""
    wt = jnp.transpose(wt_pt, (2, 3, 0, 1)).astype(jnp.float32)  # (ky,kx,Cin,Cout)
    Cin, Cout = wt.shape[2], wt.shape[3]
    eye_w = jnp.eye(W, dtype=jnp.float32)
    blk = jnp.einsum('wv,kxio->wikvxo', eye_w, wt)   # (W,Cin,2,W,2,Cout)
    return blk.reshape(W * Cin, 2 * W * 2 * Cout)


# ----------------------------------------------------------------------------
# Full forward pass (NCHW in / NCHW out, matching the PyTorch module).
# ----------------------------------------------------------------------------
def conv_transpose_block_forward(x_nchw, p):
    N, C_in, H, W = x_nchw.shape
    C_out = p["wt"].shape[1]
    WC = W * C_in
    B = _pick_block_images(N, H, target_rows=128)

    # NCHW -> lane-dense (N, H, W*C)
    x2d = jnp.transpose(x_nchw, (0, 2, 3, 1)).reshape(N, H, WC)

    wb = jnp.concatenate([_conv_band_weights(p["w1"], W),
                          _conv_band_weights(p["w2"], W),
                          _conv_band_weights(p["w3"], W)],
                         axis=0).astype(MXU_DTYPE)            # (9,(W+2)C,WC)

    act, stats = conv_chain(x2d, wb, B=B, H=H, W=W, C=C_in)

    # BatchNorm batch statistics (training-mode forward, biased variance),
    # folded from packed per-step lane partials in tiny JAX glue.
    count = N * H * W
    s = stats[:, 0, :].sum(axis=0).reshape(W, C_in).sum(axis=0)
    sq = stats[:, 1, :].sum(axis=0).reshape(W, C_in).sum(axis=0)
    mean = s / count
    # f32 E[x^2]-E[x]^2 (clamped); fine for normalized-scale activations.
    var = jnp.maximum(sq / count - mean * mean, 0.0)
    inv = jax.lax.rsqrt(var + BN_EPS)
    scale = p["gamma"] * inv
    shift = p["beta"] - mean * scale
    # TODO(synk): PyTorch train-mode running-stat momentum update is a module
    # side effect (not part of the returned value) and is not reproduced here.

    scale_l = jnp.tile(scale, W)[None, :]                     # (1, W*Cin)
    shift_l = jnp.tile(shift, W)[None, :]
    wblock = _upsample_block_weight(p["wt"], W).astype(MXU_DTYPE)
    bias_l = jnp.tile(p["bias_t"], 2 * W * 2)[None, :]        # (1, 2*W*2*Cout)

    y = bn_lrelu_upsample(act, scale_l, shift_l, wblock, bias_l,
                          B=B, H=H, W=W, C_out=C_out)         # (N, H, 2*W*2*Cout)
    # columns are (ky, w, kx, co): merging (H,ky)->2H and (w,kx)->2W is a
    # free, contiguous reshape.
    y = y.reshape(N, 2 * H, 2 * W, C_out)
    return jnp.transpose(y, (0, 3, 1, 2))                     # NCHW


# ----------------------------------------------------------------------------
# Pure-JAX reference (for correctness check).
# ----------------------------------------------------------------------------
def ref_forward(x, p):
    def conv3(t, w):
        return jax.lax.conv_general_dilated(
            t, w, window_strides=(1, 1), padding=((1, 1), (1, 1)),
            dimension_numbers=("NCHW", "OIHW", "NCHW"))

    lr = lambda t: jnp.where(t >= 0, t, NEG_SLOPE * t)
    out = lr(conv3(x, p["w1"]))
    out = lr(conv3(out, p["w2"]))
    out = conv3(out, p["w3"])
    mean = out.mean(axis=(0, 2, 3), keepdims=True)
    var = ((out - mean) ** 2).mean(axis=(0, 2, 3), keepdims=True)
    out = (out - mean) / jnp.sqrt(var + BN_EPS)
    out = out * p["gamma"][None, :, None, None] + p["beta"][None, :, None, None]
    out = lr(out)
    y = jnp.einsum("nchw,cdkl->ndhkwl", out, p["wt"])
    N, Cout, H, _, W, _ = y.shape
    y = y.reshape(N, Cout, 2 * H, 2 * W) + p["bias_t"][None, :, None, None]
    return y


if __name__ == "__main__":
    # planes = inplanes // 2; W*C_in = 128 lanes; N chosen so two grid steps of
    # 8 images each stream M = 128-144 rows per matmul.
    N, inplanes, planes, H, W = 16, 8, 4, 16, 16

    key = jax.random.PRNGKey(0)
    k = jax.random.split(key, 8)
    params = {
        "w1": 0.1 * jax.random.normal(k[0], (inplanes, inplanes, 3, 3), jnp.float32),
        "w2": 0.1 * jax.random.normal(k[1], (inplanes, inplanes, 3, 3), jnp.float32),
        "w3": 0.1 * jax.random.normal(k[2], (inplanes, inplanes, 3, 3), jnp.float32),
        "gamma": 1.0 + 0.1 * jax.random.normal(k[3], (inplanes,), jnp.float32),
        "beta": 0.1 * jax.random.normal(k[4], (inplanes,), jnp.float32),
        "wt": 0.1 * jax.random.normal(k[5], (inplanes, planes, 2, 2), jnp.float32),
        "bias_t": 0.1 * jax.random.normal(k[6], (planes,), jnp.float32),
    }
    x = jax.random.normal(k[7], (N, inplanes, H, W), jnp.float32)

    y = jax.jit(conv_transpose_block_forward)(x, params)
    y = jax.block_until_ready(y)

    y_ref = ref_forward(x, params)
    assert y.shape == (N, planes, 2 * H, 2 * W), y.shape
    err = float(jnp.max(jnp.abs(y - y_ref)))
    if err > 5e-4:
        raise AssertionError(f"mismatch vs reference: max abs err = {err}")

    print("KERNEL_OK")
</pallas_src>

<mosaic_0001>
module attributes {stable_mosaic.version = 11 : i64} {
  func.func @conv_chain_kernel(%arg0: i32, %arg1: memref<8x16x128xf32, #tpu.memory_space<vmem>>, %arg2: memref<9x144x128xf32, #tpu.memory_space<vmem>>, %arg3: memref<8x16x128xf32, #tpu.memory_space<vmem>>, %arg4: memref<1x2x128xf32, #tpu.memory_space<vmem>>, %arg5: memref<144x144xf32, #tpu.memory_space<vmem>>) attributes {dimension_semantics = [#tpu.dimension_semantics<parallel>], iteration_bounds = array<i64: 2>, scalar_prefetch = 0 : i64, scratch_operands = 1 : i64, tpu.core_type = #tpu.core_type<tc>, window_params = [{transform_indices = @transform_0, window_bounds = array<i64: 8, 16, 128>}, {pipeline_mode = #tpu.pipeline_mode<synchronous>, transform_indices = @transform_1, window_bounds = array<i64: 9, 144, 128>}, {transform_indices = @transform_2, window_bounds = array<i64: 8, 16, 128>}, {transform_indices = @transform_3, window_bounds = array<i64: 1, 2, 128>}]} {
    %cst = arith.constant 0.000000e+00 : f32
    %0 = vector.broadcast %cst : f32 to vector<144x16xf32>
    %c0 = arith.constant 0 : index
    %c128 = arith.constant 128 : index
    %1 = vector.load %arg5[%c0, %c128] : memref<144x144xf32, #tpu.memory_space<vmem>>, vector<144x16xf32>
    tpu.vector_store %arg5[%c0, %c128], %0 {strides = array<i32>} : memref<144x144xf32, #tpu.memory_space<vmem>>, vector<144x16xf32>,
    %cst_0 = arith.constant 0.000000e+00 : f32
    %2 = vector.broadcast %cst_0 : f32 to vector<1x128xf32>
    %c0_1 = arith.constant 0 : index
    %c0_2 = arith.constant 0 : index
    %3 = vector.load %arg5[%c0_1, %c0_2] : memref<144x144xf32, #tpu.memory_space<vmem>>, vector<1x128xf32>
    tpu.vector_store %arg5[%c0_1, %c0_2], %2 {strides = array<i32>} : memref<144x144xf32, #tpu.memory_space<vmem>>, vector<1x128xf32>,
    %c17 = arith.constant 17 : index
    %c0_3 = arith.constant 0 : index
    %4 = vector.load %arg5[%c17, %c0_3] : memref<144x144xf32, #tpu.memory_space<vmem>>, vector<1x128xf32>
    tpu.vector_store %arg5[%c17, %c0_3], %2 {strides = array<i32>} : memref<144x144xf32, #tpu.memory_space<vmem>>, vector<1x128xf32>,
    %c18 = arith.constant 18 : index
    %c0_4 = arith.constant 0 : index
    %5 = vector.load %arg5[%c18, %c0_4] : memref<144x144xf32, #tpu.memory_space<vmem>>, vector<1x128xf32>
    tpu.vector_store %arg5[%c18, %c0_4], %2 {strides = array<i32>} : memref<144x144xf32, #tpu.memory_space<vmem>>, vector<1x128xf32>,
    %c35 = arith.constant 35 : index
    %c0_5 = arith.constant 0 : index
    %6 = vector.load %arg5[%c35, %c0_5] : memref<144x144xf32, #tpu.memory_space<vmem>>, vector<1x128xf32>
    tpu.vector_store %arg5[%c35, %c0_5], %2 {strides = array<i32>} : memref<144x144xf32, #tpu.memory_space<vmem>>, vector<1x128xf32>,
    %c36 = arith.constant 36 : index
    %c0_6 = arith.constant 0 : index
    %7 = vector.load %arg5[%c36, %c0_6] : memref<144x144xf32, #tpu.memory_space<vmem>>, vector<1x128xf32>
    tpu.vector_store %arg5[%c36, %c0_6], %2 {strides = array<i32>} : memref<144x144xf32, #tpu.memory_space<vmem>>, vector<1x128xf32>,
    %c53 = arith.constant 53 : index
    %c0_7 = arith.constant 0 : index
    %8 = vector.load %arg5[%c53, %c0_7] : memref<144x144xf32, #tpu.memory_space<vmem>>, vector<1x128xf32>
    tpu.vector_store %arg5[%c53, %c0_7], %2 {strides = array<i32>} : memref<144x144xf32, #tpu.memory_space<vmem>>, vector<1x128xf32>,
    %c54 = arith.constant 54 : index
    %c0_8 = arith.constant 0 : index
    %9 = vector.load %arg5[%c54, %c0_8] : memref<144x144xf32, #tpu.memory_space<vmem>>, vector<1x128xf32>
    tpu.vector_store %arg5[%c54, %c0_8], %2 {strides = array<i32>} : memref<144x144xf32, #tpu.memory_space<vmem>>, vector<1x128xf32>,
    %c71 = arith.constant 71 : index
    %c0_9 = arith.constant 0 : index
    %10 = vector.load %arg5[%c71, %c0_9] : memref<144x144xf32, #tpu.memory_space<vmem>>, vector<1x128xf32>
    tpu.vector_store %arg5[%c71, %c0_9], %2 {strides = array<i32>} : memref<144x144xf32, #tpu.memory_space<vmem>>, vector<1x128xf32>,
    %c72 = arith.constant 72 : index
    %c0_10 = arith.constant 0 : index
    %11 = vector.load %arg5[%c72, %c0_10] : memref<144x144xf32, #tpu.memory_space<vmem>>, vector<1x128xf32>
    tpu.vector_store %arg5[%c72, %c0_10], %2 {strides = array<i32>} : memref<144x144xf32, #tpu.memory_space<vmem>>, vector<1x128xf32>,
    %c89 = arith.constant 89 : index
    %c0_11 = arith.constant 0 : index
    %12 = vector.load %arg5[%c89, %c0_11] : memref<144x144xf32, #tpu.memory_space<vmem>>, vector<1x128xf32>
    tpu.vector_store %arg5[%c89, %c0_11], %2 {strides = array<i32>} : memref<144x144xf32, #tpu.memory_space<vmem>>, vector<1x128xf32>,
    %c90 = arith.constant 90 : index
    %c0_12 = arith.constant 0 : index
    %13 = vector.load %arg5[%c90, %c0_12] : memref<144x144xf32, #tpu.memory_space<vmem>>, vector<1x128xf32>
    tpu.vector_store %arg5[%c90, %c0_12], %2 {strides = array<i32>} : memref<144x144xf32, #tpu.memory_space<vmem>>, vector<1x128xf32>,
    %c107 = arith.constant 107 : index
    %c0_13 = arith.constant 0 : index
    %14 = vector.load %arg5[%c107, %c0_13] : memref<144x144xf32, #tpu.memory_space<vmem>>, vector<1x128xf32>
    tpu.vector_store %arg5[%c107, %c0_13], %2 {strides = array<i32>} : memref<144x144xf32, #tpu.memory_space<vmem>>, vector<1x128xf32>,
    %c108 = arith.constant 108 : index
    %c0_14 = arith.constant 0 : index
    %15 = vector.load %arg5[%c108, %c0_14] : memref<144x144xf32, #tpu.memory_space<vmem>>, vector<1x128xf32>
    tpu.vector_store %arg5[%c108, %c0_14], %2 {strides = array<i32>} : memref<144x144xf32, #tpu.memory_space<vmem>>, vector<1x128xf32>,
    %c125 = arith.constant 125 : index
    %c0_15 = arith.constant 0 : index
    %16 = vector.load %arg5[%c125, %c0_15] : memref<144x144xf32, #tpu.memory_space<vmem>>, vector<1x128xf32>
    tpu.vector_store %arg5[%c125, %c0_15], %2 {strides = array<i32>} : memref<144x144xf32, #tpu.memory_space<vmem>>, vector<1x128xf32>,
    %c126 = arith.constant 126 : index
    %c0_16 = arith.constant 0 : index
    %17 = vector.load %arg5[%c126, %c0_16] : memref<144x144xf32, #tpu.memory_space<vmem>>, vector<1x128xf32>
    tpu.vector_store %arg5[%c126, %c0_16], %2 {strides = array<i32>} : memref<144x144xf32, #tpu.memory_space<vmem>>, vector<1x128xf32>,
    %c143 = arith.constant 143 : index
    %c0_17 = arith.constant 0 : index
    %18 = vector.load %arg5[%c143, %c0_17] : memref<144x144xf32, #tpu.memory_space<vmem>>, vector<1x128xf32>
    tpu.vector_store %arg5[%c143, %c0_17], %2 {strides = array<i32>} : memref<144x144xf32, #tpu.memory_space<vmem>>, vector<1x128xf32>,
    %c0_18 = arith.constant 0 : index
    %c0_19 = arith.constant 0 : index
    %c0_20 = arith.constant 0 : index
    %19 = vector.load %arg1[%c0_18, %c0_19, %c0_20] : memref<8x16x128xf32, #tpu.memory_space<vmem>>, vector<1x16x128xf32>
    %20 = vector.shape_cast %19 : vector<1x16x128xf32> to vector<16x128xf32>
    %c1 = arith.constant 1 : index
    %c0_21 = arith.constant 0 : index
    %21 = vector.load %arg5[%c1, %c0_21] : memref<144x144xf32, #tpu.memory_space<vmem>>, vector<16x128xf32>
    tpu.vector_store %arg5[%c1, %c0_21], %20 {strides = array<i32>} : memref<144x144xf32, #tpu.memory_space<vmem>>, vector<16x128xf32>,
    %c1_22 = arith.constant 1 : index
    %c0_23 = arith.constant 0 : index
    %c0_24 = arith.constant 0 : index
    %22 = vector.load %arg1[%c1_22, %c0_23, %c0_24] : memref<8x16x128xf32, #tpu.memory_space<vmem>>, vector<1x16x128xf32>
    %23 = vector.shape_cast %22 : vector<1x16x128xf32> to vector<16x128xf32>
    %c19 = arith.constant 19 : index
    %c0_25 = arith.constant 0 : index
    %24 = vector.load %arg5[%c19, %c0_25] : memref<144x144xf32, #tpu.memory_space<vmem>>, vector<16x128xf32>
    tpu.vector_store %arg5[%c19, %c0_25], %23 {strides = array<i32>} : memref<144x144xf32, #tpu.memory_space<vmem>>, vector<16x128xf32>,
    %c2 = arith.constant 2 : index
    %c0_26 = arith.constant 0 : index
    %c0_27 = arith.constant 0 : index
    %25 = vector.load %arg1[%c2, %c0_26, %c0_27] : memref<8x16x128xf32, #tpu.memory_space<vmem>>, vector<1x16x128xf32>
    %26 = vector.shape_cast %25 : vector<1x16x128xf32> to vector<16x128xf32>
    %c37 = arith.constant 37 : index
    %c0_28 = arith.constant 0 : index
    %27 = vector.load %arg5[%c37, %c0_28] : memref<144x144xf32, #tpu.memory_space<vmem>>, vector<16x128xf32>
    tpu.vector_store %arg5[%c37, %c0_28], %26 {strides = array<i32>} : memref<144x144xf32, #tpu.memory_space<vmem>>, vector<16x128xf32>,
    %c3 = arith.constant 3 : index
    %c0_29 = arith.constant 0 : index
    %c0_30 = arith.constant 0 : index
    %28 = vector.load %arg1[%c3, %c0_29, %c0_30] : memref<8x16x128xf32, #tpu.memory_space<vmem>>, vector<1x16x128xf32>
    %29 = vector.shape_cast %28 : vector<1x16x128xf32> to vector<16x128xf32>
    %c55 = arith.constant 55 : index
    %c0_31 = arith.constant 0 : index
    %30 = vector.load %arg5[%c55, %c0_31] : memref<144x144xf32, #tpu.memory_space<vmem>>, vector<16x128xf32>
    tpu.vector_store %arg5[%c55, %c0_31], %29 {strides = array<i32>} : memref<144x144xf32, #tpu.memory_space<vmem>>, vector<16x128xf32>,
    %c4 = arith.constant 4 : index
    %c0_32 = arith.constant 0 : index
    %c0_33 = arith.constant 0 : index
    %31 = vector.load %arg1[%c4, %c0_32, %c0_33] : memref<8x16x128xf32, #tpu.memory_space<vmem>>, vector<1x16x128xf32>
    %32 = vector.shape_cast %31 : vector<1x16x128xf32> to vector<16x128xf32>
    %c73 = arith.constant 73 : index
    %c0_34 = arith.constant 0 : index
    %33 = vector.load %arg5[%c73, %c0_34] : memref<144x144xf32, #tpu.memory_space<vmem>>, vector<16x128xf32>
    tpu.vector_store %arg5[%c73, %c0_34], %32 {strides = array<i32>} : memref<144x144xf32, #tpu.memory_space<vmem>>, vector<16x128xf32>,
    %c5 = arith.constant 5 : index
    %c0_35 = arith.constant 0 : index
    %c0_36 = arith.constant 0 : index
    %34 = vector.load %arg1[%c5, %c0_35, %c0_36] : memref<8x16x128xf32, #tpu.memory_space<vmem>>, vector<1x16x128xf32>
    %35 = vector.shape_cast %34 : vector<1x16x128xf32> to vector<16x128xf32>
    %c91 = arith.constant 91 : index
    %c0_37 = arith.constant 0 : index
    %36 = vector.load %arg5[%c91, %c0_37] : memref<144x144xf32, #tpu.memory_space<vmem>>, vector<16x128xf32>
    tpu.vector_store %arg5[%c91, %c0_37], %35 {strides = array<i32>} : memref<144x144xf32, #tpu.memory_space<vmem>>, vector<16x128xf32>,
    %c6 = arith.constant 6 : index
    %c0_38 = arith.constant 0 : index
    %c0_39 = arith.constant 0 : index
    %37 = vector.load %arg1[%c6, %c0_38, %c0_39] : memref<8x16x128xf32, #tpu.memory_space<vmem>>, vector<1x16x128xf32>
    %38 = vector.shape_cast %37 : vector<1x16x128xf32> to vector<16x128xf32>
    %c109 = arith.constant 109 : index
    %c0_40 = arith.constant 0 : index
    %39 = vector.load %arg5[%c109, %c0_40] : memref<144x144xf32, #tpu.memory_space<vmem>>, vector<16x128xf32>
    tpu.vector_store %arg5[%c109, %c0_40], %38 {strides = array<i32>} : memref<144x144xf32, #tpu.memory_space<vmem>>, vector<16x128xf32>,
    %c7 = arith.constant 7 : index
    %c0_41 = arith.constant 0 : index
    %c0_42 = arith.constant 0 : index
    %40 = vector.load %arg1[%c7, %c0_41, %c0_42] : memref<8x16x128xf32, #tpu.memory_space<vmem>>, vector<1x16x128xf32>
    %41 = vector.shape_cast %40 : vector<1x16x128xf32> to vector<16x128xf32>
    %c127 = arith.constant 127 : index
    %c0_43 = arith.constant 0 : index
    %42 = vector.load %arg5[%c127, %c0_43] : memref<144x144xf32, #tpu.memory_space<vmem>>, vector<16x128xf32>
    tpu.vector_store %arg5[%c127, %c0_43], %41 {strides = array<i32>} : memref<144x144xf32, #tpu.memory_space<vmem>>, vector<16x128xf32>,
    %cst_44 = arith.constant 0.000000e+00 : f32
    %43 = vector.broadcast %cst_44 : f32 to vector<142x128xf32>
    %c0_45 = arith.constant 0 : index
    %c0_46 = arith.constant 0 : index
    %44 = vector.load %arg5[%c0_45, %c0_46] : memref<144x144xf32, #tpu.memory_space<vmem>>, vector<142x144xf32>
    %c0_47 = arith.constant 0 : index
    %c0_48 = arith.constant 0 : index
    %c0_49 = arith.constant 0 : index
    %45 = vector.load %arg2[%c0_47, %c0_48, %c0_49] : memref<9x144x128xf32, #tpu.memory_space<vmem>>, vector<1x144x128xf32>
    %46 = vector.shape_cast %45 : vector<1x144x128xf32> to vector<144x128xf32>
    %cst_50 = arith.constant dense<0.000000e+00> : vector<142x128xf32>
    %47 = tpu.matmul %44, %46, %cst_50 {dimension_numbers = #tpu.dot_dimension_numbers<[1], [0], [0], [1], [0, 0, 1, 1], [], []>} : vector<142x144xf32>, vector<144x128xf32>, vector<142x128xf32> -> vector<142x128xf32>
    %48 = arith.addf %43, %47 : vector<142x128xf32>
    %c1_51 = arith.constant 1 : index
    %c0_52 = arith.constant 0 : index
    %49 = vector.load %arg5[%c1_51, %c0_52] : memref<144x144xf32, #tpu.memory_space<vmem>>, vector<142x144xf32>
    %c1_53 = arith.constant 1 : index
    %c0_54 = arith.constant 0 : index
    %c0_55 = arith.constant 0 : index
    %50 = vector.load %arg2[%c1_53, %c0_54, %c0_55] : memref<9x144x128xf32, #tpu.memory_space<vmem>>, vector<1x144x128xf32>
    %51 = vector.shape_cast %50 : vector<1x144x128xf32> to vector<144x128xf32>
    %cst_56 = arith.constant dense<0.000000e+00> : vector<142x128xf32>
    %52 = tpu.matmul %49, %51, %cst_56 {dimension_numbers = #tpu.dot_dimension_numbers<[1], [0], [0], [1], [0, 0, 1, 1], [], []>} : vector<142x144xf32>, vector<144x128xf32>, vector<142x128xf32> -> vector<142x128xf32>
    %53 = arith.addf %48, %52 : vector<142x128xf32>
    %c2_57 = arith.constant 2 : index
    %c0_58 = arith.constant 0 : index
    %54 = vector.load %arg5[%c2_57, %c0_58] : memref<144x144xf32, #tpu.memory_space<vmem>>, vector<142x144xf32>
    %c2_59 = arith.constant 2 : index
    %c0_60 = arith.constant 0 : index
    %c0_61 = arith.constant 0 : index
    %55 = vector.load %arg2[%c2_59, %c0_60, %c0_61] : memref<9x144x128xf32, #tpu.memory_space<vmem>>, vector<1x144x128xf32>
    %56 = vector.shape_cast %55 : vector<1x144x128xf32> to vector<144x128xf32>
    %cst_62 = arith.constant dense<0.000000e+00> : vector<142x128xf32>
    %57 = tpu.matmul %54, %56, %cst_62 {dimension_numbers = #tpu.dot_dimension_numbers<[1], [0], [0], [1], [0, 0, 1, 1], [], []>} : vector<142x144xf32>, vector<144x128xf32>, vector<142x128xf32> -> vector<142x128xf32>
    %58 = arith.addf %53, %57 : vector<142x128xf32>
    %cst_63 = arith.constant 0.000000e+00 : f32
    %59 = vector.broadcast %cst_63 : f32 to vector<142x128xf32>
    %60 = arith.cmpf oge, %58, %59 : vector<142x128xf32>
    %cst_64 = arith.constant 3.000000e-01 : f32
    %61 = vector.broadcast %cst_64 : f32 to vector<142x128xf32>
    %62 = arith.mulf %61, %58 : vector<142x128xf32>
    %63 = arith.select %60, %58, %62 : vector<142x128xi1>, vector<142x128xf32>
    %64 = vector.extract_strided_slice %63 {offsets = [0, 0], sizes = [16, 128], strides = [1, 1]} : vector<142x128xf32> to vector<16x128xf32>
    %c1_65 = arith.constant 1 : index
    %c0_66 = arith.constant 0 : index
    %65 = vector.load %arg5[%c1_65, %c0_66] : memref<144x144xf32, #tpu.memory_space<vmem>>, vector<16x128xf32>
    tpu.vector_store %arg5[%c1_65, %c0_66], %64 {strides = array<i32>} : memref<144x144xf32, #tpu.memory_space<vmem>>, vector<16x128xf32>,
    %66 = vector.extract_strided_slice %63 {offsets = [18, 0], sizes = [16, 128], strides = [1, 1]} : vector<142x128xf32> to vector<16x128xf32>
    %c19_67 = arith.constant 19 : index
    %c0_68 = arith.constant 0 : index
    %67 = vector.load %arg5[%c19_67, %c0_68] : memref<144x144xf32, #tpu.memory_space<vmem>>, vector<16x128xf32>
    tpu.vector_store %arg5[%c19_67, %c0_68], %66 {strides = array<i32>} : memref<144x144xf32, #tpu.memory_space<vmem>>, vector<16x128xf32>,
    %68 = vector.extract_strided_slice %63 {offsets = [36, 0], sizes = [16, 128], strides = [1, 1]} : vector<142x128xf32> to vector<16x128xf32>
    %c37_69 = arith.constant 37 : index
    %c0_70 = arith.constant 0 : index
    %69 = vector.load %arg5[%c37_69, %c0_70] : memref<144x144xf32, #tpu.memory_space<vmem>>, vector<16x128xf32>
    tpu.vector_store %arg5[%c37_69, %c0_70], %68 {strides = array<i32>} : memref<144x144xf32, #tpu.memory_space<vmem>>, vector<16x128xf32>,
    %70 = vector.extract_strided_slice %63 {offsets = [54, 0], sizes = [16, 128], strides = [1, 1]} : vector<142x128xf32> to vector<16x128xf32>
    %c55_71 = arith.constant 55 : index
    %c0_72 = arith.constant 0 : index
    %71 = vector.load %arg5[%c55_71, %c0_72] : memref<144x144xf32, #tpu.memory_space<vmem>>, vector<16x128xf32>
    tpu.vector_store %arg5[%c55_71, %c0_72], %70 {strides = array<i32>} : memref<144x144xf32, #tpu.memory_space<vmem>>, vector<16x128xf32>,
    %72 = vector.extract_strided_slice %63 {offsets = [72, 0], sizes = [16, 128], strides = [1, 1]} : vector<142x128xf32> to vector<16x128xf32>
    %c73_73 = arith.constant 73 : index
    %c0_74 = arith.constant 0 : index
    %73 = vector.load %arg5[%c73_73, %c0_74] : memref<144x144xf32, #tpu.memory_space<vmem>>, vector<16x128xf32>
    tpu.vector_store %arg5[%c73_73, %c0_74], %72 {strides = array<i32>} : memref<144x144xf32, #tpu.memory_space<vmem>>, vector<16x128xf32>,
    %74 = vector.extract_strided_slice %63 {offsets = [90, 0], sizes = [16, 128], strides = [1, 1]} : vector<142x128xf32> to vector<16x128xf32>
    %c91_75 = arith.constant 91 : index
    %c0_76 = arith.constant 0 : index
    %75 = vector.load %arg5[%c91_75, %c0_76] : memref<144x144xf32, #tpu.memory_space<vmem>>, vector<16x128xf32>
    tpu.vector_store %arg5[%c91_75, %c0_76], %74 {strides = array<i32>} : memref<144x144xf32, #tpu.memory_space<vmem>>, vector<16x128xf32>,
    %76 = vector.extract_strided_slice %63 {offsets = [108, 0], sizes = [16, 128], strides = [1, 1]} : vector<142x128xf32> to vector<16x128xf32>
    %c109_77 = arith.constant 109 : index
    %c0_78 = arith.constant 0 : index
    %77 = vector.load %arg5[%c109_77, %c0_78] : memref<144x144xf32, #tpu.memory_space<vmem>>, vector<16x128xf32>
    tpu.vector_store %arg5[%c109_77, %c0_78], %76 {strides = array<i32>} : memref<144x144xf32, #tpu.memory_space<vmem>>, vector<16x128xf32>,
    %78 = vector.extract_strided_slice %63 {offsets = [126, 0], sizes = [16, 128], strides = [1, 1]} : vector<142x128xf32> to vector<16x128xf32>
    %c127_79 = arith.constant 127 : index
    %c0_80 = arith.constant 0 : index
    %79 = vector.load %arg5[%c127_79, %c0_80] : memref<144x144xf32, #tpu.memory_space<vmem>>, vector<16x128xf32>
    tpu.vector_store %arg5[%c127_79, %c0_80], %78 {strides = array<i32>} : memref<144x144xf32, #tpu.memory_space<vmem>>, vector<16x128xf32>,
    %cst_81 = arith.constant 0.000000e+00 : f32
    %80 = vector.broadcast %cst_81 : f32 to vector<142x128xf32>
    %c0_82 = arith.constant 0 : index
    %c0_83 = arith.constant 0 : index
    %81 = vector.load %arg5[%c0_82, %c0_83] : memref<144x144xf32, #tpu.memory_space<vmem>>, vector<142x144xf32>
    %c3_84 = arith.constant 3 : index
    %c0_85 = arith.constant 0 : index
    %c0_86 = arith.constant 0 : index
    %82 = vector.load %arg2[%c3_84, %c0_85, %c0_86] : memref<9x144x128xf32, #tpu.memory_space<vmem>>, vector<1x144x128xf32>
    %83 = vector.shape_cast %82 : vector<1x144x128xf32> to vector<144x128xf32>
    %cst_87 = arith.constant dense<0.000000e+00> : vector<142x128xf32>
    %84 = tpu.matmul %81, %83, %cst_87 {dimension_numbers = #tpu.dot_dimension_numbers<[1], [0], [0], [1], [0, 0, 1, 1], [], []>} : vector<142x144xf32>, vector<144x128xf32>, vector<142x128xf32> -> vector<142x128xf32>
    %85 = arith.addf %80, %84 : vector<142x128xf32>
    %c1_88 = arith.constant 1 : index
    %c0_89 = arith.constant 0 : index
    %86 = vector.load %arg5[%c1_88, %c0_89] : memref<144x144xf32, #tpu.memory_space<vmem>>, vector<142x144xf32>
    %c4_90 = arith.constant 4 : index
    %c0_91 = arith.constant 0 : index
    %c0_92 = arith.constant 0 : index
    %87 = vector.load %arg2[%c4_90, %c0_91, %c0_92] : memref<9x144x128xf32, #tpu.memory_space<vmem>>, vector<1x144x128xf32>
    %88 = vector.shape_cast %87 : vector<1x144x128xf32> to vector<144x128xf32>
    %cst_93 = arith.constant dense<0.000000e+00> : vector<142x128xf32>
    %89 = tpu.matmul %86, %88, %cst_93 {dimension_numbers = #tpu.dot_dimension_numbers<[1], [0], [0], [1], [0, 0, 1, 1], [], []>} : vector<142x144xf32>, vector<144x128xf32>, vector<142x128xf32> -> vector<142x128xf32>
    %90 = arith.addf %85, %89 : vector<142x128xf32>
    %c2_94 = arith.constant 2 : index
    %c0_95 = arith.constant 0 : index
    %91 = vector.load %arg5[%c2_94, %c0_95] : memref<144x144xf32, #tpu.memory_space<vmem>>, vector<142x144xf32>
    %c5_96 = arith.constant 5 : index
    %c0_97 = arith.constant 0 : index
    %c0_98 = arith.constant 0 : index
    %92 = vector.load %arg2[%c5_96, %c0_97, %c0_98] : memref<9x144x128xf32, #tpu.memory_space<vmem>>, vector<1x144x128xf32>
    %93 = vector.shape_cast %92 : vector<1x144x128xf32> to vector<144x128xf32>
    %cst_99 = arith.constant dense<0.000000e+00> : vector<142x128xf32>
    %94 = tpu.matmul %91, %93, %cst_99 {dimension_numbers = #tpu.dot_dimension_numbers<[1], [0], [0], [1], [0, 0, 1, 1], [], []>} : vector<142x144xf32>, vector<144x128xf32>, vector<142x128xf32> -> vector<142x128xf32>
    %95 = arith.addf %90, %94 : vector<142x128xf32>
    %cst_100 = arith.constant 0.000000e+00 : f32
    %96 = vector.broadcast %cst_100 : f32 to vector<142x128xf32>
    %97 = arith.cmpf oge, %95, %96 : vector<142x128xf32>
    %cst_101 = arith.constant 3.000000e-01 : f32
    %98 = vector.broadcast %cst_101 : f32 to vector<142x128xf32>
    %99 = arith.mulf %98, %95 : vector<142x128xf32>
    %100 = arith.select %97, %95, %99 : vector<142x128xi1>, vector<142x128xf32>
    %101 = vector.extract_strided_slice %100 {offsets = [0, 0], sizes = [16, 128], strides = [1, 1]} : vector<142x128xf32> to vector<16x128xf32>
    %c1_102 = arith.constant 1 : index
    %c0_103 = arith.constant 0 : index
    %102 = vector.load %arg5[%c1_102, %c0_103] : memref<144x144xf32, #tpu.memory_space<vmem>>, vector<16x128xf32>
    tpu.vector_store %arg5[%c1_102, %c0_103], %101 {strides = array<i32>} : memref<144x144xf32, #tpu.memory_space<vmem>>, vector<16x128xf32>,
    %103 = vector.extract_strided_slice %100 {offsets = [18, 0], sizes = [16, 128], strides = [1, 1]} : vector<142x128xf32> to vector<16x128xf32>
    %c19_104 = arith.constant 19 : index
    %c0_105 = arith.constant 0 : index
    %104 = vector.load %arg5[%c19_104, %c0_105] : memref<144x144xf32, #tpu.memory_space<vmem>>, vector<16x128xf32>
    tpu.vector_store %arg5[%c19_104, %c0_105], %103 {strides = array<i32>} : memref<144x144xf32, #tpu.memory_space<vmem>>, vector<16x128xf32>,
    %105 = vector.extract_strided_slice %100 {offsets = [36, 0], sizes = [16, 128], strides = [1, 1]} : vector<142x128xf32> to vector<16x128xf32>
    %c37_106 = arith.constant 37 : index
    %c0_107 = arith.constant 0 : index
    %106 = vector.load %arg5[%c37_106, %c0_107] : memref<144x144xf32, #tpu.memory_space<vmem>>, vector<16x128xf32>
    tpu.vector_store %arg5[%c37_106, %c0_107], %105 {strides = array<i32>} : memref<144x144xf32, #tpu.memory_space<vmem>>, vector<16x128xf32>,
    %107 = vector.extract_strided_slice %100 {offsets = [54, 0], sizes = [16, 128], strides = [1, 1]} : vector<142x128xf32> to vector<16x128xf32>
    %c55_108 = arith.constant 55 : index
    %c0_109 = arith.constant 0 : index
    %108 = vector.load %arg5[%c55_108, %c0_109] : memref<144x144xf32, #tpu.memory_space<vmem>>, vector<16x128xf32>
    tpu.vector_store %arg5[%c55_108, %c0_109], %107 {strides = array<i32>} : memref<144x144xf32, #tpu.memory_space<vmem>>, vector<16x128xf32>,
    %109 = vector.extract_strided_slice %100 {offsets = [72, 0], sizes = [16, 128], strides = [1, 1]} : vector<142x128xf32> to vector<16x128xf32>
    %c73_110 = arith.constant 73 : index
    %c0_111 = arith.constant 0 : index
    %110 = vector.load %arg5[%c73_110, %c0_111] : memref<144x144xf32, #tpu.memory_space<vmem>>, vector<16x128xf32>
    tpu.vector_store %arg5[%c73_110, %c0_111], %109 {strides = array<i32>} : memref<144x144xf32, #tpu.memory_space<vmem>>, vector<16x128xf32>,
    %111 = vector.extract_strided_slice %100 {offsets = [90, 0], sizes = [16, 128], strides = [1, 1]} : vector<142x128xf32> to vector<16x128xf32>
    %c91_112 = arith.constant 91 : index
    %c0_113 = arith.constant 0 : index
    %112 = vector.load %arg5[%c91_112, %c0_113] : memref<144x144xf32, #tpu.memory_space<vmem>>, vector<16x128xf32>
    tpu.vector_store %arg5[%c91_112, %c0_113], %111 {strides = array<i32>} : memref<144x144xf32, #tpu.memory_space<vmem>>, vector<16x128xf32>,
    %113 = vector.extract_strided_slice %100 {offsets = [108, 0], sizes = [16, 128], strides = [1, 1]} : vector<142x128xf32> to vector<16x128xf32>
    %c109_114 = arith.constant 109 : index
    %c0_115 = arith.constant 0 : index
    %114 = vector.load %arg5[%c109_114, %c0_115] : memref<144x144xf32, #tpu.memory_space<vmem>>, vector<16x128xf32>
    tpu.vector_store %arg5[%c109_114, %c0_115], %113 {strides = array<i32>} : memref<144x144xf32, #tpu.memory_space<vmem>>, vector<16x128xf32>,
    %115 = vector.extract_strided_slice %100 {offsets = [126, 0], sizes = [16, 128], strides = [1, 1]} : vector<142x128xf32> to vector<16x128xf32>
    %c127_116 = arith.constant 127 : index
    %c0_117 = arith.constant 0 : index
    %116 = vector.load %arg5[%c127_116, %c0_117] : memref<144x144xf32, #tpu.memory_space<vmem>>, vector<16x128xf32>
    tpu.vector_store %arg5[%c127_116, %c0_117], %115 {strides = array<i32>} : memref<144x144xf32, #tpu.memory_space<vmem>>, vector<16x128xf32>,
    %cst_118 = arith.constant 0.000000e+00 : f32
    %117 = vector.broadcast %cst_118 : f32 to vector<142x128xf32>
    %c0_119 = arith.constant 0 : index
    %c0_120 = arith.constant 0 : index
    %118 = vector.load %arg5[%c0_119, %c0_120] : memref<144x144xf32, #tpu.memory_space<vmem>>, vector<142x144xf32>
    %c6_121 = arith.constant 6 : index
    %c0_122 = arith.constant 0 : index
    %c0_123 = arith.constant 0 : index
    %119 = vector.load %arg2[%c6_121, %c0_122, %c0_123] : memref<9x144x128xf32, #tpu.memory_space<vmem>>, vector<1x144x128xf32>
    %120 = vector.shape_cast %119 : vector<1x144x128xf32> to vector<144x128xf32>
    %cst_124 = arith.constant dense<0.000000e+00> : vector<142x128xf32>
    %121 = tpu.matmul %118, %120, %cst_124 {dimension_numbers = #tpu.dot_dimension_numbers<[1], [0], [0], [1], [0, 0, 1, 1], [], []>} : vector<142x144xf32>, vector<144x128xf32>, vector<142x128xf32> -> vector<142x128xf32>
    %122 = arith.addf %117, %121 : vector<142x128xf32>
    %c1_125 = arith.constant 1 : index
    %c0_126 = arith.constant 0 : index
    %123 = vector.load %arg5[%c1_125, %c0_126] : memref<144x144xf32, #tpu.memory_space<vmem>>, vector<142x144xf32>
    %c7_127 = arith.constant 7 : index
    %c0_128 = arith.constant 0 : index
    %c0_129 = arith.constant 0 : index
    %124 = vector.load %arg2[%c7_127, %c0_128, %c0_129] : memref<9x144x128xf32, #tpu.memory_space<vmem>>, vector<1x144x128xf32>
    %125 = vector.shape_cast %124 : vector<1x144x128xf32> to vector<144x128xf32>
    %cst_130 = arith.constant dense<0.000000e+00> : vector<142x128xf32>
    %126 = tpu.matmul %123, %125, %cst_130 {dimension_numbers = #tpu.dot_dimension_numbers<[1], [0], [0], [1], [0, 0, 1, 1], [], []>} : vector<142x144xf32>, vector<144x128xf32>, vector<142x128xf32> -> vector<142x128xf32>
    %127 = arith.addf %122, %126 : vector<142x128xf32>
    %c2_131 = arith.constant 2 : index
    %c0_132 = arith.constant 0 : index
    %128 = vector.load %arg5[%c2_131, %c0_132] : memref<144x144xf32, #tpu.memory_space<vmem>>, vector<142x144xf32>
    %c8 = arith.constant 8 : index
    %c0_133 = arith.constant 0 : index
    %c0_134 = arith.constant 0 : index
    %129 = vector.load %arg2[%c8, %c0_133, %c0_134] : memref<9x144x128xf32, #tpu.memory_space<vmem>>, vector<1x144x128xf32>
    %130 = vector.shape_cast %129 : vector<1x144x128xf32> to vector<144x128xf32>
    %cst_135 = arith.constant dense<0.000000e+00> : vector<142x128xf32>
    %131 = tpu.matmul %128, %130, %cst_135 {dimension_numbers = #tpu.dot_dimension_numbers<[1], [0], [0], [1], [0, 0, 1, 1], [], []>} : vector<142x144xf32>, vector<144x128xf32>, vector<142x128xf32> -> vector<142x128xf32>
    %132 = arith.addf %127, %131 : vector<142x128xf32>
    %cst_136 = arith.constant 0.000000e+00 : f32
    %133 = vector.broadcast %cst_136 : f32 to vector<1x128xf32>
    %cst_137 = arith.constant 0.000000e+00 : f32
    %134 = vector.broadcast %cst_137 : f32 to vector<1x128xf32>
    %135 = vector.extract_strided_slice %132 {offsets = [0, 0], sizes = [16, 128], strides = [1, 1]} : vector<142x128xf32> to vector<16x128xf32>
    %c0_138 = arith.constant 0 : index
    %c0_139 = arith.constant 0 : index
    %c0_140 = arith.constant 0 : index
    %136 = vector.load %arg3[%c0_138, %c0_139, %c0_140] : memref<8x16x128xf32, #tpu.memory_space<vmem>>, vector<1x16x128xf32>
    %137 = vector.shape_cast %136 : vector<1x16x128xf32> to vector<16x128xf32>
    %138 = vector.shape_cast %135 : vector<16x128xf32> to vector<1x16x128xf32>
    tpu.vector_store %arg3[%c0_138, %c0_139, %c0_140], %138 {strides = array<i32>} : memref<8x16x128xf32, #tpu.memory_space<vmem>>, vector<1x16x128xf32>,
    %cst_141 = arith.constant dense<0.000000e+00> : vector<128xf32>
    %139 = vector.multi_reduction <add>, %135, %cst_141 [0] : vector<16x128xf32> to vector<128xf32>
    %140 = vector.shape_cast %139 : vector<128xf32> to vector<1x128xf32>
    %141 = arith.addf %133, %140 : vector<1x128xf32>
    %142 = arith.mulf %135, %135 : vector<16x128xf32>
    %cst_142 = arith.constant dense<0.000000e+00> : vector<128xf32>
    %143 = vector.multi_reduction <add>, %142, %cst_142 [0] : vector<16x128xf32> to vector<128xf32>
    %144 = vector.shape_cast %143 : vector<128xf32> to vector<1x128xf32>
    %145 = arith.addf %134, %144 : vector<1x128xf32>
    %146 = vector.extract_strided_slice %132 {offsets = [18, 0], sizes = [16, 128], strides = [1, 1]} : vector<142x128xf32> to vector<16x128xf32>
    %c1_143 = arith.constant 1 : index
    %c0_144 = arith.constant 0 : index
    %c0_145 = arith.constant 0 : index
    %147 = vector.load %arg3[%c1_143, %c0_144, %c0_145] : memref<8x16x128xf32, #tpu.memory_space<vmem>>, vector<1x16x128xf32>
    %148 = vector.shape_cast %147 : vector<1x16x128xf32> to vector<16x128xf32>
    %149 = vector.shape_cast %146 : vector<16x128xf32> to vector<1x16x128xf32>
    tpu.vector_store %arg3[%c1_143, %c0_144, %c0_145], %149 {strides = array<i32>} : memref<8x16x128xf32, #tpu.memory_space<vmem>>, vector<1x16x128xf32>,
    %cst_146 = arith.constant dense<0.000000e+00> : vector<128xf32>
    %150 = vector.multi_reduction <add>, %146, %cst_146 [0] : vector<16x128xf32> to vector<128xf32>
    %151 = vector.shape_cast %150 : vector<128xf32> to vector<1x128xf32>
    %152 = arith.addf %141, %151 : vector<1x128xf32>
    %153 = arith.mulf %146, %146 : vector<16x128xf32>
    %cst_147 = arith.constant dense<0.000000e+00> : vector<128xf32>
    %154 = vector.multi_reduction <add>, %153, %cst_147 [0] : vector<16x128xf32> to vector<128xf32>
    %155 = vector.shape_cast %154 : vector<128xf32> to vector<1x128xf32>
    %156 = arith.addf %145, %155 : vector<1x128xf32>
    %157 = vector.extract_strided_slice %132 {offsets = [36, 0], sizes = [16, 128], strides = [1, 1]} : vector<142x128xf32> to vector<16x128xf32>
    %c2_148 = arith.constant 2 : index
    %c0_149 = arith.constant 0 : index
    %c0_150 = arith.constant 0 : index
    %158 = vector.load %arg3[%c2_148, %c0_149, %c0_150] : memref<8x16x128xf32, #tpu.memory_space<vmem>>, vector<1x16x128xf32>
    %159 = vector.shape_cast %158 : vector<1x16x128xf32> to vector<16x128xf32>
    %160 = vector.shape_cast %157 : vector<16x128xf32> to vector<1x16x128xf32>
    tpu.vector_store %arg3[%c2_148, %c0_149, %c0_150], %160 {strides = array<i32>} : memref<8x16x128xf32, #tpu.memory_space<vmem>>, vector<1x16x128xf32>,
    %cst_151 = arith.constant dense<0.000000e+00> : vector<128xf32>
    %161 = vector.multi_reduction <add>, %157, %cst_151 [0] : vector<16x128xf32> to vector<128xf32>
    %162 = vector.shape_cast %161 : vector<128xf32> to vector<1x128xf32>
    %163 = arith.addf %152, %162 : vector<1x128xf32>
    %164 = arith.mulf %157, %157 : vector<16x128xf32>
    %cst_152 = arith.constant dense<0.000000e+00> : vector<128xf32>
    %165 = vector.multi_reduction <add>, %164, %cst_152 [0] : vector<16x128xf32> to vector<128xf32>
    %166 = vector.shape_cast %165 : vector<128xf32> to vector<1x128xf32>
    %167 = arith.addf %156, %166 : vector<1x128xf32>
    %168 = vector.extract_strided_slice %132 {offsets = [54, 0], sizes = [16, 128], strides = [1, 1]} : vector<142x128xf32> to vector<16x128xf32>
    %c3_153 = arith.constant 3 : index
    %c0_154 = arith.constant 0 : index
    %c0_155 = arith.constant 0 : index
    %169 = vector.load %arg3[%c3_153, %c0_154, %c0_155] : memref<8x16x128xf32, #tpu.memory_space<vmem>>, vector<1x16x128xf32>
    %170 = vector.shape_cast %169 : vector<1x16x128xf32> to vector<16x128xf32>
    %171 = vector.shape_cast %168 : vector<16x128xf32> to vector<1x16x128xf32>
    tpu.vector_store %arg3[%c3_153, %c0_154, %c0_155], %171 {strides = array<i32>} : memref<8x16x128xf32, #tpu.memory_space<vmem>>, vector<1x16x128xf32>,
    %cst_156 = arith.constant dense<0.000000e+00> : vector<128xf32>
    %172 = vector.multi_reduction <add>, %168, %cst_156 [0] : vector<16x128xf32> to vector<128xf32>
    %173 = vector.shape_cast %172 : vector<128xf32> to vector<1x128xf32>
    %174 = arith.addf %163, %173 : vector<1x128xf32>
    %175 = arith.mulf %168, %168 : vector<16x128xf32>
    %cst_157 = arith.constant dense<0.000000e+00> : vector<128xf32>
    %176 = vector.multi_reduction <add>, %175, %cst_157 [0] : vector<16x128xf32> to vector<128xf32>
    %177 = vector.shape_cast %176 : vector<128xf32> to vector<1x128xf32>
    %178 = arith.addf %167, %177 : vector<1x128xf32>
    %179 = vector.extract_strided_slice %132 {offsets = [72, 0], sizes = [16, 128], strides = [1, 1]} : vector<142x128xf32> to vector<16x128xf32>
    %c4_158 = arith.constant 4 : index
    %c0_159 = arith.constant 0 : index
    %c0_160 = arith.constant 0 : index
    %180 = vector.load %arg3[%c4_158, %c0_159, %c0_160] : memref<8x16x128xf32, #tpu.memory_space<vmem>>, vector<1x16x128xf32>
    %181 = vector.shape_cast %180 : vector<1x16x128xf32> to vector<16x128xf32>
    %182 = vector.shape_cast %179 : vector<16x128xf32> to vector<1x16x128xf32>
    tpu.vector_store %arg3[%c4_158, %c0_159, %c0_160], %182 {strides = array<i32>} : memref<8x16x128xf32, #tpu.memory_space<vmem>>, vector<1x16x128xf32>,
    %cst_161 = arith.constant dense<0.000000e+00> : vector<128xf32>
    %183 = vector.multi_reduction <add>, %179, %cst_161 [0] : vector<16x128xf32> to vector<128xf32>
    %184 = vector.shape_cast %183 : vector<128xf32> to vector<1x128xf32>
    %185 = arith.addf %174, %184 : vector<1x128xf32>
    %186 = arith.mulf %179, %179 : vector<16x128xf32>
    %cst_162 = arith.constant dense<0.000000e+00> : vector<128xf32>
    %187 = vector.multi_reduction <add>, %186, %cst_162 [0] : vector<16x128xf32> to vector<128xf32>
    %188 = vector.shape_cast %187 : vector<128xf32> to vector<1x128xf32>
    %189 = arith.addf %178, %188 : vector<1x128xf32>
    %190 = vector.extract_strided_slice %132 {offsets = [90, 0], sizes = [16, 128], strides = [1, 1]} : vector<142x128xf32> to vector<16x128xf32>
    %c5_163 = arith.constant 5 : index
    %c0_164 = arith.constant 0 : index
    %c0_165 = arith.constant 0 : index
    %191 = vector.load %arg3[%c5_163, %c0_164, %c0_165] : memref<8x16x128xf32, #tpu.memory_space<vmem>>, vector<1x16x128xf32>
    %192 = vector.shape_cast %191 : vector<1x16x128xf32> to vector<16x128xf32>
    %193 = vector.shape_cast %190 : vector<16x128xf32> to vector<1x16x128xf32>
    tpu.vector_store %arg3[%c5_163, %c0_164, %c0_165], %193 {strides = array<i32>} : memref<8x16x128xf32, #tpu.memory_space<vmem>>, vector<1x16x128xf32>,
    %cst_166 = arith.constant dense<0.000000e+00> : vector<128xf32>
    %194 = vector.multi_reduction <add>, %190, %cst_166 [0] : vector<16x128xf32> to vector<128xf32>
    %195 = vector.shape_cast %194 : vector<128xf32> to vector<1x128xf32>
    %196 = arith.addf %185, %195 : vector<1x128xf32>
    %197 = arith.mulf %190, %190 : vector<16x128xf32>
    %cst_167 = arith.constant dense<0.000000e+00> : vector<128xf32>
    %198 = vector.multi_reduction <add>, %197, %cst_167 [0] : vector<16x128xf32> to vector<128xf32>
    %199 = vector.shape_cast %198 : vector<128xf32> to vector<1x128xf32>
    %200 = arith.addf %189, %199 : vector<1x128xf32>
    %201 = vector.extract_strided_slice %132 {offsets = [108, 0], sizes = [16, 128], strides = [1, 1]} : vector<142x128xf32> to vector<16x128xf32>
    %c6_168 = arith.constant 6 : index
    %c0_169 = arith.constant 0 : index
    %c0_170 = arith.constant 0 : index
    %202 = vector.load %arg3[%c6_168, %c0_169, %c0_170] : memref<8x16x128xf32, #tpu.memory_space<vmem>>, vector<1x16x128xf32>
    %203 = vector.shape_cast %202 : vector<1x16x128xf32> to vector<16x128xf32>
    %204 = vector.shape_cast %201 : vector<16x128xf32> to vector<1x16x128xf32>
    tpu.vector_store %arg3[%c6_168, %c0_169, %c0_170], %204 {strides = array<i32>} : memref<8x16x128xf32, #tpu.memory_space<vmem>>, vector<1x16x128xf32>,
    %cst_171 = arith.constant dense<0.000000e+00> : vector<128xf32>
    %205 = vector.multi_reduction <add>, %201, %cst_171 [0] : vector<16x128xf32> to vector<128xf32>
    %206 = vector.shape_cast %205 : vector<128xf32> to vector<1x128xf32>
    %207 = arith.addf %196, %206 : vector<1x128xf32>
    %208 = arith.mulf %201, %201 : vector<16x128xf32>
    %cst_172 = arith.constant dense<0.000000e+00> : vector<128xf32>
    %209 = vector.multi_reduction <add>, %208, %cst_172 [0] : vector<16x128xf32> to vector<128xf32>
    %210 = vector.shape_cast %209 : vector<128xf32> to vector<1x128xf32>
    %211 = arith.addf %200, %210 : vector<1x128xf32>
    %212 = vector.extract_strided_slice %132 {offsets = [126, 0], sizes = [16, 128], strides = [1, 1]} : vector<142x128xf32> to vector<16x128xf32>
    %c7_173 = arith.constant 7 : index
    %c0_174 = arith.constant 0 : index
    %c0_175 = arith.constant 0 : index
    %213 = vector.load %arg3[%c7_173, %c0_174, %c0_175] : memref<8x16x128xf32, #tpu.memory_space<vmem>>, vector<1x16x128xf32>
    %214 = vector.shape_cast %213 : vector<1x16x128xf32> to vector<16x128xf32>
    %215 = vector.shape_cast %212 : vector<16x128xf32> to vector<1x16x128xf32>
    tpu.vector_store %arg3[%c7_173, %c0_174, %c0_175], %215 {strides = array<i32>} : memref<8x16x128xf32, #tpu.memory_space<vmem>>, vector<1x16x128xf32>,
    %cst_176 = arith.constant dense<0.000000e+00> : vector<128xf32>
    %216 = vector.multi_reduction <add>, %212, %cst_176 [0] : vector<16x128xf32> to vector<128xf32>
    %217 = vector.shape_cast %216 : vector<128xf32> to vector<1x128xf32>
    %218 = arith.addf %207, %217 : vector<1x128xf32>
    %219 = arith.mulf %212, %212 : vector<16x128xf32>
    %cst_177 = arith.constant dense<0.000000e+00> : vector<128xf32>
    %220 = vector.multi_reduction <add>, %219, %cst_177 [0] : vector<16x128xf32> to vector<128xf32>
    %221 = vector.shape_cast %220 : vector<128xf32> to vector<1x128xf32>
    %222 = arith.addf %211, %221 : vector<1x128xf32>
    %223 = tpu.concatenate %218, %222 in 0 : vector<1x128xf32>, vector<1x128xf32> -> vector<2x128xf32>
    %c0_178 = arith.constant 0 : index
    %c0_179 = arith.constant 0 : index
    %c0_180 = arith.constant 0 : index
    %224 = vector.load %arg4[%c0_178, %c0_179, %c0_180] : memref<1x2x128xf32, #tpu.memory_space<vmem>>, vector<1x2x128xf32>
    %225 = vector.shape_cast %224 : vector<1x2x128xf32> to vector<2x128xf32>
    %226 = vector.shape_cast %223 : vector<2x128xf32> to vector<1x2x128xf32>
    tpu.vector_store %arg4[%c0_178, %c0_179, %c0_180], %226 {strides = array<i32>} : memref<1x2x128xf32, #tpu.memory_space<vmem>>, vector<1x2x128xf32>,
    return
  }
  func.func @transform_0(%arg0: i32) -> (i32, i32, i32) {
    %c0_i32 = arith.constant 0 : i32
    %c0_i32_0 = arith.constant 0 : i32
    %c0_i32_1 = arith.constant 0 : i32
    return %arg0, %c0_i32, %c0_i32_0 : i32, i32, i32
  }
  func.func @transform_1(%arg0: i32) -> (i32, i32, i32) {
    %c0_i32 = arith.constant 0 : i32
    %c0_i32_0 = arith.constant 0 : i32
    %c0_i32_1 = arith.constant 0 : i32
    %c0_i32_2 = arith.constant 0 : i32
    return %c0_i32, %c0_i32_0, %c0_i32_1 : i32, i32, i32
  }
  func.func @transform_2(%arg0: i32) -> (i32, i32, i32) {
    %c0_i32 = arith.constant 0 : i32
    %c0_i32_0 = arith.constant 0 : i32
    %c0_i32_1 = arith.constant 0 : i32
    return %arg0, %c0_i32, %c0_i32_0 : i32, i32, i32
  }
  func.func @transform_3(%arg0: i32) -> (i32, i32, i32) {
    %c0_i32 = arith.constant 0 : i32
    %c0_i32_0 = arith.constant 0 : i32
    %c0_i32_1 = arith.constant 0 : i32
    return %arg0, %c0_i32, %c0_i32_0 : i32, i32, i32
  }
}

module attributes {stable_mosaic.version = 11 : i64} {
  func.func @bn_lrelu_upsample_kernel(%arg0: i32, %arg1: memref<8x16x128xf32, #tpu.memory_space<vmem>>, %arg2: memref<1x128xf32, #tpu.memory_space<vmem>>, %arg3: memref<1x128xf32, #tpu.memory_space<vmem>>, %arg4: memref<128x256xf32, #tpu.memory_space<vmem>>, %arg5: memref<1x256xf32, #tpu.memory_space<vmem>>, %arg6: memref<8x16x256xf32, #tpu.memory_space<vmem>>) attributes {dimension_semantics = [#tpu.dimension_semantics<parallel>], iteration_bounds = array<i64: 2>, scalar_prefetch = 0 : i64, scratch_operands = 0 : i64, tpu.core_type = #tpu.core_type<tc>, window_params = [{transform_indices = @transform_0, window_bounds = array<i64: 8, 16, 128>}, {pipeline_mode = #tpu.pipeline_mode<synchronous>, transform_indices = @transform_1, window_bounds = array<i64: 1, 128>}, {pipeline_mode = #tpu.pipeline_mode<synchronous>, transform_indices = @transform_2, window_bounds = array<i64: 1, 128>}, {pipeline_mode = #tpu.pipeline_mode<synchronous>, transform_indices = @transform_3, window_bounds = array<i64: 128, 256>}, {pipeline_mode = #tpu.pipeline_mode<synchronous>, transform_indices = @transform_4, window_bounds = array<i64: 1, 256>}, {transform_indices = @transform_5, window_bounds = array<i64: 8, 16, 256>}]} {
    %c0 = arith.constant 0 : index
    %c0_0 = arith.constant 0 : index
    %c0_1 = arith.constant 0 : index
    %0 = vector.load %arg1[%c0, %c0_0, %c0_1] : memref<8x16x128xf32, #tpu.memory_space<vmem>>, vector<8x16x128xf32>
    %1 = vector.shape_cast %0 : vector<8x16x128xf32> to vector<128x128xf32>
    %c0_2 = arith.constant 0 : index
    %c0_3 = arith.constant 0 : index
    %2 = vector.load %arg2[%c0_2, %c0_3] : memref<1x128xf32, #tpu.memory_space<vmem>>, vector<1x128xf32>
    %3 = vector.broadcast %2 : vector<1x128xf32> to vector<128x128xf32>
    %4 = arith.mulf %1, %3 : vector<128x128xf32>
    %c0_4 = arith.constant 0 : index
    %c0_5 = arith.constant 0 : index
    %5 = vector.load %arg3[%c0_4, %c0_5] : memref<1x128xf32, #tpu.memory_space<vmem>>, vector<1x128xf32>
    %6 = vector.broadcast %5 : vector<1x128xf32> to vector<128x128xf32>
    %7 = arith.addf %4, %6 : vector<128x128xf32>
    %cst = arith.constant 0.000000e+00 : f32
    %8 = vector.broadcast %cst : f32 to vector<128x128xf32>
    %9 = arith.cmpf oge, %7, %8 : vector<128x128xf32>
    %cst_6 = arith.constant 3.000000e-01 : f32
    %10 = vector.broadcast %cst_6 : f32 to vector<128x128xf32>
    %11 = arith.mulf %10, %7 : vector<128x128xf32>
    %12 = arith.select %9, %7, %11 : vector<128x128xi1>, vector<128x128xf32>
    %c0_7 = arith.constant 0 : index
    %c0_8 = arith.constant 0 : index
    %13 = vector.load %arg4[%c0_7, %c0_8] : memref<128x256xf32, #tpu.memory_space<vmem>>, vector<128x256xf32>
    %cst_9 = arith.constant dense<0.000000e+00> : vector<128x256xf32>
    %14 = tpu.matmul %12, %13, %cst_9 {dimension_numbers = #tpu.dot_dimension_numbers<[1], [0], [0], [1], [0, 0, 1, 1], [], []>} : vector<128x128xf32>, vector<128x256xf32>, vector<128x256xf32> -> vector<128x256xf32>
    %c0_10 = arith.constant 0 : index
    %c0_11 = arith.constant 0 : index
    %15 = vector.load %arg5[%c0_10, %c0_11] : memref<1x256xf32, #tpu.memory_space<vmem>>, vector<1x256xf32>
    %16 = vector.broadcast %15 : vector<1x256xf32> to vector<128x256xf32>
    %17 = arith.addf %14, %16 : vector<128x256xf32>
    %18 = vector.shape_cast %17 : vector<128x256xf32> to vector<8x16x256xf32>
    %c0_12 = arith.constant 0 : index
    %c0_13 = arith.constant 0 : index
    %c0_14 = arith.constant 0 : index
    %19 = vector.load %arg6[%c0_12, %c0_13, %c0_14] : memref<8x16x256xf32, #tpu.memory_space<vmem>>, vector<8x16x256xf32>
    tpu.vector_store %arg6[%c0_12, %c0_13, %c0_14], %18 {strides = array<i32>} : memref<8x16x256xf32, #tpu.memory_space<vmem>>, vector<8x16x256xf32>,
    return
  }
  func.func @transform_0(%arg0: i32) -> (i32, i32, i32) {
    %c0_i32 = arith.constant 0 : i32
    %c0_i32_0 = arith.constant 0 : i32
    %c0_i32_1 = arith.constant 0 : i32
    return %arg0, %c0_i32, %c0_i32_0 : i32, i32, i32
  }
  func.func @transform_1(%arg0: i32) -> (i32, i32) {
    %c0_i32 = arith.constant 0 : i32
    %c0_i32_0 = arith.constant 0 : i32
    %c0_i32_1 = arith.constant 0 : i32
    return %c0_i32, %c0_i32_0 : i32, i32
  }
  func.func @transform_2(%arg0: i32) -> (i32, i32) {
    %c0_i32 = arith.constant 0 : i32
    %c0_i32_0 = arith.constant 0 : i32
    %c0_i32_1 = arith.constant 0 : i32
    return %c0_i32, %c0_i32_0 : i32, i32
  }
  func.func @transform_3(%arg0: i32) -> (i32, i32) {
    %c0_i32 = arith.constant 0 : i32
    %c0_i32_0 = arith.constant 0 : i32
    %c0_i32_1 = arith.constant 0 : i32
    return %c0_i32, %c0_i32_0 : i32, i32
  }
  func.func @transform_4(%arg0: i32) -> (i32, i32) {
    %c0_i32 = arith.constant 0 : i32
    %c0_i32_0 = arith.constant 0 : i32
    %c0_i32_1 = arith.constant 0 : i32
    return %c0_i32, %c0_i32_0 : i32, i32
  }
  func.func @transform_5(%arg0: i32) -> (i32, i32, i32) {
    %c0_i32 = arith.constant 0 : i32
    %c0_i32_0 = arith.constant 0 : i32
    %c0_i32_1 = arith.constant 0 : i32
    return %arg0, %c0_i32, %c0_i32_0 : i32, i32, i32
  }
}

</mosaic_0001>

<llo_original>
// kernel: tile.28
$region0: #{tile.28}
  #allocation2 [shape = 's32[1]{0}', space=sflag, size = 0x4, scoped, tag = 'scoped memory for tile.28']
  %s0 = inlined_call_operand.hbm [shape: f32[4], index: 0, kind: input, shape index: {}]
  %s1 = inlined_call_operand.vmem [shape: f32[64,4], index: 1, kind: output, shape index: {}]
  $region1: #{tile.28} parent=0
    #allocation0 [shape = 'u8[512]{0}', space=vmem, size = 0x400, scoped, tag = 'operand span for operand 0']
    #allocation1 [shape = 's32[1]{0}', space=sflag, size = 0x4, scoped, tag = 'scoped memory for tile.28']
    %2 = vsyncpa [#allocation1], 0
    // Predicated region
    $region2: #{tile.28} parent=1 // pred_check
      _
    $region3: #{tile.28} parent=1 // pred_check_branch
      %4 = sbr.rel (0) target = $region5
    $region4: #{tile.28} parent=1 // pred_region
      %s6 = ssub.s32 16, 16
      %7 = vsyncadd [#allocation1], %s6
      %s9 = sshll.u32 [#allocation0], 4
      %s10 = int_to_ptr.vmem [resolvable:$true] %s9
      %12 = dma.hbm_to_vmem [thread:$0]  %s0, 16, %s10, [#allocation1]
    $region5: #{tile.28} parent=1 // pred_fallthru
      _
    // Predicated region
    $region6: #{tile.28} parent=1 // pred_check
      _
    $region7: #{tile.28} parent=1 // pred_check_branch
      %14 = sbr.rel (0) target = $region9
    $region8: #{tile.28} parent=1 // pred_region
      %15 = dma.done [#allocation1], 16
    $region9: #{tile.28} parent=1 // pred_fallthru
      _
    %v16 = vld [vmem:[#allocation0] ss:$0 sm:$0xff]
    %17 = vst [vmem:[%s1] sm:$0xff] %v16
    %s18 = scalar_lea.vmem %s1, 8
    %19 = vst [vmem:[%s18] sm:$0xff] %v16
    %s20 = scalar_lea.vmem %s1, 16
    %21 = vst [vmem:[%s20] sm:$0xff] %v16
    %s22 = scalar_lea.vmem %s1, 24
    %23 = vst [vmem:[%s22] sm:$0xff] %v16
    %s24 = scalar_lea.vmem %s1, 32
    %25 = vst [vmem:[%s24] sm:$0xff] %v16
    %s26 = scalar_lea.vmem %s1, 40
    %27 = vst [vmem:[%s26] sm:$0xff] %v16
    %s28 = scalar_lea.vmem %s1, 48
    %29 = vst [vmem:[%s28] sm:$0xff] %v16
    %s30 = scalar_lea.vmem %s1, 56
    %31 = vst [vmem:[%s30] sm:$0xff] %v16
    %32 = vsyncpa [#allocation1], 1

// kernel: tile.29
$region0: #{tile.29}
  %s0 = inlined_call_operand.vmem [shape: f32[64,4], index: 0, kind: input, shape index: {}]
  %s1 = inlined_call_operand.vmem [shape: f32[1,256], index: 1, kind: output, shape index: {}]
  $region1: #{tile.29} parent=0
    #allocation0 [shape = 'u8[8192]{0}', space=vmem, size = 0x2000, scoped, tag = 'scoped mem for output reshape']
    %v2 = vld [vmem:[%s0] sm:$0x1]
    %s3 = scalar_lea.vmem %s0, 31
    %v4 = vld [vmem:[%s3] sm:$0x2]
    %vm5 = vcmask 1041409
    %v6 = vsel %vm5, %v4, %v2
    %vm7 = vcmask 31744
    %8 = vst.msk [vmem:[#allocation0] ss:$8 sm:$0x3] %vm7, %v6
    %s9 = scalar_lea.vmem %s0, 31
    %v10 = vld [vmem:[%s9] sm:$0x1]
    %s11 = scalar_lea.vmem %s0, 62
    %v12 = vld [vmem:[%s11] sm:$0x2]
    %vm13 = vcmask 1041409
    %v14 = vsel %vm13, %v12, %v10
    %15 = vrot.lane.b32.xlu0 %v14, 124
    %v16 = vpop.permute.xlu0 %15
    %vm17 = vcmask 1048544
    %18 = vst.msk [vmem:[#allocation0] ss:$8 sm:$0x3] %vm17, %v16
    %s19 = scalar_lea.vmem %s0, 30
    %v20 = vld [vmem:[%s19] sm:$0x1]
    %s21 = scalar_lea.vmem %s0, 61
    %v22 = vld [vmem:[%s21] sm:$0x2]
    %vm23 = vcmask 1041409
    %v24 = vsel %vm23, %v22, %v20
    %25 = vrot.lane.b32.xlu0 %v24, 120
    %v26 = vpop.permute.xlu0 %25
    %vm27 = vcmask 1015744
    %28 = vst.msk [vmem:[#allocation0] ss:$8 sm:$0x3] %vm27, %v26
    %s29 = scalar_lea.vmem %s0, 29
    %v30 = vld [vmem:[%s29] sm:$0x1]
    %s31 = scalar_lea.vmem %s0, 60
    %v32 = vld [vmem:[%s31] sm:$0x2]
    %vm33 = vcmask 1041409
    %v34 = vsel %vm33, %v32, %v30
    %35 = vrot.lane.b32.xlu0 %v34, 116
    %v36 = vpop.permute.xlu0 %35
    %vm37 = vcmask 982944
    %38 = vst.msk [vmem:[#allocation0] ss:$8 sm:$0x3] %vm37, %v36
    %s39 = scalar_lea.vmem %s0, 28
    %v40 = vld [vmem:[%s39] sm:$0x1]
    %s41 = scalar_lea.vmem %s0, 59
    %v42 = vld [vmem:[%s41] sm:$0x2]
    %vm43 = vcmask 1041409
    %v44 = vsel %vm43, %v42, %v40
    %45 = vrot.lane.b32.xlu0 %v44, 112
    %v46 = vpop.permute.xlu0 %45
    %vm47 = vcmask 950144
    %48 = vst.msk [vmem:[#allocation0] ss:$8 sm:$0x3] %vm47, %v46
    %s49 = scalar_lea.vmem %s0, 27
    %v50 = vld [vmem:[%s49] sm:$0x1]
    %s51 = scalar_lea.vmem %s0, 58
    %v52 = vld [vmem:[%s51] sm:$0x2]
    %vm53 = vcmask 1041409
    %v54 = vsel %vm53, %v52, %v50
    %55 = vrot.lane.b32.xlu0 %v54, 108
    %v56 = vpop.permute.xlu0 %55
    %vm57 = vcmask 917344
    %58 = vst.msk [vmem:[#allocation0] ss:$8 sm:$0x3] %vm57, %v56
    %s59 = scalar_lea.vmem %s0, 26
    %v60 = vld [vmem:[%s59] sm:$0x1]
    %s61 = scalar_lea.vmem %s0, 57
    %v62 = vld [vmem:[%s61] sm:$0x2]
    %vm63 = vcmask 1041409
    %v64 = vsel %vm63, %v62, %v60
    %65 = vrot.lane.b32.xlu0 %v64, 104
    %v66 = vpop.permute.xlu0 %65
    %vm67 = vcmask 884544
    %68 = vst.msk [vmem:[#allocation0] ss:$8 sm:$0x3] %vm67, %v66
    %s69 = scalar_lea.vmem %s0, 25
    %v70 = vld [vmem:[%s69] sm:$0x1]
    %s71 = scalar_lea.vmem %s0, 56
    %v72 = vld [vmem:[%s71] sm:$0x2]
    %vm73 = vcmask 1041409
    %v74 = vsel %vm73, %v72, %v70
    %75 = vrot.lane.b32.xlu0 %v74, 100
    %v76 = vpop.permute.xlu0 %75
    %vm77 = vcmask 851744
    %78 = vst.msk [vmem:[#allocation0] ss:$8 sm:$0x3] %vm77, %v76
    %s79 = scalar_lea.vmem %s0, 24
    %v80 = vld [vmem:[%s79] sm:$0x1]
    %s81 = scalar_lea.vmem %s0, 55
    %v82 = vld [vmem:[%s81] sm:$0x2]
    %vm83 = vcmask 1041409
    %v84 = vsel %vm83, %v82, %v80
    %85 = vrot.lane.b32.xlu0 %v84, 96
    %v86 = vpop.permute.xlu0 %85
    %vm87 = vcmask 818944
    %88 = vst.msk [vmem:[#allocation0] ss:$8 sm:$0x3] %vm87, %v86
    %s89 = scalar_lea.vmem %s0, 23
    %v90 = vld [vmem:[%s89] sm:$0x1]
    %s91 = scalar_lea.vmem %s0, 54
    %v92 = vld [vmem:[%s91] sm:$0x2]
    %vm93 = vcmask 1041409
    %v94 = vsel %vm93, %v92, %v90
    %95 = vrot.lane.b32.xlu0 %v94, 92
    %v96 = vpop.permute.xlu0 %95
    %vm97 = vcmask 786144
    %98 = vst.msk [vmem:[#allocation0] ss:$8 sm:$0x3] %vm97, %v96
    %s99 = scalar_lea.vmem %s0, 22
    %v100 = vld [vmem:[%s99] sm:$0x1]
    %s101 = scalar_lea.vmem %s0, 53
    %v102 = vld [vmem:[%s101] sm:$0x2]
    %vm103 = vcmask 1041409
    %v104 = vsel %vm103, %v102, %v100
    %105 = vrot.lane.b32.xlu0 %v104, 88
    %v106 = vpop.permute.xlu0 %105
    %vm107 = vcmask 753344
    %108 = vst.msk [vmem:[#allocation0] ss:$8 sm:$0x3] %vm107, %v106
    %s109 = scalar_lea.vmem %s0, 21
    %v110 = vld [vmem:[%s109] sm:$0x1]
    %s111 = scalar_lea.vmem %s0, 52
    %v112 = vld [vmem:[%s111] sm:$0x2]
    %vm113 = vcmask 1041409
    %v114 = vsel %vm113, %v112, %v110
    %115 = vrot.lane.b32.xlu0 %v114, 84
    %v116 = vpop.permute.xlu0 %115
    %vm117 = vcmask 720544
    %118 = vst.msk [vmem:[#allocation0] ss:$8 sm:$0x3] %vm117, %v116
    %s119 = scalar_lea.vmem %s0, 20
    %v120 = vld [vmem:[%s119] sm:$0x1]
    %s121 = scalar_lea.vmem %s0, 51
    %v122 = vld [vmem:[%s121] sm:$0x2]
    %vm123 = vcmask 1041409
    %v124 = vsel %vm123, %v122, %v120
    %125 = vrot.lane.b32.xlu0 %v124, 80
    %v126 = vpop.permute.xlu0 %125
    %vm127 = vcmask 687744
    %128 = vst.msk [vmem:[#allocation0] ss:$8 sm:$0x3] %vm127, %v126
    %s129 = scalar_lea.vmem %s0, 19
    %v130 = vld [vmem:[%s129] sm:$0x1]
    %s131 = scalar_lea.vmem %s0, 50
    %v132 = vld [vmem:[%s131] sm:$0x2]
    %vm133 = vcmask 1041409
    %v134 = vsel %vm133, %v132, %v130
    %135 = vrot.lane.b32.xlu0 %v134, 76
    %v136 = vpop.permute.xlu0 %135
    %vm137 = vcmask 654944
    %138 = vst.msk [vmem:[#allocation0] ss:$8 sm:$0x3] %vm137, %v136
    %s139 = scalar_lea.vmem %s0, 18
    %v140 = vld [vmem:[%s139] sm:$0x1]
    %s141 = scalar_lea.vmem %s0, 49
    %v142 = vld [vmem:[%s141] sm:$0x2]
    %vm143 = vcmask 1041409
    %v144 = vsel %vm143, %v142, %v140
    %145 = vrot.lane.b32.xlu0 %v144, 72
    %v146 = vpop.permute.xlu0 %145
    %vm147 = vcmask 622144
    %148 = vst.msk [vmem:[#allocation0] ss:$8 sm:$0x3] %vm147, %v146
    %s149 = scalar_lea.vmem %s0, 17
    %v150 = vld [vmem:[%s149] sm:$0x1]
    %s151 = scalar_lea.vmem %s0, 48
    %v152 = vld [vmem:[%s151] sm:$0x2]
    %vm153 = vcmask 1041409
    %v154 = vsel %vm153, %v152, %v150
    %155 = vrot.lane.b32.xlu0 %v154, 68
    %v156 = vpop.permute.xlu0 %155
    %vm157 = vcmask 589344
    %158 = vst.msk [vmem:[#allocation0] ss:$8 sm:$0x3] %vm157, %v156
    %s159 = scalar_lea.vmem %s0, 16
    %v160 = vld [vmem:[%s159] sm:$0x1]
    %s161 = scalar_lea.vmem %s0, 47
    %v162 = vld [vmem:[%s161] sm:$0x2]
    %vm163 = vcmask 1041409
    %v164 = vsel %vm163, %v162, %v160
    %165 = vrot.lane.b32.xlu0 %v164, 64
    %v166 = vpop.permute.xlu0 %165
    %vm167 = vcmask 556544
    %168 = vst.msk [vmem:[#allocation0] ss:$8 sm:$0x3] %vm167, %v166
    %s169 = scalar_lea.vmem %s0, 15
    %v170 = vld [vmem:[%s169] sm:$0x1]
    %s171 = scalar_lea.vmem %s0, 46
    %v172 = vld [vmem:[%s171] sm:$0x2]
    %vm173 = vcmask 1041409
    %v174 = vsel %vm173, %v172, %v170
    %175 = vrot.lane.b32.xlu0 %v174, 60
    %v176 = vpop.permute.xlu0 %175
    %vm177 = vcmask 523744
    %178 = vst.msk [vmem:[#allocation0] ss:$8 sm:$0x3] %vm177, %v176
    %s179 = scalar_lea.vmem %s0, 14
    %v180 = vld [vmem:[%s179] sm:$0x1]
    %s181 = scalar_lea.vmem %s0, 45
    %v182 = vld [vmem:[%s181] sm:$0x2]
    %vm183 = vcmask 1041409
    %v184 = vsel %vm183, %v182, %v180
    %185 = vrot.lane.b32.xlu0 %v184, 56
    %v186 = vpop.permute.xlu0 %185
    %vm187 = vcmask 490944
    %188 = vst.msk [vmem:[#allocation0] ss:$8 sm:$0x3] %vm187, %v186
    %s189 = scalar_lea.vmem %s0, 13
    %v190 = vld [vmem:[%s189] sm:$0x1]
    %s191 = scalar_lea.vmem %s0, 44
    %v192 = vld [vmem:[%s191] sm:$0x2]
    %vm193 = vcmask 1041409
    %v194 = vsel %vm193, %v192, %v190
    %195 = vrot.lane.b32.xlu0 %v194, 52
    %v196 = vpop.permute.xlu0 %195
    %vm197 = vcmask 458144
    %198 = vst.msk [vmem:[#allocation0] ss:$8 sm:$0x3] %vm197, %v196
    %s199 = scalar_lea.vmem %s0, 12
    %v200 = vld [vmem:[%s199] sm:$0x1]
    %s201 = scalar_lea.vmem %s0, 43
    %v202 = vld [vmem:[%s201] sm:$0x2]
    %vm203 = vcmask 1041409
    %v204 = vsel %vm203, %v202, %v200
    %205 = vrot.lane.b32.xlu0 %v204, 48
    %v206 = vpop.permute.xlu0 %205
    %vm207 = vcmask 425344
    %208 = vst.msk [vmem:[#allocation0] ss:$8 sm:$0x3] %vm207, %v206
    %s209 = scalar_lea.vmem %s0, 11
    %v210 = vld [vmem:[%s209] sm:$0x1]
    %s211 = scalar_lea.vmem %s0, 42
    %v212 = vld [vmem:[%s211] sm:$0x2]
    %vm213 = vcmask 1041409
    %v214 = vsel %vm213, %v212, %v210
    %215 = vrot.lane.b32.xlu0 %v214, 44
    %v216 = vpop.permute.xlu0 %215
    %vm217 = vcmask 392544
    %218 = vst.msk [vmem:[#allocation0] ss:$8 sm:$0x3] %vm217, %v216
    %s219 = scalar_lea.vmem %s0, 10
    %v220 = vld [vmem:[%s219] sm:$0x1]
    %s221 = scalar_lea.vmem %s0, 41
    %v222 = vld [vmem:[%s221] sm:$0x2]
    %vm223 = vcmask 1041409
    %v224 = vsel %vm223, %v222, %v220
    %225 = vrot.lane.b32.xlu0 %v224, 40
    %v226 = vpop.permute.xlu0 %225
    %vm227 = vcmask 359744
    %228 = vst.msk [vmem:[#allocation0] ss:$8 sm:$0x3] %vm227, %v226
    %s229 = scalar_lea.vmem %s0, 9
    %v230 = vld [vmem:[%s229] sm:$0x1]
    %s231 = scalar_lea.vmem %s0, 40
    %v232 = vld [vmem:[%s231] sm:$0x2]
    %vm233 = vcmask 1041409
    %v234 = vsel %vm233, %v232, %v230
    %235 = vrot.lane.b32.xlu0 %v234, 36
    %v236 = vpop.permute.xlu0 %235
    %vm237 = vcmask 326944
    %238 = vst.msk [vmem:[#allocation0] ss:$8 sm:$0x3] %vm237, %v236
    %s239 = scalar_lea.vmem %s0, 8
    %v240 = vld [vmem:[%s239] sm:$0x1]
    %s241 = scalar_lea.vmem %s0, 39
    %v242 = vld [vmem:[%s241] sm:$0x2]
    %vm243 = vcmask 1041409
    %v244 = vsel %vm243, %v242, %v240
    %245 = vrot.lane.b32.xlu0 %v244, 32
    %v246 = vpop.permute.xlu0 %245
    %vm247 = vcmask 294144
    %248 = vst.msk [vmem:[#allocation0] ss:$8 sm:$0x3] %vm247, %v246
    %s249 = scalar_lea.vmem %s0, 7
    %v250 = vld [vmem:[%s249] sm:$0x1]
    %s251 = scalar_lea.vmem %s0, 38
    %v252 = vld [vmem:[%s251] sm:$0x2]
    %vm253 = vcmask 1041409
    %v254 = vsel %vm253, %v252, %v250
    %255 = vrot.lane.b32.xlu0 %v254, 28
    %v256 = vpop.permute.xlu0 %255
    %vm257 = vcmask 261344
    %258 = vst.msk [vmem:[#allocation0] ss:$8 sm:$0x3] %vm257, %v256
    %s259 = scalar_lea.vmem %s0, 6
    %v260 = vld [vmem:[%s259] sm:$0x1]
    %s261 = scalar_lea.vmem %s0, 37
    %v262 = vld [vmem:[%s261] sm:$0x2]
    %vm263 = vcmask 1041409
    %v264 = vsel %vm263, %v262, %v260
    %265 = vrot.lane.b32.xlu0 %v264, 24
    %v266 = vpop.permute.xlu0 %265
    %vm267 = vcmask 228544
    %268 = vst.msk [vmem:[#allocation0] ss:$8 sm:$0x3] %vm267, %v266
    %s269 = scalar_lea.vmem %s0, 5
    %v270 = vld [vmem:[%s269] sm:$0x1]
    %s271 = scalar_lea.vmem %s0, 36
    %v272 = vld [vmem:[%s271] sm:$0x2]
    %vm273 = vcmask 1041409
    %v274 = vsel %vm273, %v272, %v270
    %275 = vrot.lane.b32.xlu0 %v274, 20
    %v276 = vpop.permute.xlu0 %275
    %vm277 = vcmask 195744
    %278 = vst.msk [vmem:[#allocation0] ss:$8 sm:$0x3] %vm277, %v276
    %s279 = scalar_lea.vmem %s0, 4
    %v280 = vld [vmem:[%s279] sm:$0x1]
    %s281 = scalar_lea.vmem %s0, 35
    %v282 = vld [vmem:[%s281] sm:$0x2]
    %vm283 = vcmask 1041409
    %v284 = vsel %vm283, %v282, %v280
    %285 = vrot.lane.b32.xlu0 %v284, 16
    %v286 = vpop.permute.xlu0 %285
    %vm287 = vcmask 162944
    %288 = vst.msk [vmem:[#allocation0] ss:$8 sm:$0x3] %vm287, %v286
    %s289 = scalar_lea.vmem %s0, 3
    %v290 = vld [vmem:[%s289] sm:$0x1]
    %s291 = scalar_lea.vmem %s0, 34
    %v292 = vld [vmem:[%s291] sm:$0x2]
    %vm293 = vcmask 1041409
    %v294 = vsel %vm293, %v292, %v290
    %295 = vrot.lane.b32.xlu0 %v294, 12
    %v296 = vpop.permute.xlu0 %295
    %vm297 = vcmask 130144
    %298 = vst.msk [vmem:[#allocation0] ss:$8 sm:$0x3] %vm297, %v296
    %s299 = scalar_lea.vmem %s0, 2
    %v300 = vld [vmem:[%s299] sm:$0x1]
    %s301 = scalar_lea.vmem %s0, 33
    %v302 = vld [vmem:[%s301] sm:$0x2]
    %vm303 = vcmask 1041409
    %v304 = vsel %vm303, %v302, %v300
    %305 = vrot.lane.b32.xlu0 %v304, 8
    %v306 = vpop.permute.xlu0 %305
    %vm307 = vcmask 97344
    %308 = vst.msk [vmem:[#allocation0] ss:$8 sm:$0x3] %vm307, %v306
    %s309 = scalar_lea.vmem %s0, 1
    %v310 = vld [vmem:[%s309] sm:$0x1]
    %s311 = scalar_lea.vmem %s0, 32
    %v312 = vld [vmem:[%s311] sm:$0x2]
    %vm313 = vcmask 1041409
    %v314 = vsel %vm313, %v312, %v310
    %315 = vrot.lane.b32.xlu0 %v314, 4
    %v316 = vpop.permute.xlu0 %315
    %vm317 = vcmask 64544
    %318 = vst.msk [vmem:[#allocation0] ss:$8 sm:$0x3] %vm317, %v316
    %s320 = sshllo.u32 0, 1
    %v322 = vld [vmem:[#allocation0] sm:%s320]
    %s323 = sshllo.u32 0, 1
    %324 = vst [vmem:[%s1] sm:%s323] %v322
    %s325 = scalar_lea.vmem [#allocation0], 8
    %v326 = vld [vmem:[%s325] sm:%s320]
    %s327 = sshllo.u32 0, 1
    %s328 = scalar_lea.vmem %s1, 1
    %329 = vst [vmem:[%s328] sm:%s327] %v326

// kernel: tile.23
$region0: #{tile.23}
  #allocation0 [shape = 's32[1]{0}', space=sflag, size = 0x4, scoped, tag = 'scoped memory for tile.23']
  %s0 = inlined_call_operand.vmem [shape: f32[8], index: 0, kind: input, shape index: {}]
  %s1 = inlined_call_operand.vmem [shape: f32[16,8], index: 1, kind: output, shape index: {}]
  // Predicated region
  $region2: #{tile.23} parent=0 // pred_check
    _
  $region3: #{tile.23} parent=0 // pred_check_branch
    %3 = sbr.rel (0) target = $region5
  $region4: #{tile.23} parent=0 // pred_region
    _
  $region5: #{tile.23} parent=0 // pred_fallthru
    _
  %v4 = vld [vmem:[%s0] ss:$0 sm:$0xff]
  %5 = vst [vmem:[%s1] sm:$0xff] %v4
  %s6 = scalar_lea.vmem %s1, 8
  %7 = vst [vmem:[%s6] sm:$0xff] %v4

// kernel: tile.24
$region0: #{tile.24}
  %s0 = inlined_call_operand.vmem [shape: f32[16,8], index: 0, kind: input, shape index: {}]
  %s1 = inlined_call_operand.vmem [shape: f32[1,128], index: 1, kind: output, shape index: {}]
  $region1: #{tile.24} parent=0
    #allocation0 [shape = 'u8[4096]{0}', space=vmem, size = 0x1000, scoped, tag = 'scoped mem for output reshape']
    %v2 = vld [vmem:[%s0] sm:$0x1]
    %vm3 = vcmask 64512
    %4 = vst.msk [vmem:[#allocation0] sm:$0x1] %vm3, %v2
    %s5 = scalar_lea.vmem %s0, 15
    %v6 = vld [vmem:[%s5] sm:$0x1]
    %7 = vrot.lane.b32.xlu0 %v6, 120
    %v8 = vpop.permute.xlu0 %7
    %vm9 = vcmask 1048512
    %10 = vst.msk [vmem:[#allocation0] sm:$0x1] %vm9, %v8
    %s11 = scalar_lea.vmem %s0, 14
    %v12 = vld [vmem:[%s11] sm:$0x1]
    %13 = vrot.lane.b32.xlu0 %v12, 112
    %v14 = vpop.permute.xlu0 %13
    %vm15 = vcmask 982912
    %16 = vst.msk [vmem:[#allocation0] sm:$0x1] %vm15, %v14
    %s17 = scalar_lea.vmem %s0, 13
    %v18 = vld [vmem:[%s17] sm:$0x1]
    %19 = vrot.lane.b32.xlu0 %v18, 104
    %v20 = vpop.permute.xlu0 %19
    %vm21 = vcmask 917312
    %22 = vst.msk [vmem:[#allocation0] sm:$0x1] %vm21, %v20
    %s23 = scalar_lea.vmem %s0, 12
    %v24 = vld [vmem:[%s23] sm:$0x1]
    %25 = vrot.lane.b32.xlu0 %v24, 96
    %v26 = vpop.permute.xlu0 %25
    %vm27 = vcmask 851712
    %28 = vst.msk [vmem:[#allocation0] sm:$0x1] %vm27, %v26
    %s29 = scalar_lea.vmem %s0, 11
    %v30 = vld [vmem:[%s29] sm:$0x1]
    %31 = vrot.lane.b32.xlu0 %v30, 88
    %v32 = vpop.permute.xlu0 %31
    %vm33 = vcmask 786112
    %34 = vst.msk [vmem:[#allocation0] sm:$0x1] %vm33, %v32
    %s35 = scalar_lea.vmem %s0, 10
    %v36 = vld [vmem:[%s35] sm:$0x1]
    %37 = vrot.lane.b32.xlu0 %v36, 80
    %v38 = vpop.permute.xlu0 %37
    %vm39 = vcmask 720512
    %40 = vst.msk [vmem:[#allocation0] sm:$0x1] %vm39, %v38
    %s41 = scalar_lea.vmem %s0, 9
    %v42 = vld [vmem:[%s41] sm:$0x1]
    %43 = vrot.lane.b32.xlu0 %v42, 72
    %v44 = vpop.permute.xlu0 %43
    %vm45 = vcmask 654912
    %46 = vst.msk [vmem:[#allocation0] sm:$0x1] %vm45, %v44
    %s47 = scalar_lea.vmem %s0, 8
    %v48 = vld [vmem:[%s47] sm:$0x1]
    %49 = vrot.lane.b32.xlu0 %v48, 64
    %v50 = vpop.permute.xlu0 %49
    %vm51 = vcmask 589312
    %52 = vst.msk [vmem:[#allocation0] sm:$0x1] %vm51, %v50
    %s53 = scalar_lea.vmem %s0, 7
    %v54 = vld [vmem:[%s53] sm:$0x1]
    %55 = vrot.lane.b32.xlu0 %v54, 56
    %v56 = vpop.permute.xlu0 %55
    %vm57 = vcmask 523712
    %58 = vst.msk [vmem:[#allocation0] sm:$0x1] %vm57, %v56
    %s59 = scalar_lea.vmem %s0, 6
    %v60 = vld [vmem:[%s59] sm:$0x1]
    %61 = vrot.lane.b32.xlu0 %v60, 48
    %v62 = vpop.permute.xlu0 %61
    %vm63 = vcmask 458112
    %64 = vst.msk [vmem:[#allocation0] sm:$0x1] %vm63, %v62
    %s65 = scalar_lea.vmem %s0, 5
    %v66 = vld [vmem:[%s65] sm:$0x1]
    %67 = vrot.lane.b32.xlu0 %v66, 40
    %v68 = vpop.permute.xlu0 %67
    %vm69 = vcmask 392512
    %70 = vst.msk [vmem:[#allocation0] sm:$0x1] %vm69, %v68
    %s71 = scalar_lea.vmem %s0, 4
    %v72 = vld [vmem:[%s71] sm:$0x1]
    %73 = vrot.lane.b32.xlu0 %v72, 32
    %v74 = vpop.permute.xlu0 %73
    %vm75 = vcmask 326912
    %76 = vst.msk [vmem:[#allocation0] sm:$0x1] %vm75, %v74
    %s77 = scalar_lea.vmem %s0, 3
    %v78 = vld [vmem:[%s77] sm:$0x1]
    %79 = vrot.lane.b32.xlu0 %v78, 24
    %v80 = vpop.permute.xlu0 %79
    %vm81 = vcmask 261312
    %82 = vst.msk [vmem:[#allocation0] sm:$0x1] %vm81, %v80
    %s83 = scalar_lea.vmem %s0, 2
    %v84 = vld [vmem:[%s83] sm:$0x1]
    %85 = vrot.lane.b32.xlu0 %v84, 16
    %v86 = vpop.permute.xlu0 %85
    %vm87 = vcmask 195712
    %88 = vst.msk [vmem:[#allocation0] sm:$0x1] %vm87, %v86
    %s89 = scalar_lea.vmem %s0, 1
    %v90 = vld [vmem:[%s89] sm:$0x1]
    %91 = vrot.lane.b32.xlu0 %v90, 8
    %v92 = vpop.permute.xlu0 %91
    %vm93 = vcmask 130112
    %94 = vst.msk [vmem:[#allocation0] sm:$0x1] %vm93, %v92
    %s96 = sshllo.u32 0, 1
    %v98 = vld [vmem:[#allocation0] sm:%s96]
    %s99 = sshllo.u32 0, 1
    %100 = vst [vmem:[%s1] sm:%s99] %v98

// kernel: conv_transpose_block_forward.3
$region0: #{conv_transpose_block_forward.3}
  #allocation0 [shape = 'u32[]', space=smem, size = 0x4, offset = 0x4, fixed_abs, tag = 'smem constant byte address 0x4 - core index']
  #allocation1 [shape = 'u32[144,128]{1,0:T(1,128)}', space=vmem, size = 0x12000, scoped, tag = 'internal scratch']
  %s0 = inlined_call_operand.vmem [shape: f32[16,16,128], index: 0, kind: input, shape index: {}]
  %s1 = inlined_call_operand.vmem [shape: f32[1,128], index: 1, kind: input, shape index: {}]
  %s2 = inlined_call_operand.vmem [shape: f32[1,128], index: 2, kind: input, shape index: {}]
  %s3 = inlined_call_operand.vmem [shape: f32[128,256], index: 3, kind: input, shape index: {}]
  %s4 = inlined_call_operand.vmem [shape: f32[1,256], index: 4, kind: input, shape index: {}]
  %s5 = inlined_call_operand.vmem [shape: f32[16,16,256], index: 5, kind: output, shape index: {}]
  %s6 = sld [smem:[#allocation0]]
  $region53: #{conv_transpose_block_forward.3} parent=0
    _
  %s8 = ssub.s32 1, %s6
  %s9 = scalar_select 0, %s8, %s6
  loop: start=0, step=1, limit=4
  $region2: #{conv_transpose_block_forward.3} parent=0 // loop_pre_header
    _
  $region3: #{conv_transpose_block_forward.3} parent=0 // loop_header
    %s11 = sphi 0, %s15
    %p12 = scmp.ge.s32.totalorder %s11, 4
    %s21 = sphi 0, %s23
    %s24 = sphi 0, %s21
    %s25 = sphi 0, %s24
    %s41 = sphi 0, %s25
    %s45 = sphi 0, %s45
    %s47 = sphi 0, %s45
    %s48 = sphi 0, %s47
    %s62 = sphi 0, %s48
    %s66 = sphi 0, %s66
    %s68 = sphi 0, %s66
    %s69 = sphi 0, %s68
    %s83 = sphi 0, %s69
    %s87 = sphi 0, %s87
    %s89 = sphi 0, %s87
    %s90 = sphi 0, %s89
    %s104 = sphi 0, %s90
    %s108 = sphi 0, %s108
    %s110 = sphi 0, %s108
    %s111 = sphi 0, %s110
    %s125 = sphi 0, %s111
    %s131 = sphi 0, %s133
    %s134 = sphi 0, %s131
    %s135 = sphi 0, %s134
    %s151 = sphi 0, %s135
  $region4: #{conv_transpose_block_forward.3} parent=0 // loop_header_branch
    %14 = sbr.rel (%p12) target = $region8
  $region5: #{conv_transpose_block_forward.3} parent=0 // loop_body
    %s16 = ssub.s32 %s11, 1
    %s17 = ssub.s32 %s11, 2
    %s18 = sadd.s32 %s11, 1
    %s19 = ssub.s32 %s11, %s18
    %p20 = scmp.eq.s32.totalorder %s19, 0
    %s22 = sadd.s32 %s21, 1
    %s23 = scalar_select %p20, %s21, %s22
    %p26 = pneg %p20
    %p27 = scmp.eq.s32.totalorder %s11, 1
    %p28 = por %p26, %p27
    %p29 = scmp.ne.s32.totalorder %s21, %s24
    %p30 = scmp.eq.s32.totalorder %s11, 0
    %p31 = por %p29, %p30
    %p32 = scmp.ne.s32.totalorder %s21, %s24
    %p33 = scmp.eq.s32.totalorder %s16, 1
    %p34 = por %p32, %p33
    %p35 = scmp.ne.s32.totalorder %s24, %s25
    %p36 = scmp.eq.s32.totalorder %s16, 0
    %p37 = por %p35, %p36
    %p38 = scmp.ne.s32.totalorder %s24, %s25
    %p39 = scmp.eq.s32.totalorder %s17, 1
    %p40 = por %p38, %p39
    %p42 = scmp.ne.s32.totalorder %s25, %s41
    %p43 = scmp.eq.s32.totalorder %s17, 0
    %p44 = por %p42, %p43
    %s46 = sadd.s32 %s45, 1
    %p49 = scmp.eq.s32.totalorder %s11, 1
    %p50 = scmp.ne.s32.totalorder %s45, %s47
    %p51 = scmp.eq.s32.totalorder %s11, 0
    %p52 = por %p50, %p51
    %p53 = scmp.ne.s32.totalorder %s45, %s47
    %p54 = scmp.eq.s32.totalorder %s16, 1
    %p55 = por %p53, %p54
    %p56 = scmp.ne.s32.totalorder %s47, %s48
    %p57 = scmp.eq.s32.totalorder %s16, 0
    %p58 = por %p56, %p57
    %p59 = scmp.ne.s32.totalorder %s47, %s48
    %p60 = scmp.eq.s32.totalorder %s17, 1
    %p61 = por %p59, %p60
    %p63 = scmp.ne.s32.totalorder %s48, %s62
    %p64 = scmp.eq.s32.totalorder %s17, 0
    %p65 = por %p63, %p64
    %s67 = sadd.s32 %s66, 1
    %p70 = scmp.eq.s32.totalorder %s11, 1
    %p71 = scmp.ne.s32.totalorder %s66, %s68
    %p72 = scmp.eq.s32.totalorder %s11, 0
    %p73 = por %p71, %p72
    %p74 = scmp.ne.s32.totalorder %s66, %s68
    %p75 = scmp.eq.s32.totalorder %s16, 1
    %p76 = por %p74, %p75
    %p77 = scmp.ne.s32.totalorder %s68, %s69
    %p78 = scmp.eq.s32.totalorder %s16, 0
    %p79 = por %p77, %p78
    %p80 = scmp.ne.s32.totalorder %s68, %s69
    %p81 = scmp.eq.s32.totalorder %s17, 1
    %p82 = por %p80, %p81
    %p84 = scmp.ne.s32.totalorder %s69, %s83
    %p85 = scmp.eq.s32.totalorder %s17, 0
    %p86 = por %p84, %p85
    %s88 = sadd.s32 %s87, 1
    %p91 = scmp.eq.s32.totalorder %s11, 1
    %p92 = scmp.ne.s32.totalorder %s87, %s89
    %p93 = scmp.eq.s32.totalorder %s11, 0
    %p94 = por %p92, %p93
    %p95 = scmp.ne.s32.totalorder %s87, %s89
    %p96 = scmp.eq.s32.totalorder %s16, 1
    %p97 = por %p95, %p96
    %p98 = scmp.ne.s32.totalorder %s89, %s90
    %p99 = scmp.eq.s32.totalorder %s16, 0
    %p100 = por %p98, %p99
    %p101 = scmp.ne.s32.totalorder %s89, %s90
    %p102 = scmp.eq.s32.totalorder %s17, 1
    %p103 = por %p101, %p102
    %p105 = scmp.ne.s32.totalorder %s90, %s104
    %p106 = scmp.eq.s32.totalorder %s17, 0
    %p107 = por %p105, %p106
    %s109 = sadd.s32 %s108, 1
    %p112 = scmp.eq.s32.totalorder %s11, 1
    %p113 = scmp.ne.s32.totalorder %s108, %s110
    %p114 = scmp.eq.s32.totalorder %s11, 0
    %p115 = por %p113, %p114
    %p116 = scmp.ne.s32.totalorder %s108, %s110
    %p117 = scmp.eq.s32.totalorder %s16, 1
    %p118 = por %p116, %p117
    %p119 = scmp.ne.s32.totalorder %s110, %s111
    %p120 = scmp.eq.s32.totalorder %s16, 0
    %p121 = por %p119, %p120
    %p122 = scmp.ne.s32.totalorder %s110, %s111
    %p123 = scmp.eq.s32.totalorder %s17, 1
    %p124 = por %p122, %p123
    %p126 = scmp.ne.s32.totalorder %s111, %s125
    %p127 = scmp.eq.s32.totalorder %s17, 0
    %p128 = por %p126, %p127
    %s129 = ssub.s32 %s11, %s18
    %p130 = scmp.eq.s32.totalorder %s129, 0
    %s132 = sadd.s32 %s131, 1
    %s133 = scalar_select %p130, %s131, %s132
    %p136 = pneg %p130
    %p137 = scmp.eq.s32.totalorder %s11, 1
    %p138 = por %p136, %p137
    %p139 = scmp.ne.s32.totalorder %s131, %s134
    %p140 = scmp.eq.s32.totalorder %s11, 0
    %p141 = por %p139, %p140
    %p142 = scmp.ne.s32.totalorder %s131, %s134
    %p143 = scmp.eq.s32.totalorder %s16, 1
    %p144 = por %p142, %p143
    %p145 = scmp.ne.s32.totalorder %s134, %s135
    %p146 = scmp.eq.s32.totalorder %s16, 0
    %p147 = por %p145, %p146
    %p148 = scmp.ne.s32.totalorder %s134, %s135
    %p149 = scmp.eq.s32.totalorder %s17, 1
    %p150 = por %p148, %p149
    %p152 = scmp.ne.s32.totalorder %s135, %s151
    %p153 = scmp.eq.s32.totalorder %s17, 0
    %p154 = por %p152, %p153
    %p155 = scmp.le.s32.totalorder 1, %s11
    %p156 = scmp.lt.s32.totalorder %s11, 3
    %p157 = pnand %p155, %p156
    %p158 = pneg %p157
    // Predicated region
    $region9: #{conv_transpose_block_forward.3} parent=5 // pred_check
      _
    $region10: #{conv_transpose_block_forward.3} parent=5 // pred_check_branch
      %160 = sbr.rel (%p157) target = $region12
    $region11: #{conv_transpose_block_forward.3} parent=5 // pred_region
      %s161 = ssub.s32 %s11, 1
      // Predicated region
      $region13: #{conv_transpose_block_forward.3} parent=11 // pred_check
        %p162 = pneg %p58
      $region14: #{conv_transpose_block_forward.3} parent=11 // pred_check_branch
        %164 = sbr.rel (%p162) target = $region16
      $region15: #{conv_transpose_block_forward.3} parent=11 // pred_region
        _
      $region16: #{conv_transpose_block_forward.3} parent=11 // pred_fallthru
        _
      // Predicated region
      $region17: #{conv_transpose_block_forward.3} parent=11 // pred_check
        %p165 = pneg %p79
      $region18: #{conv_transpose_block_forward.3} parent=11 // pred_check_branch
        %167 = sbr.rel (%p165) target = $region20
      $region19: #{conv_transpose_block_forward.3} parent=11 // pred_region
        _
      $region20: #{conv_transpose_block_forward.3} parent=11 // pred_fallthru
        _
      // Predicated region
      $region21: #{conv_transpose_block_forward.3} parent=11 // pred_check
        %p168 = pneg %p100
      $region22: #{conv_transpose_block_forward.3} parent=11 // pred_check_branch
        %170 = sbr.rel (%p168) target = $region24
      $region23: #{conv_transpose_block_forward.3} parent=11 // pred_region
        _
      $region24: #{conv_transpose_block_forward.3} parent=11 // pred_fallthru
        _
      // Predicated region
      $region25: #{conv_transpose_block_forward.3} parent=11 // pred_check
        %p171 = pneg %p121
      $region26: #{conv_transpose_block_forward.3} parent=11 // pred_check_branch
        %173 = sbr.rel (%p171) target = $region28
      $region27: #{conv_transpose_block_forward.3} parent=11 // pred_region
        _
      $region28: #{conv_transpose_block_forward.3} parent=11 // pred_fallthru
        _
    $region12: #{conv_transpose_block_forward.3} parent=5 // pred_fallthru
      _
    %p174 = scmp.lt.s32.totalorder %s11, 2
    // Predicated region
    $region29: #{conv_transpose_block_forward.3} parent=5 // pred_check
      %p175 = pneg %p174
    $region30: #{conv_transpose_block_forward.3} parent=5 // pred_check_branch
      %177 = sbr.rel (%p175) target = $region32
    $region31: #{conv_transpose_block_forward.3} parent=5 // pred_region
      // Predicated region
      $region33: #{conv_transpose_block_forward.3} parent=31 // pred_check
        %p178 = pneg %p31
      $region34: #{conv_transpose_block_forward.3} parent=31 // pred_check_branch
        %180 = sbr.rel (%p178) target = $region36
      $region35: #{conv_transpose_block_forward.3} parent=31 // pred_region
        %s181 = smul.u32 8, %s11
        %p182 = scmp.lt.s32.totalorder %s181, 15
        %s183 = scalar_select %p182, %s181, 15
        %s184 = smul.addr %s183, 2
        %s185 = smul.addr %s184, 8
        %s186 = scalar_lea.vmem %s0, %s185
        %s187 = smul.u32 8, %s11
      $region36: #{conv_transpose_block_forward.3} parent=31 // pred_fallthru
        _
    $region32: #{conv_transpose_block_forward.3} parent=5 // pred_fallthru
      _
    %p188 = scmp.le.s32.totalorder 1, %s11
    %p189 = scmp.lt.s32.totalorder %s11, 3
    %p190 = pnand %p188, %p189
    %p191 = pneg %p190
    // Predicated region
    $region37: #{conv_transpose_block_forward.3} parent=5 // pred_check
      _
    $region38: #{conv_transpose_block_forward.3} parent=5 // pred_check_branch
      %193 = sbr.rel (%p190) target = $region40
    $region39: #{conv_transpose_block_forward.3} parent=5 // pred_region
      %s194 = ssub.s32 %s11, 1
      %s195 = smul.u32 8, %s16
      %p196 = scmp.lt.s32.totalorder %s195, 15
      %s197 = scalar_select %p196, %s195, 15
      %s198 = smul.addr %s197, 2
      %s199 = smul.addr %s198, 8
      %s200 = scalar_lea.vmem %s0, %s199
      %p201 = pneg %p37
      %p202 = pneg %p34
      %p203 = pneg %p58
      %p204 = pneg %p55
      %p205 = pneg %p79
      %p206 = pneg %p76
      %p207 = pneg %p100
      %p208 = pneg %p97
      %p209 = pneg %p121
      %p210 = pneg %p118
      %p211 = pneg %p147
      %p212 = pneg %p144
      %s213 = smul.u32 8, %s16
      %p214 = scmp.lt.s32.totalorder %s213, 15
      %s215 = scalar_select %p214, %s213, 15
      %s216 = smul.addr %s215, 4
      %s217 = smul.addr %s216, 8
      %s218 = scalar_lea.vmem %s5, %s217
      %s219 = smul.u32 8, %s16
      %p220 = scmp.lt.s32.totalorder %s219, 15
      %s221 = scalar_select %p220, %s219, 15
      %s222 = smul.addr %s221, 2
      %s223 = smul.addr %s222, 8
      %s224 = scalar_lea.vmem %s0, %s223
      %s225 = smul.u32 8, %s16
      %s226 = smul.u32 8, %s16
      %p227 = scmp.lt.s32.totalorder %s226, 15
      %s228 = scalar_select %p227, %s226, 15
      %s229 = smul.addr %s228, 4
      %s230 = smul.addr %s229, 8
      %s231 = scalar_lea.vmem %s5, %s230
      %s232 = smul.u32 8, %s16
      %v233 = vld [vmem:[%s224] sm:$0xff]
      %v234 = vld [vmem:[%s224 + $0x8] sm:$0xff]
      %v235 = vld [vmem:[%s224 + $0x10] sm:$0xff]
      %v236 = vld [vmem:[%s224 + $0x18] sm:$0xff]
      %v237 = vld [vmem:[%s224 + $0x20] sm:$0xff]
      %v238 = vld [vmem:[%s224 + $0x28] sm:$0xff]
      %v239 = vld [vmem:[%s224 + $0x30] sm:$0xff]
      %v240 = vld [vmem:[%s224 + $0x38] sm:$0xff]
      %v241 = vld [vmem:[%s224 + $0x40] sm:$0xff]
      %v242 = vld [vmem:[%s224 + $0x48] sm:$0xff]
      %v243 = vld [vmem:[%s224 + $0x50] sm:$0xff]
      %v244 = vld [vmem:[%s224 + $0x58] sm:$0xff]
      %v245 = vld [vmem:[%s224 + $0x60] sm:$0xff]
      %v246 = vld [vmem:[%s224 + $0x68] sm:$0xff]
      %v247 = vld [vmem:[%s224 + $0x70] sm:$0xff]
      %v248 = vld [vmem:[%s224 + $0x78] sm:$0xff]
      %v249 = vld [vmem:[%s1] sm:$0x1]
      %v251 = vlaneseq
      %v252 = vshrl.u32 %v251, 7
      %v253 = vsub.s32 0, %v252
      %v254 = vrot.slane %v249, %v253
      %v256 = vmul.f32 %v233, %v254
      %v257 = vmul.f32 %v234, %v254
      %v258 = vmul.f32 %v235, %v254
      %v259 = vmul.f32 %v236, %v254
      %v260 = vmul.f32 %v237, %v254
      %v261 = vmul.f32 %v238, %v254
      %v262 = vmul.f32 %v239, %v254
      %v263 = vmul.f32 %v240, %v254
      %v264 = vmul.f32 %v241, %v254
      %v265 = vmul.f32 %v242, %v254
      %v266 = vmul.f32 %v243, %v254
      %v267 = vmul.f32 %v244, %v254
      %v268 = vmul.f32 %v245, %v254
      %v269 = vmul.f32 %v246, %v254
      %v270 = vmul.f32 %v247, %v254
      %v271 = vmul.f32 %v248, %v254
      %v272 = vld [vmem:[%s2] sm:$0x1]
      %v274 = vlaneseq
      %v275 = vshrl.u32 %v274, 7
      %v276 = vsub.s32 0, %v275
      %v277 = vrot.slane %v272, %v276
      %v279 = vadd.f32 %v256, %v277
      %v280 = vadd.f32 %v257, %v277
      %v281 = vadd.f32 %v258, %v277
      %v282 = vadd.f32 %v259, %v277
      %v283 = vadd.f32 %v260, %v277
      %v284 = vadd.f32 %v261, %v277
      %v285 = vadd.f32 %v262, %v277
      %v286 = vadd.f32 %v263, %v277
      %v287 = vadd.f32 %v264, %v277
      %v288 = vadd.f32 %v265, %v277
      %v289 = vadd.f32 %v266, %v277
      %v290 = vadd.f32 %v267, %v277
      %v291 = vadd.f32 %v268, %v277
      %v292 = vadd.f32 %v269, %v277
      %v293 = vadd.f32 %v270, %v277
      %v294 = vadd.f32 %v271, %v277
      %vm295 = vcmp.ge.f32.partialorder %v279, 0.0
      %vm296 = vcmp.ge.f32.partialorder %v280, 0.0
      %vm297 = vcmp.ge.f32.partialorder %v281, 0.0
      %vm298 = vcmp.ge.f32.partialorder %v282, 0.0
      %vm299 = vcmp.ge.f32.partialorder %v283, 0.0
      %vm300 = vcmp.ge.f32.partialorder %v284, 0.0
      %vm301 = vcmp.ge.f32.partialorder %v285, 0.0
      %vm302 = vcmp.ge.f32.partialorder %v286, 0.0
      %vm303 = vcmp.ge.f32.partialorder %v287, 0.0
      %vm304 = vcmp.ge.f32.partialorder %v288, 0.0
      %vm305 = vcmp.ge.f32.partialorder %v289, 0.0
      %vm306 = vcmp.ge.f32.partialorder %v290, 0.0
      %vm307 = vcmp.ge.f32.partialorder %v291, 0.0
      %vm308 = vcmp.ge.f32.partialorder %v292, 0.0
      %vm309 = vcmp.ge.f32.partialorder %v293, 0.0
      %vm310 = vcmp.ge.f32.partialorder %v294, 0.0
      %v311 = vmul.f32 %v279, 0.3
      %v312 = vmul.f32 %v280, 0.3
      %v313 = vmul.f32 %v281, 0.3
      %v314 = vmul.f32 %v282, 0.3
      %v315 = vmul.f32 %v283, 0.3
      %v316 = vmul.f32 %v284, 0.3
      %v317 = vmul.f32 %v285, 0.3
      %v318 = vmul.f32 %v286, 0.3
      %v319 = vmul.f32 %v287, 0.3
      %v320 = vmul.f32 %v288, 0.3
      %v321 = vmul.f32 %v289, 0.3
      %v322 = vmul.f32 %v290, 0.3
      %v323 = vmul.f32 %v291, 0.3
      %v324 = vmul.f32 %v292, 0.3
      %v325 = vmul.f32 %v293, 0.3
      %v326 = vmul.f32 %v294, 0.3
      %v327 = vsel %vm295, %v279, %v311
      %v328 = vsel %vm296, %v280, %v312
      %v329 = vsel %vm297, %v281, %v313
      %v330 = vsel %vm298, %v282, %v314
      %v331 = vsel %vm299, %v283, %v315
      %v332 = vsel %vm300, %v284, %v316
      %v333 = vsel %vm301, %v285, %v317
      %v334 = vsel %vm302, %v286, %v318
      %v335 = vsel %vm303, %v287, %v319
      %v336 = vsel %vm304, %v288, %v320
      %v337 = vsel %vm305, %v289, %v321
      %v338 = vsel %vm306, %v290, %v322
      %v339 = vsel %vm307, %v291, %v323
      %v340 = vsel %vm308, %v292, %v324
      %v341 = vsel %vm309, %v293, %v325
      %v342 = vsel %vm310, %v294, %v326
      %v343 = vld [vmem:[%s3] sm:$0xff]
      %v344 = vld [vmem:[%s3 + $0x8] sm:$0xff]
      %v345 = vld [vmem:[%s3 + $0x10] sm:$0xff]
      %v346 = vld [vmem:[%s3 + $0x18] sm:$0xff]
      %v347 = vld [vmem:[%s3 + $0x20] sm:$0xff]
      %v348 = vld [vmem:[%s3 + $0x28] sm:$0xff]
      %v349 = vld [vmem:[%s3 + $0x30] sm:$0xff]
      %v350 = vld [vmem:[%s3 + $0x38] sm:$0xff]
      %v351 = vld [vmem:[%s3 + $0x40] sm:$0xff]
      %v352 = vld [vmem:[%s3 + $0x48] sm:$0xff]
      %v353 = vld [vmem:[%s3 + $0x50] sm:$0xff]
      %v354 = vld [vmem:[%s3 + $0x58] sm:$0xff]
      %v355 = vld [vmem:[%s3 + $0x60] sm:$0xff]
      %v356 = vld [vmem:[%s3 + $0x68] sm:$0xff]
      %v357 = vld [vmem:[%s3 + $0x70] sm:$0xff]
      %v358 = vld [vmem:[%s3 + $0x78] sm:$0xff]
      %v359 = vld [vmem:[%s3 + $0x80] sm:$0xff]
      %v360 = vld [vmem:[%s3 + $0x88] sm:$0xff]
      %v361 = vld [vmem:[%s3 + $0x90] sm:$0xff]
      %v362 = vld [vmem:[%s3 + $0x98] sm:$0xff]
      %v363 = vld [vmem:[%s3 + $0xa0] sm:$0xff]
      %v364 = vld [vmem:[%s3 + $0xa8] sm:$0xff]
      %v365 = vld [vmem:[%s3 + $0xb0] sm:$0xff]
      %v366 = vld [vmem:[%s3 + $0xb8] sm:$0xff]
      %v367 = vld [vmem:[%s3 + $0xc0] sm:$0xff]
      %v368 = vld [vmem:[%s3 + $0xc8] sm:$0xff]
      %v369 = vld [vmem:[%s3 + $0xd0] sm:$0xff]
      %v370 = vld [vmem:[%s3 + $0xd8] sm:$0xff]
      %v371 = vld [vmem:[%s3 + $0xe0] sm:$0xff]
      %v372 = vld [vmem:[%s3 + $0xe8] sm:$0xff]
      %v373 = vld [vmem:[%s3 + $0xf0] sm:$0xff]
      %v374 = vld [vmem:[%s3 + $0xf8] sm:$0xff]
      %v375 = vld [vmem:[%s4] sm:$0x3]
      %v377 = vlaneseq
      %v378 = vshrl.u32 %v377, 7
      %v379 = vsub.s32 0, %v378
      %v380 = vrot.slane %v375, %v379
      %v381 = vlaneseq
      %v382 = vshrl.u32 %v381, 7
      %v383 = vsub.s32 1, %v382
      %v384 = vrot.slane %v375, %v383
      %387 = vmatprep.subr.mxu0 %v344
      %388 = vmatpush1.msra.mxu0 %v343
      %389 = vmatprep.subr.mxu0 %v346
      %390 = vmatpush1.msra.mxu0 %v345
      %391 = vmatprep.subr.mxu0 %v348
      %392 = vmatpush1.msra.mxu0 %v347
      %393 = vmatprep.subr.mxu0 %v350
      %394 = vmatpush1.msra.mxu0 %v349
      %395 = vmatprep.subr.mxu0 %v352
      %396 = vmatpush1.msra.mxu0 %v351
      %397 = vmatprep.subr.mxu0 %v354
      %398 = vmatpush1.msra.mxu0 %v353
      %399 = vmatprep.subr.mxu0 %v356
      %400 = vmatpush1.msra.mxu0 %v355
      %401 = vmatprep.subr.mxu0 %v358
      %402 = vmatpush1.msra.mxu0 %v357
      %403 = vmatprep.subr.mxu0 %v360
      %404 = vmatpush1.msra.mxu0 %v359
      %405 = vmatprep.subr.mxu0 %v362
      %406 = vmatpush1.msra.mxu0 %v361
      %407 = vmatprep.subr.mxu0 %v364
      %408 = vmatpush1.msra.mxu0 %v363
      %409 = vmatprep.subr.mxu0 %v366
      %410 = vmatpush1.msra.mxu0 %v365
      %411 = vmatprep.subr.mxu0 %v368
      %412 = vmatpush1.msra.mxu0 %v367
      %413 = vmatprep.subr.mxu0 %v370
      %414 = vmatpush1.msra.mxu0 %v369
      %415 = vmatprep.subr.mxu0 %v372
      %416 = vmatpush1.msra.mxu0 %v371
      %417 = vmatprep.subr.mxu0 %v374
      %418 = vmatpush1.msra.mxu0 %v373
      %419 = vmatprep.subr.mxu0 0.0
      %420 = vmatpush1.msra.mxu0 0.0
      %421 = vmatprep.subr.mxu0 0.0
      %422 = vmatpush1.msra.mxu0 0.0
      %423 = vmatprep.subr.mxu0 0.0
      %424 = vmatpush1.msra.mxu0 0.0
      %425 = vmatprep.subr.mxu0 0.0
      %426 = vmatpush1.msra.mxu0 0.0
      %427 = vmatprep.subr.mxu0 0.0
      %428 = vmatpush1.msra.mxu0 0.0
      %429 = vmatprep.subr.mxu0 0.0
      %430 = vmatpush1.msra.mxu0 0.0
      %431 = vmatprep.subr.mxu0 0.0
      %432 = vmatpush1.msra.mxu0 0.0
      %433 = vmatprep.subr.mxu0 0.0
      %434 = vmatpush1.msra.mxu0 0.0
      %435 = vmatprep.subr.mxu0 0.0
      %436 = vmatpush1.msra.mxu0 0.0
      %437 = vmatprep.subr.mxu0 0.0
      %438 = vmatpush1.msra.mxu0 0.0
      %439 = vmatprep.subr.mxu0 0.0
      %440 = vmatpush1.msra.mxu0 0.0
      %441 = vmatprep.subr.mxu0 0.0
      %442 = vmatpush1.msra.mxu0 0.0
      %443 = vmatprep.subr.mxu0 0.0
      %444 = vmatpush1.msra.mxu0 0.0
      %445 = vmatprep.subr.mxu0 0.0
      %446 = vmatpush1.msra.mxu0 0.0
      %447 = vmatprep.subr.mxu0 0.0
      %448 = vmatpush1.msra.mxu0 0.0
      %449 = vmatprep.subr.mxu0 0.0
      %450 = vmatpush1.msra.mxu0 0.0
      %451 = vmatprep.mubr.f32.mxu0 0.0
      %452 = vmatmul.mubr.f32.gmra.mrb[0].mxu0 %v327
      %v453 = vpop.f32.mrb[0].mxu0
      %v454 = vadd.f32 %v380, %v453
      %v455 = vpop.f32.mrb[0].mxu0
      %v456 = vadd.f32 %v384, %v455
      %457 = vmatprep.mubr.f32.mxu0 0.0
      %458 = vmatmul.mubr.f32.gmra.mrb[0].mxu0 %v328
      %v459 = vpop.f32.mrb[0].mxu0
      %v460 = vadd.f32 %v380, %v459
      %v461 = vpop.f32.mrb[0].mxu0
      %v462 = vadd.f32 %v384, %v461
      %463 = vmatprep.mubr.f32.mxu0 0.0
      %464 = vmatmul.mubr.f32.gmra.mrb[0].mxu0 %v329
      %v465 = vpop.f32.mrb[0].mxu0
      %v466 = vadd.f32 %v380, %v465
      %v467 = vpop.f32.mrb[0].mxu0
      %v468 = vadd.f32 %v384, %v467
      %469 = vmatprep.mubr.f32.mxu0 0.0
      %470 = vmatmul.mubr.f32.gmra.mrb[0].mxu0 %v330
      %v471 = vpop.f32.mrb[0].mxu0
      %v472 = vadd.f32 %v380, %v471
      %v473 = vpop.f32.mrb[0].mxu0
      %v474 = vadd.f32 %v384, %v473
      %475 = vmatprep.mubr.f32.mxu0 0.0
      %476 = vmatmul.mubr.f32.gmra.mrb[0].mxu0 %v331
      %v477 = vpop.f32.mrb[0].mxu0
      %v478 = vadd.f32 %v380, %v477
      %v479 = vpop.f32.mrb[0].mxu0
      %v480 = vadd.f32 %v384, %v479
      %481 = vmatprep.mubr.f32.mxu0 0.0
      %482 = vmatmul.mubr.f32.gmra.mrb[0].mxu0 %v332
      %v483 = vpop.f32.mrb[0].mxu0
      %v484 = vadd.f32 %v380, %v483
      %v485 = vpop.f32.mrb[0].mxu0
      %v486 = vadd.f32 %v384, %v485
      %487 = vmatprep.mubr.f32.mxu0 0.0
      %488 = vmatmul.mubr.f32.gmra.mrb[0].mxu0 %v333
      %v489 = vpop.f32.mrb[0].mxu0
      %v490 = vadd.f32 %v380, %v489
      %v491 = vpop.f32.mrb[0].mxu0
      %v492 = vadd.f32 %v384, %v491
      %493 = vmatprep.mubr.f32.mxu0 0.0
      %494 = vmatmul.mubr.f32.gmra.mrb[0].mxu0 %v334
      %v495 = vpop.f32.mrb[0].mxu0
      %v496 = vadd.f32 %v380, %v495
      %v497 = vpop.f32.mrb[0].mxu0
      %v498 = vadd.f32 %v384, %v497
      %499 = vmatprep.mubr.f32.mxu0 0.0
      %500 = vmatmul.mubr.f32.gmra.mrb[0].mxu0 %v335
      %v501 = vpop.f32.mrb[0].mxu0
      %v502 = vadd.f32 %v380, %v501
      %v503 = vpop.f32.mrb[0].mxu0
      %v504 = vadd.f32 %v384, %v503
      %505 = vmatprep.mubr.f32.mxu0 0.0
      %506 = vmatmul.mubr.f32.gmra.mrb[0].mxu0 %v336
      %v507 = vpop.f32.mrb[0].mxu0
      %v508 = vadd.f32 %v380, %v507
      %v509 = vpop.f32.mrb[0].mxu0
      %v510 = vadd.f32 %v384, %v509
      %511 = vmatprep.mubr.f32.mxu0 0.0
      %512 = vmatmul.mubr.f32.gmra.mrb[0].mxu0 %v337
      %v513 = vpop.f32.mrb[0].mxu0
      %v514 = vadd.f32 %v380, %v513
      %v515 = vpop.f32.mrb[0].mxu0
      %v516 = vadd.f32 %v384, %v515
      %517 = vmatprep.mubr.f32.mxu0 0.0
      %518 = vmatmul.mubr.f32.gmra.mrb[0].mxu0 %v338
      %v519 = vpop.f32.mrb[0].mxu0
      %v520 = vadd.f32 %v380, %v519
      %v521 = vpop.f32.mrb[0].mxu0
      %v522 = vadd.f32 %v384, %v521
      %523 = vmatprep.mubr.f32.mxu0 0.0
      %524 = vmatmul.mubr.f32.gmra.mrb[0].mxu0 %v339
      %v525 = vpop.f32.mrb[0].mxu0
      %v526 = vadd.f32 %v380, %v525
      %v527 = vpop.f32.mrb[0].mxu0
      %v528 = vadd.f32 %v384, %v527
      %529 = vmatprep.mubr.f32.mxu0 0.0
      %530 = vmatmul.mubr.f32.gmra.mrb[0].mxu0 %v340
      %v531 = vpop.f32.mrb[0].mxu0
      %v532 = vadd.f32 %v380, %v531
      %v533 = vpop.f32.mrb[0].mxu0
      %v534 = vadd.f32 %v384, %v533
      %535 = vmatprep.mubr.f32.mxu0 0.0
      %536 = vmatmul.mubr.f32.gmra.mrb[0].mxu0 %v341
      %v537 = vpop.f32.mrb[0].mxu0
      %v538 = vadd.f32 %v380, %v537
      %v539 = vpop.f32.mrb[0].mxu0
      %v540 = vadd.f32 %v384, %v539
      %541 = vmatprep.mubr.f32.mxu0 0.0
      %542 = vmatmul.mubr.f32.gmra.mrb[0].mxu0 %v342
      %v543 = vpop.f32.mrb[0].mxu0
      %v544 = vadd.f32 %v380, %v543
      %v545 = vpop.f32.mrb[0].mxu0
      %v546 = vadd.f32 %v384, %v545
      %547 = vdwg.mxu0
      %548 = vst [vmem:[%s231] sm:$0xff] %v454
      %549 = vst [vmem:[%s231 + $0x8] sm:$0xff] %v456
      %550 = vst [vmem:[%s231 + $0x10] sm:$0xff] %v460
      %551 = vst [vmem:[%s231 + $0x18] sm:$0xff] %v462
      %552 = vst [vmem:[%s231 + $0x20] sm:$0xff] %v466
      %553 = vst [vmem:[%s231 + $0x28] sm:$0xff] %v468
      %554 = vst [vmem:[%s231 + $0x30] sm:$0xff] %v472
      %555 = vst [vmem:[%s231 + $0x38] sm:$0xff] %v474
      %556 = vst [vmem:[%s231 + $0x40] sm:$0xff] %v478
      %557 = vst [vmem:[%s231 + $0x48] sm:$0xff] %v480
      %558 = vst [vmem:[%s231 + $0x50] sm:$0xff] %v484
      %559 = vst [vmem:[%s231 + $0x58] sm:$0xff] %v486
      %560 = vst [vmem:[%s231 + $0x60] sm:$0xff] %v490
      %561 = vst [vmem:[%s231 + $0x68] sm:$0xff] %v492
      %562 = vst [vmem:[%s231 + $0x70] sm:$0xff] %v496
      %563 = vst [vmem:[%s231 + $0x78] sm:$0xff] %v498
      %564 = vst [vmem:[%s231 + $0x80] sm:$0xff] %v502
      %565 = vst [vmem:[%s231 + $0x88] sm:$0xff] %v504
      %566 = vst [vmem:[%s231 + $0x90] sm:$0xff] %v508
      %567 = vst [vmem:[%s231 + $0x98] sm:$0xff] %v510
      %568 = vst [vmem:[%s231 + $0xa0] sm:$0xff] %v514
      %569 = vst [vmem:[%s231 + $0xa8] sm:$0xff] %v516
      %570 = vst [vmem:[%s231 + $0xb0] sm:$0xff] %v520
      %571 = vst [vmem:[%s231 + $0xb8] sm:$0xff] %v522
      %572 = vst [vmem:[%s231 + $0xc0] sm:$0xff] %v526
      %573 = vst [vmem:[%s231 + $0xc8] sm:$0xff] %v528
      %574 = vst [vmem:[%s231 + $0xd0] sm:$0xff] %v532
      %575 = vst [vmem:[%s231 + $0xd8] sm:$0xff] %v534
      %576 = vst [vmem:[%s231 + $0xe0] sm:$0xff] %v538
      %577 = vst [vmem:[%s231 + $0xe8] sm:$0xff] %v540
      %578 = vst [vmem:[%s231 + $0xf0] sm:$0xff] %v544
      %579 = vst [vmem:[%s231 + $0xf8] sm:$0xff] %v546
      %s580 = smul.u32 8, %s16
      %p581 = scmp.lt.s32.totalorder %s580, 15
      %s582 = scalar_select %p581, %s580, 15
      %s583 = smul.addr %s582, 4
      %s584 = smul.addr %s583, 8
      %s585 = scalar_lea.vmem %s5, %s584
      // Predicated region
      $region41: #{conv_transpose_block_forward.3} parent=39 // pred_check
        %p586 = pneg %p144
      $region42: #{conv_transpose_block_forward.3} parent=39 // pred_check_branch
        %588 = sbr.rel (%p586) target = $region44
      $region43: #{conv_transpose_block_forward.3} parent=39 // pred_region
        %s589 = smul.u32 8, %s16
      $region44: #{conv_transpose_block_forward.3} parent=39 // pred_fallthru
        _
    $region40: #{conv_transpose_block_forward.3} parent=5 // pred_fallthru
      _
    %p590 = scmp.le.s32.totalorder 2, %s11
    // Predicated region
    $region45: #{conv_transpose_block_forward.3} parent=5 // pred_check
      %p591 = pneg %p590
    $region46: #{conv_transpose_block_forward.3} parent=5 // pred_check_branch
      %593 = sbr.rel (%p591) target = $region48
    $region47: #{conv_transpose_block_forward.3} parent=5 // pred_region
      %s594 = ssub.s32 %s11, 2
      // Predicated region
      $region49: #{conv_transpose_block_forward.3} parent=47 // pred_check
        %p595 = pneg %p150
      $region50: #{conv_transpose_block_forward.3} parent=47 // pred_check_branch
        %597 = sbr.rel (%p595) target = $region52
      $region51: #{conv_transpose_block_forward.3} parent=47 // pred_region
        %s598 = smul.u32 8, %s17
        %p599 = scmp.lt.s32.totalorder %s598, 15
        %s600 = scalar_select %p599, %s598, 15
        %s601 = smul.addr %s600, 4
        %s602 = smul.addr %s601, 8
        %s603 = scalar_lea.vmem %s5, %s602
      $region52: #{conv_transpose_block_forward.3} parent=47 // pred_fallthru
        _
    $region48: #{conv_transpose_block_forward.3} parent=5 // pred_fallthru
      _
  $region6: #{conv_transpose_block_forward.3} parent=0 // loop_footer
    %s15 = sadd.s32 1, %s11
  $region7: #{conv_transpose_block_forward.3} parent=0 // loop_footer_branch
    %10 = sbr.rel target = $region3
  $region8: #{conv_transpose_block_forward.3} parent=0 // loop_exit
    _

// kernel: conv_transpose_block_forward.2
$region0: #{conv_transpose_block_forward.2}
  #allocation0 [shape = 'u32[]', space=smem, size = 0x4, offset = 0x4, fixed_abs, tag = 'smem constant byte address 0x4 - core index']
  #allocation1 [shape = 'u32[144,128]{1,0:T(1,128)}', space=vmem, size = 0x12000, scoped, tag = 'internal scratch']
  #allocation2 [shape = 'f32[144,144]{1,0:T(8,128)}', space=vmem, size = 0x24000, scoped, tag = 'scratch operand']
  %s0 = inlined_call_operand.vmem [shape: f32[16,16,128], index: 0, kind: input, shape index: {}]
  %s1 = inlined_call_operand.vmem [shape: f32[9,144,128], index: 1, kind: input, shape index: {}]
  %s2 = inlined_call_operand.vmem [shape: f32[16,16,128], index: 2, kind: output, shape index: {0}]
  %s3 = inlined_call_operand.vmem [shape: f32[2,2,128], index: 3, kind: output, shape index: {1}]
  %4 = xla_tuple %s2, %s3
  %s5 = sld [smem:[#allocation0]]
  $region49: #{conv_transpose_block_forward.2} parent=0
    _
  %s7 = ssub.s32 1, %s5
  %s8 = scalar_select 0, %s7, %s5
  loop: start=0, step=1, limit=4
  $region2: #{conv_transpose_block_forward.2} parent=0 // loop_pre_header
    _
  $region3: #{conv_transpose_block_forward.2} parent=0 // loop_header
    %s10 = sphi 0, %s14
    %p11 = scmp.ge.s32.totalorder %s10, 4
    %s20 = sphi 0, %s22
    %s23 = sphi 0, %s20
    %s24 = sphi 0, %s23
    %s40 = sphi 0, %s24
    %s44 = sphi 0, %s44
    %s46 = sphi 0, %s44
    %s47 = sphi 0, %s46
    %s61 = sphi 0, %s47
    %s67 = sphi 0, %s69
    %s70 = sphi 0, %s67
    %s71 = sphi 0, %s70
    %s87 = sphi 0, %s71
    %s93 = sphi 0, %s95
    %s96 = sphi 0, %s93
    %s97 = sphi 0, %s96
    %s113 = sphi 0, %s97
  $region4: #{conv_transpose_block_forward.2} parent=0 // loop_header_branch
    %13 = sbr.rel (%p11) target = $region8
  $region5: #{conv_transpose_block_forward.2} parent=0 // loop_body
    %s15 = ssub.s32 %s10, 1
    %s16 = ssub.s32 %s10, 2
    %s17 = sadd.s32 %s10, 1
    %s18 = ssub.s32 %s10, %s17
    %p19 = scmp.eq.s32.totalorder %s18, 0
    %s21 = sadd.s32 %s20, 1
    %s22 = scalar_select %p19, %s20, %s21
    %p25 = pneg %p19
    %p26 = scmp.eq.s32.totalorder %s10, 1
    %p27 = por %p25, %p26
    %p28 = scmp.ne.s32.totalorder %s20, %s23
    %p29 = scmp.eq.s32.totalorder %s10, 0
    %p30 = por %p28, %p29
    %p31 = scmp.ne.s32.totalorder %s20, %s23
    %p32 = scmp.eq.s32.totalorder %s15, 1
    %p33 = por %p31, %p32
    %p34 = scmp.ne.s32.totalorder %s23, %s24
    %p35 = scmp.eq.s32.totalorder %s15, 0
    %p36 = por %p34, %p35
    %p37 = scmp.ne.s32.totalorder %s23, %s24
    %p38 = scmp.eq.s32.totalorder %s16, 1
    %p39 = por %p37, %p38
    %p41 = scmp.ne.s32.totalorder %s24, %s40
    %p42 = scmp.eq.s32.totalorder %s16, 0
    %p43 = por %p41, %p42
    %s45 = sadd.s32 %s44, 1
    %p48 = scmp.eq.s32.totalorder %s10, 1
    %p49 = scmp.ne.s32.totalorder %s44, %s46
    %p50 = scmp.eq.s32.totalorder %s10, 0
    %p51 = por %p49, %p50
    %p52 = scmp.ne.s32.totalorder %s44, %s46
    %p53 = scmp.eq.s32.totalorder %s15, 1
    %p54 = por %p52, %p53
    %p55 = scmp.ne.s32.totalorder %s46, %s47
    %p56 = scmp.eq.s32.totalorder %s15, 0
    %p57 = por %p55, %p56
    %p58 = scmp.ne.s32.totalorder %s46, %s47
    %p59 = scmp.eq.s32.totalorder %s16, 1
    %p60 = por %p58, %p59
    %p62 = scmp.ne.s32.totalorder %s47, %s61
    %p63 = scmp.eq.s32.totalorder %s16, 0
    %p64 = por %p62, %p63
    %s65 = ssub.s32 %s10, %s17
    %p66 = scmp.eq.s32.totalorder %s65, 0
    %s68 = sadd.s32 %s67, 1
    %s69 = scalar_select %p66, %s67, %s68
    %p72 = pneg %p66
    %p73 = scmp.eq.s32.totalorder %s10, 1
    %p74 = por %p72, %p73
    %p75 = scmp.ne.s32.totalorder %s67, %s70
    %p76 = scmp.eq.s32.totalorder %s10, 0
    %p77 = por %p75, %p76
    %p78 = scmp.ne.s32.totalorder %s67, %s70
    %p79 = scmp.eq.s32.totalorder %s15, 1
    %p80 = por %p78, %p79
    %p81 = scmp.ne.s32.totalorder %s70, %s71
    %p82 = scmp.eq.s32.totalorder %s15, 0
    %p83 = por %p81, %p82
    %p84 = scmp.ne.s32.totalorder %s70, %s71
    %p85 = scmp.eq.s32.totalorder %s16, 1
    %p86 = por %p84, %p85
    %p88 = scmp.ne.s32.totalorder %s71, %s87
    %p89 = scmp.eq.s32.totalorder %s16, 0
    %p90 = por %p88, %p89
    %s91 = ssub.s32 %s10, %s17
    %p92 = scmp.eq.s32.totalorder %s91, 0
    %s94 = sadd.s32 %s93, 1
    %s95 = scalar_select %p92, %s93, %s94
    %p98 = pneg %p92
    %p99 = scmp.eq.s32.totalorder %s10, 1
    %p100 = por %p98, %p99
    %p101 = scmp.ne.s32.totalorder %s93, %s96
    %p102 = scmp.eq.s32.totalorder %s10, 0
    %p103 = por %p101, %p102
    %p104 = scmp.ne.s32.totalorder %s93, %s96
    %p105 = scmp.eq.s32.totalorder %s15, 1
    %p106 = por %p104, %p105
    %p107 = scmp.ne.s32.totalorder %s96, %s97
    %p108 = scmp.eq.s32.totalorder %s15, 0
    %p109 = por %p107, %p108
    %p110 = scmp.ne.s32.totalorder %s96, %s97
    %p111 = scmp.eq.s32.totalorder %s16, 1
    %p112 = por %p110, %p111
    %p114 = scmp.ne.s32.totalorder %s97, %s113
    %p115 = scmp.eq.s32.totalorder %s16, 0
    %p116 = por %p114, %p115
    %p117 = scmp.le.s32.totalorder 1, %s10
    %p118 = scmp.lt.s32.totalorder %s10, 3
    %p119 = pnand %p117, %p118
    %p120 = pneg %p119
    // Predicated region
    $region9: #{conv_transpose_block_forward.2} parent=5 // pred_check
      _
    $region10: #{conv_transpose_block_forward.2} parent=5 // pred_check_branch
      %122 = sbr.rel (%p119) target = $region12
    $region11: #{conv_transpose_block_forward.2} parent=5 // pred_region
      %s123 = ssub.s32 %s10, 1
      // Predicated region
      $region13: #{conv_transpose_block_forward.2} parent=11 // pred_check
        %p124 = pneg %p57
      $region14: #{conv_transpose_block_forward.2} parent=11 // pred_check_branch
        %126 = sbr.rel (%p124) target = $region16
      $region15: #{conv_transpose_block_forward.2} parent=11 // pred_region
        _
      $region16: #{conv_transpose_block_forward.2} parent=11 // pred_fallthru
        _
    $region12: #{conv_transpose_block_forward.2} parent=5 // pred_fallthru
      _
    %p127 = scmp.lt.s32.totalorder %s10, 2
    // Predicated region
    $region17: #{conv_transpose_block_forward.2} parent=5 // pred_check
      %p128 = pneg %p127
    $region18: #{conv_transpose_block_forward.2} parent=5 // pred_check_branch
      %130 = sbr.rel (%p128) target = $region20
    $region19: #{conv_transpose_block_forward.2} parent=5 // pred_region
      // Predicated region
      $region21: #{conv_transpose_block_forward.2} parent=19 // pred_check
        %p131 = pneg %p30
      $region22: #{conv_transpose_block_forward.2} parent=19 // pred_check_branch
        %133 = sbr.rel (%p131) target = $region24
      $region23: #{conv_transpose_block_forward.2} parent=19 // pred_region
        %s134 = smul.u32 8, %s10
        %p135 = scmp.lt.s32.totalorder %s134, 15
        %s136 = scalar_select %p135, %s134, 15
        %s137 = smul.addr %s136, 2
        %s138 = smul.addr %s137, 8
        %s139 = scalar_lea.vmem %s0, %s138
        %s140 = smul.u32 8, %s10
      $region24: #{conv_transpose_block_forward.2} parent=19 // pred_fallthru
        _
    $region20: #{conv_transpose_block_forward.2} parent=5 // pred_fallthru
      _
    %p141 = scmp.le.s32.totalorder 1, %s10
    %p142 = scmp.lt.s32.totalorder %s10, 3
    %p143 = pnand %p141, %p142
    %p144 = pneg %p143
    // Predicated region
    $region25: #{conv_transpose_block_forward.2} parent=5 // pred_check
      _
    $region26: #{conv_transpose_block_forward.2} parent=5 // pred_check_branch
      %146 = sbr.rel (%p143) target = $region28
    $region27: #{conv_transpose_block_forward.2} parent=5 // pred_region
      %s147 = ssub.s32 %s10, 1
      %s148 = smul.u32 8, %s15
      %p149 = scmp.lt.s32.totalorder %s148, 15
      %s150 = scalar_select %p149, %s148, 15
      %s151 = smul.addr %s150, 2
      %s152 = smul.addr %s151, 8
      %s153 = scalar_lea.vmem %s0, %s152
      %p154 = pneg %p36
      %p155 = pneg %p33
      %p156 = pneg %p57
      %p157 = pneg %p54
      %p158 = pneg %p83
      %p159 = pneg %p80
      %s160 = smul.u32 8, %s15
      %p161 = scmp.lt.s32.totalorder %s160, 15
      %s162 = scalar_select %p161, %s160, 15
      %s163 = smul.addr %s162, 2
      %s164 = smul.addr %s163, 8
      %s165 = scalar_lea.vmem %s2, %s164
      %p166 = pneg %p109
      %p167 = pneg %p106
      %p168 = scmp.lt.s32.totalorder %s15, 1
      %s169 = scalar_select %p168, %s15, 1
      %s170 = smul.addr %s169, 2
      %s171 = scalar_lea.vmem %s3, %s170
      %s172 = smul.u32 8, %s15
      %p173 = scmp.lt.s32.totalorder %s172, 15
      %s174 = scalar_select %p173, %s172, 15
      %s175 = smul.addr %s174, 2
      %s176 = smul.addr %s175, 8
      %s177 = scalar_lea.vmem %s0, %s176
      %s178 = smul.u32 8, %s15
      %s179 = smul.u32 8, %s15
      %p180 = scmp.lt.s32.totalorder %s179, 15
      %s181 = scalar_select %p180, %s179, 15
      %s182 = smul.addr %s181, 2
      %s183 = smul.addr %s182, 8
      %s184 = scalar_lea.vmem %s2, %s183
      %s185 = smul.u32 8, %s15
      %p186 = scmp.lt.s32.totalorder %s15, 1
      %s187 = scalar_select %p186, %s15, 1
      %s188 = smul.addr %s187, 2
      %s189 = scalar_lea.vmem %s3, %s188
      %vm190 = vcmask 130048
      %191 = vst.msk [vmem:[#allocation2 + $0x8] sm:$0xff] %vm190, 0.0
      %192 = vst.msk [vmem:[#allocation2 + $0x18] sm:$0xff] %vm190, 0.0
      %193 = vst.msk [vmem:[#allocation2 + $0x28] sm:$0xff] %vm190, 0.0
      %194 = vst.msk [vmem:[#allocation2 + $0x38] sm:$0xff] %vm190, 0.0
      %195 = vst.msk [vmem:[#allocation2 + $0x48] sm:$0xff] %vm190, 0.0
      %196 = vst.msk [vmem:[#allocation2 + $0x58] sm:$0xff] %vm190, 0.0
      %197 = vst.msk [vmem:[#allocation2 + $0x68] sm:$0xff] %vm190, 0.0
      %198 = vst.msk [vmem:[#allocation2 + $0x78] sm:$0xff] %vm190, 0.0
      %199 = vst.msk [vmem:[#allocation2 + $0x88] sm:$0xff] %vm190, 0.0
      %200 = vst.msk [vmem:[#allocation2 + $0x98] sm:$0xff] %vm190, 0.0
      %201 = vst.msk [vmem:[#allocation2 + $0xa8] sm:$0xff] %vm190, 0.0
      %202 = vst.msk [vmem:[#allocation2 + $0xb8] sm:$0xff] %vm190, 0.0
      %203 = vst.msk [vmem:[#allocation2 + $0xc8] sm:$0xff] %vm190, 0.0
      %204 = vst.msk [vmem:[#allocation2 + $0xd8] sm:$0xff] %vm190, 0.0
      %205 = vst.msk [vmem:[#allocation2 + $0xe8] sm:$0xff] %vm190, 0.0
      %206 = vst.msk [vmem:[#allocation2 + $0xf8] sm:$0xff] %vm190, 0.0
      %207 = vst.msk [vmem:[#allocation2 + $0x108] sm:$0xff] %vm190, 0.0
      %208 = vst.msk [vmem:[#allocation2 + $0x118] sm:$0xff] %vm190, 0.0
      %209 = vst [vmem:[#allocation2] sm:$0x1] 0.0
      %210 = vst [vmem:[#allocation2 + $0x21] sm:$0x1] 0.0
      %211 = vst [vmem:[#allocation2 + $0x22] sm:$0x1] 0.0
      %212 = vst [vmem:[#allocation2 + $0x43] sm:$0x1] 0.0
      %213 = vst [vmem:[#allocation2 + $0x44] sm:$0x1] 0.0
      %214 = vst [vmem:[#allocation2 + $0x65] sm:$0x1] 0.0
      %215 = vst [vmem:[#allocation2 + $0x66] sm:$0x1] 0.0
      %216 = vst [vmem:[#allocation2 + $0x87] sm:$0x1] 0.0
      %217 = vst [vmem:[#allocation2 + $0x90] sm:$0x1] 0.0
      %218 = vst [vmem:[#allocation2 + $0xb1] sm:$0x1] 0.0
      %219 = vst [vmem:[#allocation2 + $0xb2] sm:$0x1] 0.0
      %220 = vst [vmem:[#allocation2 + $0xd3] sm:$0x1] 0.0
      %221 = vst [vmem:[#allocation2 + $0xd4] sm:$0x1] 0.0
      %222 = vst [vmem:[#allocation2 + $0xf5] sm:$0x1] 0.0
      %223 = vst [vmem:[#allocation2 + $0xf6] sm:$0x1] 0.0
      %224 = vst [vmem:[#allocation2 + $0x117] sm:$0x1] 0.0
      %v225 = vld [vmem:[%s177] sm:$0xff]
      %v226 = vld [vmem:[%s177 + $0x8] sm:$0xff]
      %vm229 = vcmask 1040384
      %v230 = vrot.slane %v225, 7
      %v231 = vrot.slane %v226, 7
      %v232 = vsel %vm229, %v230, %v231
      %236 = vst [vmem:[#allocation2] sm:$0xfe] %v230
      %237 = vst [vmem:[#allocation2 + $0x10] sm:$0xff] %v232
      %238 = vst [vmem:[#allocation2 + $0x20] sm:$0x1] %v231
      %s239 = scalar_lea.vmem %s177, 16
      %v240 = vld [vmem:[%s239] sm:$0xff]
      %v241 = vld [vmem:[%s239 + $0x8] sm:$0xff]
      %vm244 = vcmask 1042432
      %v245 = vrot.slane %v240, 5
      %v246 = vrot.slane %v241, 5
      %v247 = vsel %vm244, %v245, %v246
      %251 = vst [vmem:[#allocation2 + $0x20] sm:$0xf8] %v245
      %252 = vst [vmem:[#allocation2 + $0x30] sm:$0xff] %v247
      %253 = vst [vmem:[#allocation2 + $0x40] sm:$0x7] %v246
      %s254 = scalar_lea.vmem %s177, 32
      %v255 = vld [vmem:[%s254] sm:$0xff]
      %v256 = vld [vmem:[%s254 + $0x8] sm:$0xff]
      %vm259 = vcmask 1044480
      %v260 = vrot.slane %v255, 3
      %v261 = vrot.slane %v256, 3
      %v262 = vsel %vm259, %v260, %v261
      %266 = vst [vmem:[#allocation2 + $0x40] sm:$0xe0] %v260
      %267 = vst [vmem:[#allocation2 + $0x50] sm:$0xff] %v262
      %268 = vst [vmem:[#allocation2 + $0x60] sm:$0x1f] %v261
      %s269 = scalar_lea.vmem %s177, 48
      %v270 = vld [vmem:[%s269] sm:$0xff]
      %v271 = vld [vmem:[%s269 + $0x8] sm:$0xff]
      %vm274 = vcmask 1046528
      %v275 = vrot.slane %v270, 1
      %v276 = vrot.slane %v271, 1
      %v277 = vsel %vm274, %v275, %v276
      %281 = vst [vmem:[#allocation2 + $0x60] sm:$0x80] %v275
      %282 = vst [vmem:[#allocation2 + $0x70] sm:$0xff] %v277
      %283 = vst [vmem:[#allocation2 + $0x80] sm:$0x7f] %v276
      %s284 = scalar_lea.vmem %s177, 64
      %v285 = vld [vmem:[%s284] sm:$0xff]
      %v286 = vld [vmem:[%s284 + $0x8] sm:$0xff]
      %v289 = vrot.slane %v285, 7
      %v290 = vrot.slane %v286, 7
      %v291 = vsel %vm229, %v289, %v290
      %295 = vst [vmem:[#allocation2 + $0x90] sm:$0xfe] %v289
      %296 = vst [vmem:[#allocation2 + $0xa0] sm:$0xff] %v291
      %297 = vst [vmem:[#allocation2 + $0xb0] sm:$0x1] %v290
      %s298 = scalar_lea.vmem %s177, 80
      %v299 = vld [vmem:[%s298] sm:$0xff]
      %v300 = vld [vmem:[%s298 + $0x8] sm:$0xff]
      %v303 = vrot.slane %v299, 5
      %v304 = vrot.slane %v300, 5
      %v305 = vsel %vm244, %v303, %v304
      %309 = vst [vmem:[#allocation2 + $0xb0] sm:$0xf8] %v303
      %310 = vst [vmem:[#allocation2 + $0xc0] sm:$0xff] %v305
      %311 = vst [vmem:[#allocation2 + $0xd0] sm:$0x7] %v304
      %s312 = scalar_lea.vmem %s177, 96
      %v313 = vld [vmem:[%s312] sm:$0xff]
      %v314 = vld [vmem:[%s312 + $0x8] sm:$0xff]
      %v317 = vrot.slane %v313, 3
      %v318 = vrot.slane %v314, 3
      %v319 = vsel %vm259, %v317, %v318
      %323 = vst [vmem:[#allocation2 + $0xd0] sm:$0xe0] %v317
      %324 = vst [vmem:[#allocation2 + $0xe0] sm:$0xff] %v319
      %325 = vst [vmem:[#allocation2 + $0xf0] sm:$0x1f] %v318
      %s326 = scalar_lea.vmem %s177, 112
      %v327 = vld [vmem:[%s326] sm:$0xff]
      %v328 = vld [vmem:[%s326 + $0x8] sm:$0xff]
      %v331 = vrot.slane %v327, 1
      %v332 = vrot.slane %v328, 1
      %v333 = vsel %vm274, %v331, %v332
      %337 = vst [vmem:[#allocation2 + $0xf0] sm:$0x80] %v331
      %338 = vst [vmem:[#allocation2 + $0x100] sm:$0xff] %v333
      %339 = vst [vmem:[#allocation2 + $0x110] sm:$0x7f] %v332
      %v340 = vld [vmem:[#allocation2] sm:$0xff]
      %v341 = vld [vmem:[#allocation2 + $0x8] sm:$0xff]
      %v342 = vld [vmem:[#allocation2 + $0x10] sm:$0xff]
      %v343 = vld [vmem:[#allocation2 + $0x18] sm:$0xff]
      %v344 = vld [vmem:[#allocation2 + $0x20] sm:$0xff]
      %v345 = vld [vmem:[#allocation2 + $0x28] sm:$0xff]
      %v346 = vld [vmem:[#allocation2 + $0x30] sm:$0xff]
      %v347 = vld [vmem:[#allocation2 + $0x38] sm:$0xff]
      %v348 = vld [vmem:[#allocation2 + $0x40] sm:$0xff]
      %v349 = vld [vmem:[#allocation2 + $0x48] sm:$0xff]
      %v350 = vld [vmem:[#allocation2 + $0x50] sm:$0xff]
      %v351 = vld [vmem:[#allocation2 + $0x58] sm:$0xff]
      %v352 = vld [vmem:[#allocation2 + $0x60] sm:$0xff]
      %v353 = vld [vmem:[#allocation2 + $0x68] sm:$0xff]
      %v354 = vld [vmem:[#allocation2 + $0x70] sm:$0xff]
      %v355 = vld [vmem:[#allocation2 + $0x78] sm:$0xff]
      %v356 = vld [vmem:[#allocation2 + $0x80] sm:$0xff]
      %v357 = vld [vmem:[#allocation2 + $0x88] sm:$0xff]
      %v358 = vld [vmem:[#allocation2 + $0x90] sm:$0xff]
      %v359 = vld [vmem:[#allocation2 + $0x98] sm:$0xff]
      %v360 = vld [vmem:[#allocation2 + $0xa0] sm:$0xff]
      %v361 = vld [vmem:[#allocation2 + $0xa8] sm:$0xff]
      %v362 = vld [vmem:[#allocation2 + $0xb0] sm:$0xff]
      %v363 = vld [vmem:[#allocation2 + $0xb8] sm:$0xff]
      %v364 = vld [vmem:[#allocation2 + $0xc0] sm:$0xff]
      %v365 = vld [vmem:[#allocation2 + $0xc8] sm:$0xff]
      %v366 = vld [vmem:[#allocation2 + $0xd0] sm:$0xff]
      %v367 = vld [vmem:[#allocation2 + $0xd8] sm:$0xff]
      %v368 = vld [vmem:[#allocation2 + $0xe0] sm:$0xff]
      %v369 = vld [vmem:[#allocation2 + $0xe8] sm:$0xff]
      %v370 = vld [vmem:[#allocation2 + $0xf0] sm:$0xff]
      %v371 = vld [vmem:[#allocation2 + $0xf8] sm:$0xff]
      %v372 = vld [vmem:[#allocation2 + $0x100] sm:$0xff]
      %v373 = vld [vmem:[#allocation2 + $0x108] sm:$0xff]
      %v374 = vld [vmem:[#allocation2 + $0x110] sm:$0x3f]
      %v375 = vld [vmem:[#allocation2 + $0x118] sm:$0x3f]
      %v376 = vld [vmem:[%s1] sm:$0xff]
      %v377 = vld [vmem:[%s1 + $0x8] sm:$0xff]
      %v378 = vld [vmem:[%s1 + $0x10] sm:$0xff]
      %v379 = vld [vmem:[%s1 + $0x18] sm:$0xff]
      %v380 = vld [vmem:[%s1 + $0x20] sm:$0xff]
      %v381 = vld [vmem:[%s1 + $0x28] sm:$0xff]
      %v382 = vld [vmem:[%s1 + $0x30] sm:$0xff]
      %v383 = vld [vmem:[%s1 + $0x38] sm:$0xff]
      %v384 = vld [vmem:[%s1 + $0x40] sm:$0xff]
      %v385 = vld [vmem:[%s1 + $0x48] sm:$0xff]
      %v386 = vld [vmem:[%s1 + $0x50] sm:$0xff]
      %v387 = vld [vmem:[%s1 + $0x58] sm:$0xff]
      %v388 = vld [vmem:[%s1 + $0x60] sm:$0xff]
      %v389 = vld [vmem:[%s1 + $0x68] sm:$0xff]
      %v390 = vld [vmem:[%s1 + $0x70] sm:$0xff]
      %v391 = vld [vmem:[%s1 + $0x78] sm:$0xff]
      %v392 = vld [vmem:[%s1 + $0x80] sm:$0xff]
      %v393 = vld [vmem:[%s1 + $0x88] sm:$0xff]
      %v394 = vld [vmem:[#allocation2] sm:$0xfe]
      %v395 = vld [vmem:[#allocation2 + $0x8] sm:$0xfe]
      %v396 = vld [vmem:[#allocation2 + $0x110] sm:$0x7f]
      %v397 = vld [vmem:[#allocation2 + $0x118] sm:$0x7f]
      %s398 = scalar_lea.vmem %s1, 144
      %v399 = vld [vmem:[%s398] sm:$0xff]
      %v400 = vld [vmem:[%s398 + $0x8] sm:$0xff]
      %v401 = vld [vmem:[%s398 + $0x10] sm:$0xff]
      %v402 = vld [vmem:[%s398 + $0x18] sm:$0xff]
      %v403 = vld [vmem:[%s398 + $0x20] sm:$0xff]
      %v404 = vld [vmem:[%s398 + $0x28] sm:$0xff]
      %v405 = vld [vmem:[%s398 + $0x30] sm:$0xff]
      %v406 = vld [vmem:[%s398 + $0x38] sm:$0xff]
      %v407 = vld [vmem:[%s398 + $0x40] sm:$0xff]
      %v408 = vld [vmem:[%s398 + $0x48] sm:$0xff]
      %v409 = vld [vmem:[%s398 + $0x50] sm:$0xff]
      %v410 = vld [vmem:[%s398 + $0x58] sm:$0xff]
      %v411 = vld [vmem:[%s398 + $0x60] sm:$0xff]
      %v412 = vld [vmem:[%s398 + $0x68] sm:$0xff]
      %v413 = vld [vmem:[%s398 + $0x70] sm:$0xff]
      %v414 = vld [vmem:[%s398 + $0x78] sm:$0xff]
      %v415 = vld [vmem:[%s398 + $0x80] sm:$0xff]
      %v416 = vld [vmem:[%s398 + $0x88] sm:$0xff]
      %v453 = vrot.slane %v394, 1
      %v454 = vrot.slane %v342, 1
      %v455 = vsel %vm274, %v453, %v454
      %v456 = vrot.slane %v395, 1
      %v457 = vrot.slane %v343, 1
      %v458 = vsel %vm274, %v456, %v457
      %v459 = vrot.slane %v344, 1
      %v460 = vsel %vm274, %v454, %v459
      %v461 = vrot.slane %v345, 1
      %v462 = vsel %vm274, %v457, %v461
      %v463 = vrot.slane %v346, 1
      %v464 = vsel %vm274, %v459, %v463
      %v465 = vrot.slane %v347, 1
      %v466 = vsel %vm274, %v461, %v465
      %v467 = vrot.slane %v348, 1
      %v468 = vsel %vm274, %v463, %v467
      %v469 = vrot.slane %v349, 1
      %v470 = vsel %vm274, %v465, %v469
      %v471 = vrot.slane %v350, 1
      %v472 = vsel %vm274, %v467, %v471
      %v473 = vrot.slane %v351, 1
      %v474 = vsel %vm274, %v469, %v473
      %v475 = vrot.slane %v352, 1
      %v476 = vsel %vm274, %v471, %v475
      %v477 = vrot.slane %v353, 1
      %v478 = vsel %vm274, %v473, %v477
      %v479 = vrot.slane %v354, 1
      %v480 = vsel %vm274, %v475, %v479
      %v481 = vrot.slane %v355, 1
      %v482 = vsel %vm274, %v477, %v481
      %v483 = vrot.slane %v356, 1
      %v484 = vsel %vm274, %v479, %v483
      %v485 = vrot.slane %v357, 1
      %v486 = vsel %vm274, %v481, %v485
      %v487 = vrot.slane %v358, 1
      %v488 = vsel %vm274, %v483, %v487
      %v489 = vrot.slane %v359, 1
      %v490 = vsel %vm274, %v485, %v489
      %v491 = vrot.slane %v360, 1
      %v492 = vsel %vm274, %v487, %v491
      %v493 = vrot.slane %v361, 1
      %v494 = vsel %vm274, %v489, %v493
      %v495 = vrot.slane %v362, 1
      %v496 = vsel %vm274, %v491, %v495
      %v497 = vrot.slane %v363, 1
      %v498 = vsel %vm274, %v493, %v497
      %v499 = vrot.slane %v364, 1
      %v500 = vsel %vm274, %v495, %v499
      %v501 = vrot.slane %v365, 1
      %v502 = vsel %vm274, %v497, %v501
      %v503 = vrot.slane %v366, 1
      %v504 = vsel %vm274, %v499, %v503
      %v505 = vrot.slane %v367, 1
      %v506 = vsel %vm274, %v501, %v505
      %v507 = vrot.slane %v368, 1
      %v508 = vsel %vm274, %v503, %v507
      %v509 = vrot.slane %v369, 1
      %v510 = vsel %vm274, %v505, %v509
      %v511 = vrot.slane %v370, 1
      %v512 = vsel %vm274, %v507, %v511
      %v513 = vrot.slane %v371, 1
      %v514 = vsel %vm274, %v509, %v513
      %v515 = vrot.slane %v372, 1
      %v516 = vsel %vm274, %v511, %v515
      %v517 = vrot.slane %v373, 1
      %v518 = vsel %vm274, %v513, %v517
      %v519 = vrot.slane %v396, 1
      %v520 = vsel %vm274, %v515, %v519
      %v521 = vrot.slane %v397, 1
      %v522 = vsel %vm274, %v517, %v521
      %v541 = vsel %vm190, %v458, 0
      %v543 = vsel %vm190, %v462, 0
      %v545 = vsel %vm190, %v466, 0
      %v547 = vsel %vm190, %v470, 0
      %v549 = vsel %vm190, %v474, 0
      %v551 = vsel %vm190, %v478, 0
      %v553 = vsel %vm190, %v482, 0
      %v555 = vsel %vm190, %v486, 0
      %v557 = vsel %vm190, %v490, 0
      %v559 = vsel %vm190, %v494, 0
      %v561 = vsel %vm190, %v498, 0
      %v563 = vsel %vm190, %v502, 0
      %v565 = vsel %vm190, %v506, 0
      %v567 = vsel %vm190, %v510, 0
      %v569 = vsel %vm190, %v514, 0
      %v571 = vsel %vm190, %v518, 0
      %v573 = vsel %vm190, %v522, 0
      %v575 = vsel %vm190, %v521, 0
      %577 = vmatprep.subr.mxu0 0.0
      %578 = vmatpush1.msra.mxu0 %v399
      %579 = vmatprep.subr.mxu0 0.0
      %580 = vmatpush1.msra.mxu0 %v400
      %581 = vmatprep.subr.mxu0 0.0
      %582 = vmatpush1.msra.mxu0 %v401
      %583 = vmatprep.subr.mxu0 0.0
      %584 = vmatpush1.msra.mxu0 %v402
      %585 = vmatprep.subr.mxu0 0.0
      %586 = vmatpush1.msra.mxu0 %v403
      %587 = vmatprep.subr.mxu0 0.0
      %588 = vmatpush1.msra.mxu0 %v404
      %589 = vmatprep.subr.mxu0 0.0
      %590 = vmatpush1.msra.mxu0 %v405
      %591 = vmatprep.subr.mxu0 0.0
      %592 = vmatpush1.msra.mxu0 %v406
      %593 = vmatprep.subr.mxu0 0.0
      %594 = vmatpush1.msra.mxu0 %v407
      %595 = vmatprep.subr.mxu0 0.0
      %596 = vmatpush1.msra.mxu0 %v408
      %597 = vmatprep.subr.mxu0 0.0
      %598 = vmatpush1.msra.mxu0 %v409
      %599 = vmatprep.subr.mxu0 0.0
      %600 = vmatpush1.msra.mxu0 %v410
      %601 = vmatprep.subr.mxu0 0.0
      %602 = vmatpush1.msra.mxu0 %v411
      %603 = vmatprep.subr.mxu0 0.0
      %604 = vmatpush1.msra.mxu0 %v412
      %605 = vmatprep.subr.mxu0 0.0
      %606 = vmatpush1.msra.mxu0 %v413
      %607 = vmatprep.subr.mxu0 0.0
      %608 = vmatpush1.msra.mxu0 %v414
      %609 = vmatprep.subr.mxu0 0.0
      %610 = vmatpush1.msra.mxu0 %v415
      %611 = vmatprep.subr.mxu0 0.0
      %612 = vmatpush1.msra.mxu0 %v416
      %613 = vmatprep.subr.mxu0 0.0
      %614 = vmatpush1.msra.mxu0 0.0
      %615 = vmatprep.subr.mxu0 0.0
      %616 = vmatpush1.msra.mxu0 0.0
      %617 = vmatprep.subr.mxu0 0.0
      %618 = vmatpush1.msra.mxu0 0.0
      %619 = vmatprep.subr.mxu0 0.0
      %620 = vmatpush1.msra.mxu0 0.0
      %621 = vmatprep.subr.mxu0 0.0
      %622 = vmatpush1.msra.mxu0 0.0
      %623 = vmatprep.subr.mxu0 0.0
      %624 = vmatpush1.msra.mxu0 0.0
      %625 = vmatprep.subr.mxu0 0.0
      %626 = vmatpush1.msra.mxu0 0.0
      %627 = vmatprep.subr.mxu0 0.0
      %628 = vmatpush1.msra.mxu0 0.0
      %629 = vmatprep.subr.mxu0 0.0
      %630 = vmatpush1.msra.mxu0 0.0
      %631 = vmatprep.subr.mxu0 0.0
      %632 = vmatpush1.msra.mxu0 0.0
      %633 = vmatprep.subr.mxu0 0.0
      %634 = vmatpush1.msra.mxu0 0.0
      %635 = vmatprep.subr.mxu0 0.0
      %636 = vmatpush1.msra.mxu0 0.0
      %637 = vmatprep.subr.mxu0 0.0
      %638 = vmatpush1.msra.mxu0 0.0
      %639 = vmatprep.subr.mxu0 0.0
      %640 = vmatpush1.msra.mxu0 0.0
      %641 = vmatprep.mubr.f32.mxu0 %v541
      %642 = vmatmul.mubr.f32.gmra.mrb[0].mxu0 %v455
      %v643 = vpop.f32.mrb[0].mxu0
      %v644 = vadd.f32 0.0, %v643
      %v645 = vpop.f32.mrb[0].mxu0
      %646 = vmatprep.mubr.f32.mxu0 %v543
      %647 = vmatmul.mubr.f32.gmra.mrb[0].mxu0 %v460
      %v648 = vpop.f32.mrb[0].mxu0
      %v649 = vadd.f32 0.0, %v648
      %v650 = vpop.f32.mrb[0].mxu0
      %651 = vmatprep.mubr.f32.mxu0 %v545
      %652 = vmatmul.mubr.f32.gmra.mrb[0].mxu0 %v464
      %v653 = vpop.f32.mrb[0].mxu0
      %v654 = vadd.f32 0.0, %v653
      %v655 = vpop.f32.mrb[0].mxu0
      %656 = vmatprep.mubr.f32.mxu0 %v547
      %657 = vmatmul.mubr.f32.gmra.mrb[0].mxu0 %v468
      %v658 = vpop.f32.mrb[0].mxu0
      %v659 = vadd.f32 0.0, %v658
      %v660 = vpop.f32.mrb[0].mxu0
      %661 = vmatprep.mubr.f32.mxu0 %v549
      %662 = vmatmul.mubr.f32.gmra.mrb[0].mxu0 %v472
      %v663 = vpop.f32.mrb[0].mxu0
      %v664 = vadd.f32 0.0, %v663
      %v665 = vpop.f32.mrb[0].mxu0
      %666 = vmatprep.mubr.f32.mxu0 %v551
      %667 = vmatmul.mubr.f32.gmra.mrb[0].mxu0 %v476
      %v668 = vpop.f32.mrb[0].mxu0
      %v669 = vadd.f32 0.0, %v668
      %v670 = vpop.f32.mrb[0].mxu0
      %671 = vmatprep.mubr.f32.mxu0 %v553
      %672 = vmatmul.mubr.f32.gmra.mrb[0].mxu0 %v480
      %v673 = vpop.f32.mrb[0].mxu0
      %v674 = vadd.f32 0.0, %v673
      %v675 = vpop.f32.mrb[0].mxu0
      %676 = vmatprep.mubr.f32.mxu0 %v555
      %677 = vmatmul.mubr.f32.gmra.mrb[0].mxu0 %v484
      %v678 = vpop.f32.mrb[0].mxu0
      %v679 = vadd.f32 0.0, %v678
      %v680 = vpop.f32.mrb[0].mxu0
      %681 = vmatprep.mubr.f32.mxu0 %v557
      %682 = vmatmul.mubr.f32.gmra.mrb[0].mxu0 %v488
      %v683 = vpop.f32.mrb[0].mxu0
      %v684 = vadd.f32 0.0, %v683
      %v685 = vpop.f32.mrb[0].mxu0
      %686 = vmatprep.mubr.f32.mxu0 %v559
      %687 = vmatmul.mubr.f32.gmra.mrb[0].mxu0 %v492
      %v688 = vpop.f32.mrb[0].mxu0
      %v689 = vadd.f32 0.0, %v688
      %v690 = vpop.f32.mrb[0].mxu0
      %691 = vmatprep.mubr.f32.mxu0 %v561
      %692 = vmatmul.mubr.f32.gmra.mrb[0].mxu0 %v496
      %v693 = vpop.f32.mrb[0].mxu0
      %v694 = vadd.f32 0.0, %v693
      %v695 = vpop.f32.mrb[0].mxu0
      %696 = vmatprep.mubr.f32.mxu0 %v563
      %697 = vmatmul.mubr.f32.gmra.mrb[0].mxu0 %v500
      %v698 = vpop.f32.mrb[0].mxu0
      %v699 = vadd.f32 0.0, %v698
      %v700 = vpop.f32.mrb[0].mxu0
      %701 = vmatprep.mubr.f32.mxu0 %v565
      %702 = vmatmul.mubr.f32.gmra.mrb[0].mxu0 %v504
      %v703 = vpop.f32.mrb[0].mxu0
      %v704 = vadd.f32 0.0, %v703
      %v705 = vpop.f32.mrb[0].mxu0
      %706 = vmatprep.mubr.f32.mxu0 %v567
      %707 = vmatmul.mubr.f32.gmra.mrb[0].mxu0 %v508
      %v708 = vpop.f32.mrb[0].mxu0
      %v709 = vadd.f32 0.0, %v708
      %v710 = vpop.f32.mrb[0].mxu0
      %711 = vmatprep.mubr.f32.mxu0 %v569
      %712 = vmatmul.mubr.f32.gmra.mrb[0].mxu0 %v512
      %v713 = vpop.f32.mrb[0].mxu0
      %v714 = vadd.f32 0.0, %v713
      %v715 = vpop.f32.mrb[0].mxu0
      %716 = vmatprep.mubr.f32.mxu0 %v571
      %717 = vmatmul.mubr.f32.gmra.mrb[0].mxu0 %v516
      %v718 = vpop.f32.mrb[0].mxu0
      %v719 = vadd.f32 0.0, %v718
      %v720 = vpop.f32.mrb[0].mxu0
      %721 = vmatprep.mubr.f32.mxu0 %v573
      %722 = vmatmul.mubr.f32.gmra.mrb[0].mxu0 %v520
      %v723 = vpop.f32.mrb[0].mxu0
      %v724 = vadd.f32 0.0, %v723
      %v725 = vpop.f32.mrb[0].mxu0
      %726 = vmatprep.mubr.f32.mxu0 %v575
      %727 = vmatmul.mubr.f32.gmra.mrb[0].mxu0 %v519
      %v728 = vpop.f32.mrb[0].mxu0
      %v729 = vadd.f32 0.0, %v728
      %v730 = vpop.f32.mrb[0].mxu0
      %731 = vdwg.mxu0
      %v733 = vsel %vm190, %v341, 0
      %v735 = vsel %vm190, %v343, 0
      %v737 = vsel %vm190, %v345, 0
      %v739 = vsel %vm190, %v347, 0
      %v741 = vsel %vm190, %v349, 0
      %v743 = vsel %vm190, %v351, 0
      %v745 = vsel %vm190, %v353, 0
      %v747 = vsel %vm190, %v355, 0
      %v749 = vsel %vm190, %v357, 0
      %v751 = vsel %vm190, %v359, 0
      %v753 = vsel %vm190, %v361, 0
      %v755 = vsel %vm190, %v363, 0
      %v757 = vsel %vm190, %v365, 0
      %v759 = vsel %vm190, %v367, 0
      %v761 = vsel %vm190, %v369, 0
      %v763 = vsel %vm190, %v371, 0
      %v765 = vsel %vm190, %v373, 0
      %v768 = vsel %vm190, %v375, 0
      %770 = vmatprep.subr.mxu0 0.0
      %771 = vmatpush1.msra.mxu0 %v376
      %772 = vmatprep.subr.mxu0 0.0
      %773 = vmatpush1.msra.mxu0 %v377
      %774 = vmatprep.subr.mxu0 0.0
      %775 = vmatpush1.msra.mxu0 %v378
      %776 = vmatprep.subr.mxu0 0.0
      %777 = vmatpush1.msra.mxu0 %v379
      %778 = vmatprep.subr.mxu0 0.0
      %779 = vmatpush1.msra.mxu0 %v380
      %780 = vmatprep.subr.mxu0 0.0
      %781 = vmatpush1.msra.mxu0 %v381
      %782 = vmatprep.subr.mxu0 0.0
      %783 = vmatpush1.msra.mxu0 %v382
      %784 = vmatprep.subr.mxu0 0.0
      %785 = vmatpush1.msra.mxu0 %v383
      %786 = vmatprep.subr.mxu0 0.0
      %787 = vmatpush1.msra.mxu0 %v384
      %788 = vmatprep.subr.mxu0 0.0
      %789 = vmatpush1.msra.mxu0 %v385
      %790 = vmatprep.subr.mxu0 0.0
      %791 = vmatpush1.msra.mxu0 %v386
      %792 = vmatprep.subr.mxu0 0.0
      %793 = vmatpush1.msra.mxu0 %v387
      %794 = vmatprep.subr.mxu0 0.0
      %795 = vmatpush1.msra.mxu0 %v388
      %796 = vmatprep.subr.mxu0 0.0
      %797 = vmatpush1.msra.mxu0 %v389
      %798 = vmatprep.subr.mxu0 0.0
      %799 = vmatpush1.msra.mxu0 %v390
      %800 = vmatprep.subr.mxu0 0.0
      %801 = vmatpush1.msra.mxu0 %v391
      %802 = vmatprep.subr.mxu0 0.0
      %803 = vmatpush1.msra.mxu0 %v392
      %804 = vmatprep.subr.mxu0 0.0
      %805 = vmatpush1.msra.mxu0 %v393
      %806 = vmatprep.subr.mxu0 0.0
      %807 = vmatpush1.msra.mxu0 0.0
      %808 = vmatprep.subr.mxu0 0.0
      %809 = vmatpush1.msra.mxu0 0.0
      %810 = vmatprep.subr.mxu0 0.0
      %811 = vmatpush1.msra.mxu0 0.0
      %812 = vmatprep.subr.mxu0 0.0
      %813 = vmatpush1.msra.mxu0 0.0
      %814 = vmatprep.subr.mxu0 0.0
      %815 = vmatpush1.msra.mxu0 0.0
      %816 = vmatprep.subr.mxu0 0.0
      %817 = vmatpush1.msra.mxu0 0.0
      %818 = vmatprep.subr.mxu0 0.0
      %819 = vmatpush1.msra.mxu0 0.0
      %820 = vmatprep.subr.mxu0 0.0
      %821 = vmatpush1.msra.mxu0 0.0
      %822 = vmatprep.subr.mxu0 0.0
      %823 = vmatpush1.msra.mxu0 0.0
      %824 = vmatprep.subr.mxu0 0.0
      %825 = vmatpush1.msra.mxu0 0.0
      %826 = vmatprep.subr.mxu0 0.0
      %827 = vmatpush1.msra.mxu0 0.0
      %828 = vmatprep.subr.mxu0 0.0
      %829 = vmatpush1.msra.mxu0 0.0
      %830 = vmatprep.subr.mxu0 0.0
      %831 = vmatpush1.msra.mxu0 0.0
      %832 = vmatprep.subr.mxu0 0.0
      %833 = vmatpush1.msra.mxu0 0.0
      %834 = vmatprep.mubr.f32.mxu0 %v733
      %835 = vmatmul.mubr.f32.gmra.mrb[0].mxu0 %v340
      %v836 = vpop.f32.mrb[0].mxu0
      %v837 = vadd.f32 %v644, %v836
      %v838 = vpop.f32.mrb[0].mxu0
      %839 = vmatprep.mubr.f32.mxu0 %v735
      %840 = vmatmul.mubr.f32.gmra.mrb[0].mxu0 %v342
      %v841 = vpop.f32.mrb[0].mxu0
      %v842 = vadd.f32 %v649, %v841
      %v843 = vpop.f32.mrb[0].mxu0
      %844 = vmatprep.mubr.f32.mxu0 %v737
      %845 = vmatmul.mubr.f32.gmra.mrb[0].mxu0 %v344
      %v846 = vpop.f32.mrb[0].mxu0
      %v847 = vadd.f32 %v654, %v846
      %v848 = vpop.f32.mrb[0].mxu0
      %849 = vmatprep.mubr.f32.mxu0 %v739
      %850 = vmatmul.mubr.f32.gmra.mrb[0].mxu0 %v346
      %v851 = vpop.f32.mrb[0].mxu0
      %v852 = vadd.f32 %v659, %v851
      %v853 = vpop.f32.mrb[0].mxu0
      %854 = vmatprep.mubr.f32.mxu0 %v741
      %855 = vmatmul.mubr.f32.gmra.mrb[0].mxu0 %v348
      %v856 = vpop.f32.mrb[0].mxu0
      %v857 = vadd.f32 %v664, %v856
      %v858 = vpop.f32.mrb[0].mxu0
      %859 = vmatprep.mubr.f32.mxu0 %v743
      %860 = vmatmul.mubr.f32.gmra.mrb[0].mxu0 %v350
      %v861 = vpop.f32.mrb[0].mxu0
      %v862 = vadd.f32 %v669, %v861
      %v863 = vpop.f32.mrb[0].mxu0
      %864 = vmatprep.mubr.f32.mxu0 %v745
      %865 = vmatmul.mubr.f32.gmra.mrb[0].mxu0 %v352
      %v866 = vpop.f32.mrb[0].mxu0
      %v867 = vadd.f32 %v674, %v866
      %v868 = vpop.f32.mrb[0].mxu0
      %869 = vmatprep.mubr.f32.mxu0 %v747
      %870 = vmatmul.mubr.f32.gmra.mrb[0].mxu0 %v354
      %v871 = vpop.f32.mrb[0].mxu0
      %v872 = vadd.f32 %v679, %v871
      %v873 = vpop.f32.mrb[0].mxu0
      %874 = vmatprep.mubr.f32.mxu0 %v749
      %875 = vmatmul.mubr.f32.gmra.mrb[0].mxu0 %v356
      %v876 = vpop.f32.mrb[0].mxu0
      %v877 = vadd.f32 %v684, %v876
      %v878 = vpop.f32.mrb[0].mxu0
      %879 = vmatprep.mubr.f32.mxu0 %v751
      %880 = vmatmul.mubr.f32.gmra.mrb[0].mxu0 %v358
      %v881 = vpop.f32.mrb[0].mxu0
      %v882 = vadd.f32 %v689, %v881
      %v883 = vpop.f32.mrb[0].mxu0
      %884 = vmatprep.mubr.f32.mxu0 %v753
      %885 = vmatmul.mubr.f32.gmra.mrb[0].mxu0 %v360
      %v886 = vpop.f32.mrb[0].mxu0
      %v887 = vadd.f32 %v694, %v886
      %v888 = vpop.f32.mrb[0].mxu0
      %889 = vmatprep.mubr.f32.mxu0 %v755
      %890 = vmatmul.mubr.f32.gmra.mrb[0].mxu0 %v362
      %v891 = vpop.f32.mrb[0].mxu0
      %v892 = vadd.f32 %v699, %v891
      %v893 = vpop.f32.mrb[0].mxu0
      %894 = vmatprep.mubr.f32.mxu0 %v757
      %895 = vmatmul.mubr.f32.gmra.mrb[0].mxu0 %v364
      %v896 = vpop.f32.mrb[0].mxu0
      %v897 = vadd.f32 %v704, %v896
      %v898 = vpop.f32.mrb[0].mxu0
      %899 = vmatprep.mubr.f32.mxu0 %v759
      %900 = vmatmul.mubr.f32.gmra.mrb[0].mxu0 %v366
      %v901 = vpop.f32.mrb[0].mxu0
      %v902 = vadd.f32 %v709, %v901
      %v903 = vpop.f32.mrb[0].mxu0
      %904 = vmatprep.mubr.f32.mxu0 %v761
      %905 = vmatmul.mubr.f32.gmra.mrb[0].mxu0 %v368
      %v906 = vpop.f32.mrb[0].mxu0
      %v907 = vadd.f32 %v714, %v906
      %v908 = vpop.f32.mrb[0].mxu0
      %909 = vmatprep.mubr.f32.mxu0 %v763
      %910 = vmatmul.mubr.f32.gmra.mrb[0].mxu0 %v370
      %v911 = vpop.f32.mrb[0].mxu0
      %v912 = vadd.f32 %v719, %v911
      %v913 = vpop.f32.mrb[0].mxu0
      %914 = vmatprep.mubr.f32.mxu0 %v765
      %915 = vmatmul.mubr.f32.gmra.mrb[0].mxu0 %v372
      %v916 = vpop.f32.mrb[0].mxu0
      %v917 = vadd.f32 %v724, %v916
      %v918 = vpop.f32.mrb[0].mxu0
      %919 = vmatprep.mubr.f32.mxu0 %v768
      %920 = vmatmul.mubr.f32.gmra.mrb[0].mxu0 %v374
      %v921 = vpop.f32.mrb[0].mxu0
      %v922 = vadd.f32 %v729, %v921
      %v923 = vpop.f32.mrb[0].mxu0
      %924 = vdwg.mxu0
      %v925 = vld [vmem:[#allocation2] sm:$0xfc]
      %v926 = vld [vmem:[#allocation2 + $0x8] sm:$0xfc]
      %v927 = vld [vmem:[#allocation2 + $0x110] sm:$0xff]
      %v928 = vld [vmem:[#allocation2 + $0x118] sm:$0xff]
      %s929 = scalar_lea.vmem %s1, 288
      %v930 = vld [vmem:[%s929] sm:$0xff]
      %v931 = vld [vmem:[%s929 + $0x8] sm:$0xff]
      %v932 = vld [vmem:[%s929 + $0x10] sm:$0xff]
      %v933 = vld [vmem:[%s929 + $0x18] sm:$0xff]
      %v934 = vld [vmem:[%s929 + $0x20] sm:$0xff]
      %v935 = vld [vmem:[%s929 + $0x28] sm:$0xff]
      %v936 = vld [vmem:[%s929 + $0x30] sm:$0xff]
      %v937 = vld [vmem:[%s929 + $0x38] sm:$0xff]
      %v938 = vld [vmem:[%s929 + $0x40] sm:$0xff]
      %v939 = vld [vmem:[%s929 + $0x48] sm:$0xff]
      %v940 = vld [vmem:[%s929 + $0x50] sm:$0xff]
      %v941 = vld [vmem:[%s929 + $0x58] sm:$0xff]
      %v942 = vld [vmem:[%s929 + $0x60] sm:$0xff]
      %v943 = vld [vmem:[%s929 + $0x68] sm:$0xff]
      %v944 = vld [vmem:[%s929 + $0x70] sm:$0xff]
      %v945 = vld [vmem:[%s929 + $0x78] sm:$0xff]
      %v946 = vld [vmem:[%s929 + $0x80] sm:$0xff]
      %v947 = vld [vmem:[%s929 + $0x88] sm:$0xff]
      %vm952 = vcmask 1045504
      %v953 = vrot.slane %v925, 2
      %v954 = vrot.slane %v342, 2
      %v955 = vsel %vm952, %v953, %v954
      %v956 = vrot.slane %v926, 2
      %v957 = vrot.slane %v343, 2
      %v958 = vsel %vm952, %v956, %v957
      %v959 = vrot.slane %v344, 2
      %v960 = vsel %vm952, %v954, %v959
      %v961 = vrot.slane %v345, 2
      %v962 = vsel %vm952, %v957, %v961
      %v963 = vrot.slane %v346, 2
      %v964 = vsel %vm952, %v959, %v963
      %v965 = vrot.slane %v347, 2
      %v966 = vsel %vm952, %v961, %v965
      %v967 = vrot.slane %v348, 2
      %v968 = vsel %vm952, %v963, %v967
      %v969 = vrot.slane %v349, 2
      %v970 = vsel %vm952, %v965, %v969
      %v971 = vrot.slane %v350, 2
      %v972 = vsel %vm952, %v967, %v971
      %v973 = vrot.slane %v351, 2
      %v974 = vsel %vm952, %v969, %v973
      %v975 = vrot.slane %v352, 2
      %v976 = vsel %vm952, %v971, %v975
      %v977 = vrot.slane %v353, 2
      %v978 = vsel %vm952, %v973, %v977
      %v979 = vrot.slane %v354, 2
      %v980 = vsel %vm952, %v975, %v979
      %v981 = vrot.slane %v355, 2
      %v982 = vsel %vm952, %v977, %v981
      %v983 = vrot.slane %v356, 2
      %v984 = vsel %vm952, %v979, %v983
      %v985 = vrot.slane %v357, 2
      %v986 = vsel %vm952, %v981, %v985
      %v987 = vrot.slane %v358, 2
      %v988 = vsel %vm952, %v983, %v987
      %v989 = vrot.slane %v359, 2
      %v990 = vsel %vm952, %v985, %v989
      %v991 = vrot.slane %v360, 2
      %v992 = vsel %vm952, %v987, %v991
      %v993 = vrot.slane %v361, 2
      %v994 = vsel %vm952, %v989, %v993
      %v995 = vrot.slane %v362, 2
      %v996 = vsel %vm952, %v991, %v995
      %v997 = vrot.slane %v363, 2
      %v998 = vsel %vm952, %v993, %v997
      %v999 = vrot.slane %v364, 2
      %v1000 = vsel %vm952, %v995, %v999
      %v1001 = vrot.slane %v365, 2
      %v1002 = vsel %vm952, %v997, %v1001
      %v1003 = vrot.slane %v366, 2
      %v1004 = vsel %vm952, %v999, %v1003
      %v1005 = vrot.slane %v367, 2
      %v1006 = vsel %vm952, %v1001, %v1005
      %v1007 = vrot.slane %v368, 2
      %v1008 = vsel %vm952, %v1003, %v1007
      %v1009 = vrot.slane %v369, 2
      %v1010 = vsel %vm952, %v1005, %v1009
      %v1011 = vrot.slane %v370, 2
      %v1012 = vsel %vm952, %v1007, %v1011
      %v1013 = vrot.slane %v371, 2
      %v1014 = vsel %vm952, %v1009, %v1013
      %v1015 = vrot.slane %v372, 2
      %v1016 = vsel %vm952, %v1011, %v1015
      %v1017 = vrot.slane %v373, 2
      %v1018 = vsel %vm952, %v1013, %v1017
      %v1019 = vrot.slane %v927, 2
      %v1020 = vsel %vm952, %v1015, %v1019
      %v1021 = vrot.slane %v928, 2
      %v1022 = vsel %vm952, %v1017, %v1021
      %v1041 = vsel %vm190, %v958, 0
      %v1043 = vsel %vm190, %v962, 0
      %v1045 = vsel %vm190, %v966, 0
      %v1047 = vsel %vm190, %v970, 0
      %v1049 = vsel %vm190, %v974, 0
      %v1051 = vsel %vm190, %v978, 0
      %v1053 = vsel %vm190, %v982, 0
      %v1055 = vsel %vm190, %v986, 0
      %v1057 = vsel %vm190, %v990, 0
      %v1059 = vsel %vm190, %v994, 0
      %v1061 = vsel %vm190, %v998, 0
      %v1063 = vsel %vm190, %v1002, 0
      %v1065 = vsel %vm190, %v1006, 0
      %v1067 = vsel %vm190, %v1010, 0
      %v1069 = vsel %vm190, %v1014, 0
      %v1071 = vsel %vm190, %v1018, 0
      %v1073 = vsel %vm190, %v1022, 0
      %v1075 = vsel %vm190, %v1021, 0
      %1077 = vmatprep.subr.mxu0 0.0
      %1078 = vmatpush1.msra.mxu0 %v930
      %1079 = vmatprep.subr.mxu0 0.0
      %1080 = vmatpush1.msra.mxu0 %v931
      %1081 = vmatprep.subr.mxu0 0.0
      %1082 = vmatpush1.msra.mxu0 %v932
      %1083 = vmatprep.subr.mxu0 0.0
      %1084 = vmatpush1.msra.mxu0 %v933
      %1085 = vmatprep.subr.mxu0 0.0
      %1086 = vmatpush1.msra.mxu0 %v934
      %1087 = vmatprep.subr.mxu0 0.0
      %1088 = vmatpush1.msra.mxu0 %v935
      %1089 = vmatprep.subr.mxu0 0.0
      %1090 = vmatpush1.msra.mxu0 %v936
      %1091 = vmatprep.subr.mxu0 0.0
      %1092 = vmatpush1.msra.mxu0 %v937
      %1093 = vmatprep.subr.mxu0 0.0
      %1094 = vmatpush1.msra.mxu0 %v938
      %1095 = vmatprep.subr.mxu0 0.0
      %1096 = vmatpush1.msra.mxu0 %v939
      %1097 = vmatprep.subr.mxu0 0.0
      %1098 = vmatpush1.msra.mxu0 %v940
      %1099 = vmatprep.subr.mxu0 0.0
      %1100 = vmatpush1.msra.mxu0 %v941
      %1101 = vmatprep.subr.mxu0 0.0
      %1102 = vmatpush1.msra.mxu0 %v942
      %1103 = vmatprep.subr.mxu0 0.0
      %1104 = vmatpush1.msra.mxu0 %v943
      %1105 = vmatprep.subr.mxu0 0.0
      %1106 = vmatpush1.msra.mxu0 %v944
      %1107 = vmatprep.subr.mxu0 0.0
      %1108 = vmatpush1.msra.mxu0 %v945
      %1109 = vmatprep.subr.mxu0 0.0
      %1110 = vmatpush1.msra.mxu0 %v946
      %1111 = vmatprep.subr.mxu0 0.0
      %1112 = vmatpush1.msra.mxu0 %v947
      %1113 = vmatprep.subr.mxu0 0.0
      %1114 = vmatpush1.msra.mxu0 0.0
      %1115 = vmatprep.subr.mxu0 0.0
      %1116 = vmatpush1.msra.mxu0 0.0
      %1117 = vmatprep.subr.mxu0 0.0
      %1118 = vmatpush1.msra.mxu0 0.0
      %1119 = vmatprep.subr.mxu0 0.0
      %1120 = vmatpush1.msra.mxu0 0.0
      %1121 = vmatprep.subr.mxu0 0.0
      %1122 = vmatpush1.msra.mxu0 0.0
      %1123 = vmatprep.subr.mxu0 0.0
      %1124 = vmatpush1.msra.mxu0 0.0
      %1125 = vmatprep.subr.mxu0 0.0
      %1126 = vmatpush1.msra.mxu0 0.0
      %1127 = vmatprep.subr.mxu0 0.0
      %1128 = vmatpush1.msra.mxu0 0.0
      %1129 = vmatprep.subr.mxu0 0.0
      %1130 = vmatpush1.msra.mxu0 0.0
      %1131 = vmatprep.subr.mxu0 0.0
      %1132 = vmatpush1.msra.mxu0 0.0
      %1133 = vmatprep.subr.mxu0 0.0
      %1134 = vmatpush1.msra.mxu0 0.0
      %1135 = vmatprep.subr.mxu0 0.0
      %1136 = vmatpush1.msra.mxu0 0.0
      %1137 = vmatprep.subr.mxu0 0.0
      %1138 = vmatpush1.msra.mxu0 0.0
      %1139 = vmatprep.subr.mxu0 0.0
      %1140 = vmatpush1.msra.mxu0 0.0
      %1141 = vmatprep.mubr.f32.mxu0 %v1041
      %1142 = vmatmul.mubr.f32.gmra.mrb[0].mxu0 %v955
      %v1143 = vpop.f32.mrb[0].mxu0
      %v1144 = vadd.f32 0.0, %v1143
      %v1145 = vpop.f32.mrb[0].mxu0
      %1146 = vmatprep.mubr.f32.mxu0 %v1043
      %1147 = vmatmul.mubr.f32.gmra.mrb[0].mxu0 %v960
      %v1148 = vpop.f32.mrb[0].mxu0
      %v1149 = vadd.f32 0.0, %v1148
      %v1150 = vpop.f32.mrb[0].mxu0
      %1151 = vmatprep.mubr.f32.mxu0 %v1045
      %1152 = vmatmul.mubr.f32.gmra.mrb[0].mxu0 %v964
      %v1153 = vpop.f32.mrb[0].mxu0
      %v1154 = vadd.f32 0.0, %v1153
      %v1155 = vpop.f32.mrb[0].mxu0
      %1156 = vmatprep.mubr.f32.mxu0 %v1047
      %1157 = vmatmul.mubr.f32.gmra.mrb[0].mxu0 %v968
      %v1158 = vpop.f32.mrb[0].mxu0
      %v1159 = vadd.f32 0.0, %v1158
      %v1160 = vpop.f32.mrb[0].mxu0
      %1161 = vmatprep.mubr.f32.mxu0 %v1049
      %1162 = vmatmul.mubr.f32.gmra.mrb[0].mxu0 %v972
      %v1163 = vpop.f32.mrb[0].mxu0
      %v1164 = vadd.f32 0.0, %v1163
      %v1165 = vpop.f32.mrb[0].mxu0
      %1166 = vmatprep.mubr.f32.mxu0 %v1051
      %1167 = vmatmul.mubr.f32.gmra.mrb[0].mxu0 %v976
      %v1168 = vpop.f32.mrb[0].mxu0
      %v1169 = vadd.f32 0.0, %v1168
      %v1170 = vpop.f32.mrb[0].mxu0
      %1171 = vmatprep.mubr.f32.mxu0 %v1053
      %1172 = vmatmul.mubr.f32.gmra.mrb[0].mxu0 %v980
      %v1173 = vpop.f32.mrb[0].mxu0
      %v1174 = vadd.f32 0.0, %v1173
      %v1175 = vpop.f32.mrb[0].mxu0
      %1176 = vmatprep.mubr.f32.mxu0 %v1055
      %1177 = vmatmul.mubr.f32.gmra.mrb[0].mxu0 %v984
      %v1178 = vpop.f32.mrb[0].mxu0
      %v1179 = vadd.f32 0.0, %v1178
      %v1180 = vpop.f32.mrb[0].mxu0
      %1181 = vmatprep.mubr.f32.mxu0 %v1057
      %1182 = vmatmul.mubr.f32.gmra.mrb[0].mxu0 %v988
      %v1183 = vpop.f32.mrb[0].mxu0
      %v1184 = vadd.f32 0.0, %v1183
      %v1185 = vpop.f32.mrb[0].mxu0
      %1186 = vmatprep.mubr.f32.mxu0 %v1059
      %1187 = vmatmul.mubr.f32.gmra.mrb[0].mxu0 %v992
      %v1188 = vpop.f32.mrb[0].mxu0
      %v1189 = vadd.f32 0.0, %v1188
      %v1190 = vpop.f32.mrb[0].mxu0
      %1191 = vmatprep.mubr.f32.mxu0 %v1061
      %1192 = vmatmul.mubr.f32.gmra.mrb[0].mxu0 %v996
      %v1193 = vpop.f32.mrb[0].mxu0
      %v1194 = vadd.f32 0.0, %v1193
      %v1195 = vpop.f32.mrb[0].mxu0
      %1196 = vmatprep.mubr.f32.mxu0 %v1063
      %1197 = vmatmul.mubr.f32.gmra.mrb[0].mxu0 %v1000
      %v1198 = vpop.f32.mrb[0].mxu0
      %v1199 = vadd.f32 0.0, %v1198
      %v1200 = vpop.f32.mrb[0].mxu0
      %1201 = vmatprep.mubr.f32.mxu0 %v1065
      %1202 = vmatmul.mubr.f32.gmra.mrb[0].mxu0 %v1004
      %v1203 = vpop.f32.mrb[0].mxu0
      %v1204 = vadd.f32 0.0, %v1203
      %v1205 = vpop.f32.mrb[0].mxu0
      %1206 = vmatprep.mubr.f32.mxu0 %v1067
      %1207 = vmatmul.mubr.f32.gmra.mrb[0].mxu0 %v1008
      %v1208 = vpop.f32.mrb[0].mxu0
      %v1209 = vadd.f32 0.0, %v1208
      %v1210 = vpop.f32.mrb[0].mxu0
      %1211 = vmatprep.mubr.f32.mxu0 %v1069
      %1212 = vmatmul.mubr.f32.gmra.mrb[0].mxu0 %v1012
      %v1213 = vpop.f32.mrb[0].mxu0
      %v1214 = vadd.f32 0.0, %v1213
      %v1215 = vpop.f32.mrb[0].mxu0
      %1216 = vmatprep.mubr.f32.mxu0 %v1071
      %1217 = vmatmul.mubr.f32.gmra.mrb[0].mxu0 %v1016
      %v1218 = vpop.f32.mrb[0].mxu0
      %v1219 = vadd.f32 0.0, %v1218
      %v1220 = vpop.f32.mrb[0].mxu0
      %1221 = vmatprep.mubr.f32.mxu0 %v1073
      %1222 = vmatmul.mubr.f32.gmra.mrb[0].mxu0 %v1020
      %v1223 = vpop.f32.mrb[0].mxu0
      %v1224 = vadd.f32 0.0, %v1223
      %v1225 = vpop.f32.mrb[0].mxu0
      %1226 = vmatprep.mubr.f32.mxu0 %v1075
      %1227 = vmatmul.mubr.f32.gmra.mrb[0].mxu0 %v1019
      %v1228 = vpop.f32.mrb[0].mxu0
      %v1229 = vadd.f32 0.0, %v1228
      %v1230 = vpop.f32.mrb[0].mxu0
      %1231 = vdwg.mxu0
      %v1232 = vadd.f32 %v837, %v1144
      %v1233 = vadd.f32 %v842, %v1149
      %v1234 = vadd.f32 %v847, %v1154
      %v1235 = vadd.f32 %v852, %v1159
      %v1236 = vadd.f32 %v857, %v1164
      %v1237 = vadd.f32 %v862, %v1169
      %v1238 = vadd.f32 %v867, %v1174
      %v1239 = vadd.f32 %v872, %v1179
      %v1240 = vadd.f32 %v877, %v1184
      %v1241 = vadd.f32 %v882, %v1189
      %v1242 = vadd.f32 %v887, %v1194
      %v1243 = vadd.f32 %v892, %v1199
      %v1244 = vadd.f32 %v897, %v1204
      %v1245 = vadd.f32 %v902, %v1209
      %v1246 = vadd.f32 %v907, %v1214
      %v1247 = vadd.f32 %v912, %v1219
      %v1248 = vadd.f32 %v917, %v1224
      %v1249 = vadd.f32 %v922, %v1229
      %vm1250 = vcmp.ge.f32.partialorder %v1232, 0.0
      %vm1251 = vcmp.ge.f32.partialorder %v1233, 0.0
      %vm1252 = vcmp.ge.f32.partialorder %v1234, 0.0
      %vm1253 = vcmp.ge.f32.partialorder %v1235, 0.0
      %vm1254 = vcmp.ge.f32.partialorder %v1236, 0.0
      %vm1255 = vcmp.ge.f32.partialorder %v1237, 0.0
      %vm1256 = vcmp.ge.f32.partialorder %v1238, 0.0
      %vm1257 = vcmp.ge.f32.partialorder %v1239, 0.0
      %vm1258 = vcmp.ge.f32.partialorder %v1240, 0.0
      %vm1259 = vcmp.ge.f32.partialorder %v1241, 0.0
      %vm1260 = vcmp.ge.f32.partialorder %v1242, 0.0
      %vm1261 = vcmp.ge.f32.partialorder %v1243, 0.0
      %vm1262 = vcmp.ge.f32.partialorder %v1244, 0.0
      %vm1263 = vcmp.ge.f32.partialorder %v1245, 0.0
      %vm1264 = vcmp.ge.f32.partialorder %v1246, 0.0
      %vm1265 = vcmp.ge.f32.partialorder %v1247, 0.0
      %vm1266 = vcmp.ge.f32.partialorder %v1248, 0.0
      %vm1267 = vcmp.ge.f32.partialorder %v1249, 0.0
      %v1268 = vmul.f32 %v1232, 0.3
      %v1269 = vmul.f32 %v1233, 0.3
      %v1270 = vmul.f32 %v1234, 0.3
      %v1271 = vmul.f32 %v1235, 0.3
      %v1272 = vmul.f32 %v1236, 0.3
      %v1273 = vmul.f32 %v1237, 0.3
      %v1274 = vmul.f32 %v1238, 0.3
      %v1275 = vmul.f32 %v1239, 0.3
      %v1276 = vmul.f32 %v1240, 0.3
      %v1277 = vmul.f32 %v1241, 0.3
      %v1278 = vmul.f32 %v1242, 0.3
      %v1279 = vmul.f32 %v1243, 0.3
      %v1280 = vmul.f32 %v1244, 0.3
      %v1281 = vmul.f32 %v1245, 0.3
      %v1282 = vmul.f32 %v1246, 0.3
      %v1283 = vmul.f32 %v1247, 0.3
      %v1284 = vmul.f32 %v1248, 0.3
      %v1285 = vmul.f32 %v1249, 0.3
      %v1286 = vsel %vm1250, %v1232, %v1268
      %v1287 = vsel %vm1251, %v1233, %v1269
      %v1288 = vsel %vm1252, %v1234, %v1270
      %v1289 = vsel %vm1253, %v1235, %v1271
      %v1290 = vsel %vm1254, %v1236, %v1272
      %v1291 = vsel %vm1255, %v1237, %v1273
      %v1292 = vsel %vm1256, %v1238, %v1274
      %v1293 = vsel %vm1257, %v1239, %v1275
      %v1294 = vsel %vm1258, %v1240, %v1276
      %v1295 = vsel %vm1259, %v1241, %v1277
      %v1296 = vsel %vm1260, %v1242, %v1278
      %v1297 = vsel %vm1261, %v1243, %v1279
      %v1298 = vsel %vm1262, %v1244, %v1280
      %v1299 = vsel %vm1263, %v1245, %v1281
      %v1300 = vsel %vm1264, %v1246, %v1282
      %v1301 = vsel %vm1265, %v1247, %v1283
      %v1302 = vsel %vm1266, %v1248, %v1284
      %v1303 = vsel %vm1267, %v1249, %v1285
      %v1306 = vrot.slane %v1286, 7
      %v1307 = vrot.slane %v1287, 7
      %v1308 = vsel %vm229, %v1306, %v1307
      %1312 = vst [vmem:[#allocation2] sm:$0xfe] %v1306
      %1313 = vst [vmem:[#allocation2 + $0x10] sm:$0xff] %v1308
      %1314 = vst [vmem:[#allocation2 + $0x20] sm:$0x1] %v1307
      %v1318 = vrot.slane %v1288, 7
      %v1319 = vrot.slane %v1289, 7
      %v1320 = vsel %vm229, %v1318, %v1319
      %v1321 = vrot.slane %v1290, 7
      %v1322 = vsel %vm229, %v1319, %v1321
      %1326 = vst [vmem:[#allocation2 + $0x20] sm:$0xf8] %v1318
      %1327 = vst [vmem:[#allocation2 + $0x30] sm:$0xff] %v1320
      %1328 = vst [vmem:[#allocation2 + $0x40] sm:$0x7] %v1322
      %v1331 = vrot.slane %v1291, 7
      %v1332 = vsel %vm229, %v1321, %v1331
      %v1333 = vrot.slane %v1292, 7
      %v1334 = vsel %vm229, %v1331, %v1333
      %1338 = vst [vmem:[#allocation2 + $0x40] sm:$0xe0] %v1321
      %1339 = vst [vmem:[#allocation2 + $0x50] sm:$0xff] %v1332
      %1340 = vst [vmem:[#allocation2 + $0x60] sm:$0x1f] %v1334
      %v1343 = vrot.slane %v1293, 7
      %v1344 = vsel %vm229, %v1333, %v1343
      %v1345 = vrot.slane %v1294, 7
      %v1346 = vsel %vm229, %v1343, %v1345
      %1350 = vst [vmem:[#allocation2 + $0x60] sm:$0x80] %v1333
      %1351 = vst [vmem:[#allocation2 + $0x70] sm:$0xff] %v1344
      %1352 = vst [vmem:[#allocation2 + $0x80] sm:$0x7f] %v1346
      %v1355 = vrot.slane %v1295, 7
      %v1356 = vrot.slane %v1296, 7
      %v1357 = vsel %vm229, %v1355, %v1356
      %1361 = vst [vmem:[#allocation2 + $0x90] sm:$0xfe] %v1355
      %1362 = vst [vmem:[#allocation2 + $0xa0] sm:$0xff] %v1357
      %1363 = vst [vmem:[#allocation2 + $0xb0] sm:$0x1] %v1356
      %v1367 = vrot.slane %v1297, 7
      %v1368 = vrot.slane %v1298, 7
      %v1369 = vsel %vm229, %v1367, %v1368
      %v1370 = vrot.slane %v1299, 7
      %v1371 = vsel %vm229, %v1368, %v1370
      %1375 = vst [vmem:[#allocation2 + $0xb0] sm:$0xf8] %v1367
      %1376 = vst [vmem:[#allocation2 + $0xc0] sm:$0xff] %v1369
      %1377 = vst [vmem:[#allocation2 + $0xd0] sm:$0x7] %v1371
      %v1380 = vrot.slane %v1300, 7
      %v1381 = vsel %vm229, %v1370, %v1380
      %v1382 = vrot.slane %v1301, 7
      %v1383 = vsel %vm229, %v1380, %v1382
      %1387 = vst [vmem:[#allocation2 + $0xd0] sm:$0xe0] %v1370
      %1388 = vst [vmem:[#allocation2 + $0xe0] sm:$0xff] %v1381
      %1389 = vst [vmem:[#allocation2 + $0xf0] sm:$0x1f] %v1383
      %v1392 = vrot.slane %v1302, 7
      %v1393 = vsel %vm229, %v1382, %v1392
      %v1394 = vrot.slane %v1303, 7
      %v1395 = vsel %vm229, %v1392, %v1394
      %1399 = vst [vmem:[#allocation2 + $0xf0] sm:$0x80] %v1382
      %1400 = vst [vmem:[#allocation2 + $0x100] sm:$0xff] %v1393
      %1401 = vst [vmem:[#allocation2 + $0x110] sm:$0x7f] %v1395
      %v1402 = vld [vmem:[#allocation2] sm:$0xff]
      %v1403 = vld [vmem:[#allocation2 + $0x8] sm:$0xff]
      %v1404 = vld [vmem:[#allocation2 + $0x10] sm:$0xff]
      %v1405 = vld [vmem:[#allocation2 + $0x18] sm:$0xff]
      %v1406 = vld [vmem:[#allocation2 + $0x20] sm:$0xff]
      %v1407 = vld [vmem:[#allocation2 + $0x28] sm:$0xff]
      %v1408 = vld [vmem:[#allocation2 + $0x30] sm:$0xff]
      %v1409 = vld [vmem:[#allocation2 + $0x38] sm:$0xff]
      %v1410 = vld [vmem:[#allocation2 + $0x40] sm:$0xff]
      %v1411 = vld [vmem:[#allocation2 + $0x48] sm:$0xff]
      %v1412 = vld [vmem:[#allocation2 + $0x50] sm:$0xff]
      %v1413 = vld [vmem:[#allocation2 + $0x58] sm:$0xff]
      %v1414 = vld [vmem:[#allocation2 + $0x60] sm:$0xff]
      %v1415 = vld [vmem:[#allocation2 + $0x68] sm:$0xff]
      %v1416 = vld [vmem:[#allocation2 + $0x70] sm:$0xff]
      %v1417 = vld [vmem:[#allocation2 + $0x78] sm:$0xff]
      %v1418 = vld [vmem:[#allocation2 + $0x80] sm:$0xff]
      %v1419 = vld [vmem:[#allocation2 + $0x88] sm:$0xff]
      %v1420 = vld [vmem:[#allocation2 + $0x90] sm:$0xff]
      %v1421 = vld [vmem:[#allocation2 + $0x98] sm:$0xff]
      %v1422 = vld [vmem:[#allocation2 + $0xa0] sm:$0xff]
      %v1423 = vld [vmem:[#allocation2 + $0xa8] sm:$0xff]
      %v1424 = vld [vmem:[#allocation2 + $0xb0] sm:$0xff]
      %v1425 = vld [vmem:[#allocation2 + $0xb8] sm:$0xff]
      %v1426 = vld [vmem:[#allocation2 + $0xc0] sm:$0xff]
      %v1427 = vld [vmem:[#allocation2 + $0xc8] sm:$0xff]
      %v1428 = vld [vmem:[#allocation2 + $0xd0] sm:$0xff]
      %v1429 = vld [vmem:[#allocation2 + $0xd8] sm:$0xff]
      %v1430 = vld [vmem:[#allocation2 + $0xe0] sm:$0xff]
      %v1431 = vld [vmem:[#allocation2 + $0xe8] sm:$0xff]
      %v1432 = vld [vmem:[#allocation2 + $0xf0] sm:$0xff]
      %v1433 = vld [vmem:[#allocation2 + $0xf8] sm:$0xff]
      %v1434 = vld [vmem:[#allocation2 + $0x100] sm:$0xff]
      %v1435 = vld [vmem:[#allocation2 + $0x108] sm:$0xff]
      %v1436 = vld [vmem:[#allocation2 + $0x110] sm:$0x3f]
      %v1437 = vld [vmem:[#allocation2 + $0x118] sm:$0x3f]
      %s1438 = scalar_lea.vmem %s1, 432
      %v1439 = vld [vmem:[%s1438] sm:$0xff]
      %v1440 = vld [vmem:[%s1438 + $0x8] sm:$0xff]
      %v1441 = vld [vmem:[%s1438 + $0x10] sm:$0xff]
      %v1442 = vld [vmem:[%s1438 + $0x18] sm:$0xff]
      %v1443 = vld [vmem:[%s1438 + $0x20] sm:$0xff]
      %v1444 = vld [vmem:[%s1438 + $0x28] sm:$0xff]
      %v1445 = vld [vmem:[%s1438 + $0x30] sm:$0xff]
      %v1446 = vld [vmem:[%s1438 + $0x38] sm:$0xff]
      %v1447 = vld [vmem:[%s1438 + $0x40] sm:$0xff]
      %v1448 = vld [vmem:[%s1438 + $0x48] sm:$0xff]
      %v1449 = vld [vmem:[%s1438 + $0x50] sm:$0xff]
      %v1450 = vld [vmem:[%s1438 + $0x58] sm:$0xff]
      %v1451 = vld [vmem:[%s1438 + $0x60] sm:$0xff]
      %v1452 = vld [vmem:[%s1438 + $0x68] sm:$0xff]
      %v1453 = vld [vmem:[%s1438 + $0x70] sm:$0xff]
      %v1454 = vld [vmem:[%s1438 + $0x78] sm:$0xff]
      %v1455 = vld [vmem:[%s1438 + $0x80] sm:$0xff]
      %v1456 = vld [vmem:[%s1438 + $0x88] sm:$0xff]
      %v1457 = vld [vmem:[#allocation2] sm:$0xfe]
      %v1458 = vld [vmem:[#allocation2 + $0x8] sm:$0xfe]
      %v1459 = vld [vmem:[#allocation2 + $0x110] sm:$0x7f]
      %v1460 = vld [vmem:[#allocation2 + $0x118] sm:$0x7f]
      %s1461 = scalar_lea.vmem %s1, 576
      %v1462 = vld [vmem:[%s1461] sm:$0xff]
      %v1463 = vld [vmem:[%s1461 + $0x8] sm:$0xff]
      %v1464 = vld [vmem:[%s1461 + $0x10] sm:$0xff]
      %v1465 = vld [vmem:[%s1461 + $0x18] sm:$0xff]
      %v1466 = vld [vmem:[%s1461 + $0x20] sm:$0xff]
      %v1467 = vld [vmem:[%s1461 + $0x28] sm:$0xff]
      %v1468 = vld [vmem:[%s1461 + $0x30] sm:$0xff]
      %v1469 = vld [vmem:[%s1461 + $0x38] sm:$0xff]
      %v1470 = vld [vmem:[%s1461 + $0x40] sm:$0xff]
      %v1471 = vld [vmem:[%s1461 + $0x48] sm:$0xff]
      %v1472 = vld [vmem:[%s1461 + $0x50] sm:$0xff]
      %v1473 = vld [vmem:[%s1461 + $0x58] sm:$0xff]
      %v1474 = vld [vmem:[%s1461 + $0x60] sm:$0xff]
      %v1475 = vld [vmem:[%s1461 + $0x68] sm:$0xff]
      %v1476 = vld [vmem:[%s1461 + $0x70] sm:$0xff]
      %v1477 = vld [vmem:[%s1461 + $0x78] sm:$0xff]
      %v1478 = vld [vmem:[%s1461 + $0x80] sm:$0xff]
      %v1479 = vld [vmem:[%s1461 + $0x88] sm:$0xff]
      %v1516 = vrot.slane %v1457, 1
      %v1517 = vrot.slane %v1404, 1
      %v1518 = vsel %vm274, %v1516, %v1517
      %v1519 = vrot.slane %v1458, 1
      %v1520 = vrot.slane %v1405, 1
      %v1521 = vsel %vm274, %v1519, %v1520
      %v1522 = vrot.slane %v1406, 1
      %v1523 = vsel %vm274, %v1517, %v1522
      %v1524 = vrot.slane %v1407, 1
      %v1525 = vsel %vm274, %v1520, %v1524
      %v1526 = vrot.slane %v1408, 1
      %v1527 = vsel %vm274, %v1522, %v1526
      %v1528 = vrot.slane %v1409, 1
      %v1529 = vsel %vm274, %v1524, %v1528
      %v1530 = vrot.slane %v1410, 1
      %v1531 = vsel %vm274, %v1526, %v1530
      %v1532 = vrot.slane %v1411, 1
      %v1533 = vsel %vm274, %v1528, %v1532
      %v1534 = vrot.slane %v1412, 1
      %v1535 = vsel %vm274, %v1530, %v1534
      %v1536 = vrot.slane %v1413, 1
      %v1537 = vsel %vm274, %v1532, %v1536
      %v1538 = vrot.slane %v1414, 1
      %v1539 = vsel %vm274, %v1534, %v1538
      %v1540 = vrot.slane %v1415, 1
      %v1541 = vsel %vm274, %v1536, %v1540
      %v1542 = vrot.slane %v1416, 1
      %v1543 = vsel %vm274, %v1538, %v1542
      %v1544 = vrot.slane %v1417, 1
      %v1545 = vsel %vm274, %v1540, %v1544
      %v1546 = vrot.slane %v1418, 1
      %v1547 = vsel %vm274, %v1542, %v1546
      %v1548 = vrot.slane %v1419, 1
      %v1549 = vsel %vm274, %v1544, %v1548
      %v1550 = vrot.slane %v1420, 1
      %v1551 = vsel %vm274, %v1546, %v1550
      %v1552 = vrot.slane %v1421, 1
      %v1553 = vsel %vm274, %v1548, %v1552
      %v1554 = vrot.slane %v1422, 1
      %v1555 = vsel %vm274, %v1550, %v1554
      %v1556 = vrot.slane %v1423, 1
      %v1557 = vsel %vm274, %v1552, %v1556
      %v1558 = vrot.slane %v1424, 1
      %v1559 = vsel %vm274, %v1554, %v1558
      %v1560 = vrot.slane %v1425, 1
      %v1561 = vsel %vm274, %v1556, %v1560
      %v1562 = vrot.slane %v1426, 1
      %v1563 = vsel %vm274, %v1558, %v1562
      %v1564 = vrot.slane %v1427, 1
      %v1565 = vsel %vm274, %v1560, %v1564
      %v1566 = vrot.slane %v1428, 1
      %v1567 = vsel %vm274, %v1562, %v1566
      %v1568 = vrot.slane %v1429, 1
      %v1569 = vsel %vm274, %v1564, %v1568
      %v1570 = vrot.slane %v1430, 1
      %v1571 = vsel %vm274, %v1566, %v1570
      %v1572 = vrot.slane %v1431, 1
      %v1573 = vsel %vm274, %v1568, %v1572
      %v1574 = vrot.slane %v1432, 1
      %v1575 = vsel %vm274, %v1570, %v1574
      %v1576 = vrot.slane %v1433, 1
      %v1577 = vsel %vm274, %v1572, %v1576
      %v1578 = vrot.slane %v1434, 1
      %v1579 = vsel %vm274, %v1574, %v1578
      %v1580 = vrot.slane %v1435, 1
      %v1581 = vsel %vm274, %v1576, %v1580
      %v1582 = vrot.slane %v1459, 1
      %v1583 = vsel %vm274, %v1578, %v1582
      %v1584 = vrot.slane %v1460, 1
      %v1585 = vsel %vm274, %v1580, %v1584
      %v1604 = vsel %vm190, %v1521, 0
      %v1606 = vsel %vm190, %v1525, 0
      %v1608 = vsel %vm190, %v1529, 0
      %v1610 = vsel %vm190, %v1533, 0
      %v1612 = vsel %vm190, %v1537, 0
      %v1614 = vsel %vm190, %v1541, 0
      %v1616 = vsel %vm190, %v1545, 0
      %v1618 = vsel %vm190, %v1549, 0
      %v1620 = vsel %vm190, %v1553, 0
      %v1622 = vsel %vm190, %v1557, 0
      %v1624 = vsel %vm190, %v1561, 0
      %v1626 = vsel %vm190, %v1565, 0
      %v1628 = vsel %vm190, %v1569, 0
      %v1630 = vsel %vm190, %v1573, 0
      %v1632 = vsel %vm190, %v1577, 0
      %v1634 = vsel %vm190, %v1581, 0
      %v1636 = vsel %vm190, %v1585, 0
      %v1638 = vsel %vm190, %v1584, 0
      %1640 = vmatprep.subr.mxu0 0.0
      %1641 = vmatpush1.msra.mxu0 %v1462
      %1642 = vmatprep.subr.mxu0 0.0
      %1643 = vmatpush1.msra.mxu0 %v1463
      %1644 = vmatprep.subr.mxu0 0.0
      %1645 = vmatpush1.msra.mxu0 %v1464
      %1646 = vmatprep.subr.mxu0 0.0
      %1647 = vmatpush1.msra.mxu0 %v1465
      %1648 = vmatprep.subr.mxu0 0.0
      %1649 = vmatpush1.msra.mxu0 %v1466
      %1650 = vmatprep.subr.mxu0 0.0
      %1651 = vmatpush1.msra.mxu0 %v1467
      %1652 = vmatprep.subr.mxu0 0.0
      %1653 = vmatpush1.msra.mxu0 %v1468
      %1654 = vmatprep.subr.mxu0 0.0
      %1655 = vmatpush1.msra.mxu0 %v1469
      %1656 = vmatprep.subr.mxu0 0.0
      %1657 = vmatpush1.msra.mxu0 %v1470
      %1658 = vmatprep.subr.mxu0 0.0
      %1659 = vmatpush1.msra.mxu0 %v1471
      %1660 = vmatprep.subr.mxu0 0.0
      %1661 = vmatpush1.msra.mxu0 %v1472
      %1662 = vmatprep.subr.mxu0 0.0
      %1663 = vmatpush1.msra.mxu0 %v1473
      %1664 = vmatprep.subr.mxu0 0.0
      %1665 = vmatpush1.msra.mxu0 %v1474
      %1666 = vmatprep.subr.mxu0 0.0
      %1667 = vmatpush1.msra.mxu0 %v1475
      %1668 = vmatprep.subr.mxu0 0.0
      %1669 = vmatpush1.msra.mxu0 %v1476
      %1670 = vmatprep.subr.mxu0 0.0
      %1671 = vmatpush1.msra.mxu0 %v1477
      %1672 = vmatprep.subr.mxu0 0.0
      %1673 = vmatpush1.msra.mxu0 %v1478
      %1674 = vmatprep.subr.mxu0 0.0
      %1675 = vmatpush1.msra.mxu0 %v1479
      %1676 = vmatprep.subr.mxu0 0.0
      %1677 = vmatpush1.msra.mxu0 0.0
      %1678 = vmatprep.subr.mxu0 0.0
      %1679 = vmatpush1.msra.mxu0 0.0
      %1680 = vmatprep.subr.mxu0 0.0
      %1681 = vmatpush1.msra.mxu0 0.0
      %1682 = vmatprep.subr.mxu0 0.0
      %1683 = vmatpush1.msra.mxu0 0.0
      %1684 = vmatprep.subr.mxu0 0.0
      %1685 = vmatpush1.msra.mxu0 0.0
      %1686 = vmatprep.subr.mxu0 0.0
      %1687 = vmatpush1.msra.mxu0 0.0
      %1688 = vmatprep.subr.mxu0 0.0
      %1689 = vmatpush1.msra.mxu0 0.0
      %1690 = vmatprep.subr.mxu0 0.0
      %1691 = vmatpush1.msra.mxu0 0.0
      %1692 = vmatprep.subr.mxu0 0.0
      %1693 = vmatpush1.msra.mxu0 0.0
      %1694 = vmatprep.subr.mxu0 0.0
      %1695 = vmatpush1.msra.mxu0 0.0
      %1696 = vmatprep.subr.mxu0 0.0
      %1697 = vmatpush1.msra.mxu0 0.0
      %1698 = vmatprep.subr.mxu0 0.0
      %1699 = vmatpush1.msra.mxu0 0.0
      %1700 = vmatprep.subr.mxu0 0.0
      %1701 = vmatpush1.msra.mxu0 0.0
      %1702 = vmatprep.subr.mxu0 0.0
      %1703 = vmatpush1.msra.mxu0 0.0
      %1704 = vmatprep.mubr.f32.mxu0 %v1604
      %1705 = vmatmul.mubr.f32.gmra.mrb[0].mxu0 %v1518
      %v1706 = vpop.f32.mrb[0].mxu0
      %v1707 = vadd.f32 0.0, %v1706
      %v1708 = vpop.f32.mrb[0].mxu0
      %1709 = vmatprep.mubr.f32.mxu0 %v1606
      %1710 = vmatmul.mubr.f32.gmra.mrb[0].mxu0 %v1523
      %v1711 = vpop.f32.mrb[0].mxu0
      %v1712 = vadd.f32 0.0, %v1711
      %v1713 = vpop.f32.mrb[0].mxu0
      %1714 = vmatprep.mubr.f32.mxu0 %v1608
      %1715 = vmatmul.mubr.f32.gmra.mrb[0].mxu0 %v1527
      %v1716 = vpop.f32.mrb[0].mxu0
      %v1717 = vadd.f32 0.0, %v1716
      %v1718 = vpop.f32.mrb[0].mxu0
      %1719 = vmatprep.mubr.f32.mxu0 %v1610
      %1720 = vmatmul.mubr.f32.gmra.mrb[0].mxu0 %v1531
      %v1721 = vpop.f32.mrb[0].mxu0
      %v1722 = vadd.f32 0.0, %v1721
      %v1723 = vpop.f32.mrb[0].mxu0
      %1724 = vmatprep.mubr.f32.mxu0 %v1612
      %1725 = vmatmul.mubr.f32.gmra.mrb[0].mxu0 %v1535
      %v1726 = vpop.f32.mrb[0].mxu0
      %v1727 = vadd.f32 0.0, %v1726
      %v1728 = vpop.f32.mrb[0].mxu0
      %1729 = vmatprep.mubr.f32.mxu0 %v1614
      %1730 = vmatmul.mubr.f32.gmra.mrb[0].mxu0 %v1539
      %v1731 = vpop.f32.mrb[0].mxu0
      %v1732 = vadd.f32 0.0, %v1731
      %v1733 = vpop.f32.mrb[0].mxu0
      %1734 = vmatprep.mubr.f32.mxu0 %v1616
      %1735 = vmatmul.mubr.f32.gmra.mrb[0].mxu0 %v1543
      %v1736 = vpop.f32.mrb[0].mxu0
      %v1737 = vadd.f32 0.0, %v1736
      %v1738 = vpop.f32.mrb[0].mxu0
      %1739 = vmatprep.mubr.f32.mxu0 %v1618
      %1740 = vmatmul.mubr.f32.gmra.mrb[0].mxu0 %v1547
      %v1741 = vpop.f32.mrb[0].mxu0
      %v1742 = vadd.f32 0.0, %v1741
      %v1743 = vpop.f32.mrb[0].mxu0
      %1744 = vmatprep.mubr.f32.mxu0 %v1620
      %1745 = vmatmul.mubr.f32.gmra.mrb[0].mxu0 %v1551
      %v1746 = vpop.f32.mrb[0].mxu0
      %v1747 = vadd.f32 0.0, %v1746
      %v1748 = vpop.f32.mrb[0].mxu0
      %1749 = vmatprep.mubr.f32.mxu0 %v1622
      %1750 = vmatmul.mubr.f32.gmra.mrb[0].mxu0 %v1555
      %v1751 = vpop.f32.mrb[0].mxu0
      %v1752 = vadd.f32 0.0, %v1751
      %v1753 = vpop.f32.mrb[0].mxu0
      %1754 = vmatprep.mubr.f32.mxu0 %v1624
      %1755 = vmatmul.mubr.f32.gmra.mrb[0].mxu0 %v1559
      %v1756 = vpop.f32.mrb[0].mxu0
      %v1757 = vadd.f32 0.0, %v1756
      %v1758 = vpop.f32.mrb[0].mxu0
      %1759 = vmatprep.mubr.f32.mxu0 %v1626
      %1760 = vmatmul.mubr.f32.gmra.mrb[0].mxu0 %v1563
      %v1761 = vpop.f32.mrb[0].mxu0
      %v1762 = vadd.f32 0.0, %v1761
      %v1763 = vpop.f32.mrb[0].mxu0
      %1764 = vmatprep.mubr.f32.mxu0 %v1628
      %1765 = vmatmul.mubr.f32.gmra.mrb[0].mxu0 %v1567
      %v1766 = vpop.f32.mrb[0].mxu0
      %v1767 = vadd.f32 0.0, %v1766
      %v1768 = vpop.f32.mrb[0].mxu0
      %1769 = vmatprep.mubr.f32.mxu0 %v1630
      %1770 = vmatmul.mubr.f32.gmra.mrb[0].mxu0 %v1571
      %v1771 = vpop.f32.mrb[0].mxu0
      %v1772 = vadd.f32 0.0, %v1771
      %v1773 = vpop.f32.mrb[0].mxu0
      %1774 = vmatprep.mubr.f32.mxu0 %v1632
      %1775 = vmatmul.mubr.f32.gmra.mrb[0].mxu0 %v1575
      %v1776 = vpop.f32.mrb[0].mxu0
      %v1777 = vadd.f32 0.0, %v1776
      %v1778 = vpop.f32.mrb[0].mxu0
      %1779 = vmatprep.mubr.f32.mxu0 %v1634
      %1780 = vmatmul.mubr.f32.gmra.mrb[0].mxu0 %v1579
      %v1781 = vpop.f32.mrb[0].mxu0
      %v1782 = vadd.f32 0.0, %v1781
      %v1783 = vpop.f32.mrb[0].mxu0
      %1784 = vmatprep.mubr.f32.mxu0 %v1636
      %1785 = vmatmul.mubr.f32.gmra.mrb[0].mxu0 %v1583
      %v1786 = vpop.f32.mrb[0].mxu0
      %v1787 = vadd.f32 0.0, %v1786
      %v1788 = vpop.f32.mrb[0].mxu0
      %1789 = vmatprep.mubr.f32.mxu0 %v1638
      %1790 = vmatmul.mubr.f32.gmra.mrb[0].mxu0 %v1582
      %v1791 = vpop.f32.mrb[0].mxu0
      %v1792 = vadd.f32 0.0, %v1791
      %v1793 = vpop.f32.mrb[0].mxu0
      %1794 = vdwg.mxu0
      %v1796 = vsel %vm190, %v1403, 0
      %v1798 = vsel %vm190, %v1405, 0
      %v1800 = vsel %vm190, %v1407, 0
      %v1802 = vsel %vm190, %v1409, 0
      %v1804 = vsel %vm190, %v1411, 0
      %v1806 = vsel %vm190, %v1413, 0
      %v1808 = vsel %vm190, %v1415, 0
      %v1810 = vsel %vm190, %v1417, 0
      %v1812 = vsel %vm190, %v1419, 0
      %v1814 = vsel %vm190, %v1421, 0
      %v1816 = vsel %vm190, %v1423, 0
      %v1818 = vsel %vm190, %v1425, 0
      %v1820 = vsel %vm190, %v1427, 0
      %v1822 = vsel %vm190, %v1429, 0
      %v1824 = vsel %vm190, %v1431, 0
      %v1826 = vsel %vm190, %v1433, 0
      %v1828 = vsel %vm190, %v1435, 0
      %v1831 = vsel %vm190, %v1437, 0
      %1833 = vmatprep.subr.mxu0 0.0
      %1834 = vmatpush1.msra.mxu0 %v1439
      %1835 = vmatprep.subr.mxu0 0.0
      %1836 = vmatpush1.msra.mxu0 %v1440
      %1837 = vmatprep.subr.mxu0 0.0
      %1838 = vmatpush1.msra.mxu0 %v1441
      %1839 = vmatprep.subr.mxu0 0.0
      %1840 = vmatpush1.msra.mxu0 %v1442
      %1841 = vmatprep.subr.mxu0 0.0
      %1842 = vmatpush1.msra.mxu0 %v1443
      %1843 = vmatprep.subr.mxu0 0.0
      %1844 = vmatpush1.msra.mxu0 %v1444
      %1845 = vmatprep.subr.mxu0 0.0
      %1846 = vmatpush1.msra.mxu0 %v1445
      %1847 = vmatprep.subr.mxu0 0.0
      %1848 = vmatpush1.msra.mxu0 %v1446
      %1849 = vmatprep.subr.mxu0 0.0
      %1850 = vmatpush1.msra.mxu0 %v1447
      %1851 = vmatprep.subr.mxu0 0.0
      %1852 = vmatpush1.msra.mxu0 %v1448
      %1853 = vmatprep.subr.mxu0 0.0
      %1854 = vmatpush1.msra.mxu0 %v1449
      %1855 = vmatprep.subr.mxu0 0.0
      %1856 = vmatpush1.msra.mxu0 %v1450
      %1857 = vmatprep.subr.mxu0 0.0
      %1858 = vmatpush1.msra.mxu0 %v1451
      %1859 = vmatprep.subr.mxu0 0.0
      %1860 = vmatpush1.msra.mxu0 %v1452
      %1861 = vmatprep.subr.mxu0 0.0
      %1862 = vmatpush1.msra.mxu0 %v1453
      %1863 = vmatprep.subr.mxu0 0.0
      %1864 = vmatpush1.msra.mxu0 %v1454
      %1865 = vmatprep.subr.mxu0 0.0
      %1866 = vmatpush1.msra.mxu0 %v1455
      %1867 = vmatprep.subr.mxu0 0.0
      %1868 = vmatpush1.msra.mxu0 %v1456
      %1869 = vmatprep.subr.mxu0 0.0
      %1870 = vmatpush1.msra.mxu0 0.0
      %1871 = vmatprep.subr.mxu0 0.0
      %1872 = vmatpush1.msra.mxu0 0.0
      %1873 = vmatprep.subr.mxu0 0.0
      %1874 = vmatpush1.msra.mxu0 0.0
      %1875 = vmatprep.subr.mxu0 0.0
      %1876 = vmatpush1.msra.mxu0 0.0
      %1877 = vmatprep.subr.mxu0 0.0
      %1878 = vmatpush1.msra.mxu0 0.0
      %1879 = vmatprep.subr.mxu0 0.0
      %1880 = vmatpush1.msra.mxu0 0.0
      %1881 = vmatprep.subr.mxu0 0.0
      %1882 = vmatpush1.msra.mxu0 0.0
      %1883 = vmatprep.subr.mxu0 0.0
      %1884 = vmatpush1.msra.mxu0 0.0
      %1885 = vmatprep.subr.mxu0 0.0
      %1886 = vmatpush1.msra.mxu0 0.0
      %1887 = vmatprep.subr.mxu0 0.0
      %1888 = vmatpush1.msra.mxu0 0.0
      %1889 = vmatprep.subr.mxu0 0.0
      %1890 = vmatpush1.msra.mxu0 0.0
      %1891 = vmatprep.subr.mxu0 0.0
      %1892 = vmatpush1.msra.mxu0 0.0
      %1893 = vmatprep.subr.mxu0 0.0
      %1894 = vmatpush1.msra.mxu0 0.0
      %1895 = vmatprep.subr.mxu0 0.0
      %1896 = vmatpush1.msra.mxu0 0.0
      %1897 = vmatprep.mubr.f32.mxu0 %v1796
      %1898 = vmatmul.mubr.f32.gmra.mrb[0].mxu0 %v1402
      %v1899 = vpop.f32.mrb[0].mxu0
      %v1900 = vadd.f32 %v1707, %v1899
      %v1901 = vpop.f32.mrb[0].mxu0
      %1902 = vmatprep.mubr.f32.mxu0 %v1798
      %1903 = vmatmul.mubr.f32.gmra.mrb[0].mxu0 %v1404
      %v1904 = vpop.f32.mrb[0].mxu0
      %v1905 = vadd.f32 %v1712, %v1904
      %v1906 = vpop.f32.mrb[0].mxu0
      %1907 = vmatprep.mubr.f32.mxu0 %v1800
      %1908 = vmatmul.mubr.f32.gmra.mrb[0].mxu0 %v1406
      %v1909 = vpop.f32.mrb[0].mxu0
      %v1910 = vadd.f32 %v1717, %v1909
      %v1911 = vpop.f32.mrb[0].mxu0
      %1912 = vmatprep.mubr.f32.mxu0 %v1802
      %1913 = vmatmul.mubr.f32.gmra.mrb[0].mxu0 %v1408
      %v1914 = vpop.f32.mrb[0].mxu0
      %v1915 = vadd.f32 %v1722, %v1914
      %v1916 = vpop.f32.mrb[0].mxu0
      %1917 = vmatprep.mubr.f32.mxu0 %v1804
      %1918 = vmatmul.mubr.f32.gmra.mrb[0].mxu0 %v1410
      %v1919 = vpop.f32.mrb[0].mxu0
      %v1920 = vadd.f32 %v1727, %v1919
      %v1921 = vpop.f32.mrb[0].mxu0
      %1922 = vmatprep.mubr.f32.mxu0 %v1806
      %1923 = vmatmul.mubr.f32.gmra.mrb[0].mxu0 %v1412
      %v1924 = vpop.f32.mrb[0].mxu0
      %v1925 = vadd.f32 %v1732, %v1924
      %v1926 = vpop.f32.mrb[0].mxu0
      %1927 = vmatprep.mubr.f32.mxu0 %v1808
      %1928 = vmatmul.mubr.f32.gmra.mrb[0].mxu0 %v1414
      %v1929 = vpop.f32.mrb[0].mxu0
      %v1930 = vadd.f32 %v1737, %v1929
      %v1931 = vpop.f32.mrb[0].mxu0
      %1932 = vmatprep.mubr.f32.mxu0 %v1810
      %1933 = vmatmul.mubr.f32.gmra.mrb[0].mxu0 %v1416
      %v1934 = vpop.f32.mrb[0].mxu0
      %v1935 = vadd.f32 %v1742, %v1934
      %v1936 = vpop.f32.mrb[0].mxu0
      %1937 = vmatprep.mubr.f32.mxu0 %v1812
      %1938 = vmatmul.mubr.f32.gmra.mrb[0].mxu0 %v1418
      %v1939 = vpop.f32.mrb[0].mxu0
      %v1940 = vadd.f32 %v1747, %v1939
      %v1941 = vpop.f32.mrb[0].mxu0
      %1942 = vmatprep.mubr.f32.mxu0 %v1814
      %1943 = vmatmul.mubr.f32.gmra.mrb[0].mxu0 %v1420
      %v1944 = vpop.f32.mrb[0].mxu0
      %v1945 = vadd.f32 %v1752, %v1944
      %v1946 = vpop.f32.mrb[0].mxu0
      %1947 = vmatprep.mubr.f32.mxu0 %v1816
      %1948 = vmatmul.mubr.f32.gmra.mrb[0].mxu0 %v1422
      %v1949 = vpop.f32.mrb[0].mxu0
      %v1950 = vadd.f32 %v1757, %v1949
      %v1951 = vpop.f32.mrb[0].mxu0
      %1952 = vmatprep.mubr.f32.mxu0 %v1818
      %1953 = vmatmul.mubr.f32.gmra.mrb[0].mxu0 %v1424
      %v1954 = vpop.f32.mrb[0].mxu0
      %v1955 = vadd.f32 %v1762, %v1954
      %v1956 = vpop.f32.mrb[0].mxu0
      %1957 = vmatprep.mubr.f32.mxu0 %v1820
      %1958 = vmatmul.mubr.f32.gmra.mrb[0].mxu0 %v1426
      %v1959 = vpop.f32.mrb[0].mxu0
      %v1960 = vadd.f32 %v1767, %v1959
      %v1961 = vpop.f32.mrb[0].mxu0
      %1962 = vmatprep.mubr.f32.mxu0 %v1822
      %1963 = vmatmul.mubr.f32.gmra.mrb[0].mxu0 %v1428
      %v1964 = vpop.f32.mrb[0].mxu0
      %v1965 = vadd.f32 %v1772, %v1964
      %v1966 = vpop.f32.mrb[0].mxu0
      %1967 = vmatprep.mubr.f32.mxu0 %v1824
      %1968 = vmatmul.mubr.f32.gmra.mrb[0].mxu0 %v1430
      %v1969 = vpop.f32.mrb[0].mxu0
      %v1970 = vadd.f32 %v1777, %v1969
      %v1971 = vpop.f32.mrb[0].mxu0
      %1972 = vmatprep.mubr.f32.mxu0 %v1826
      %1973 = vmatmul.mubr.f32.gmra.mrb[0].mxu0 %v1432
      %v1974 = vpop.f32.mrb[0].mxu0
      %v1975 = vadd.f32 %v1782, %v1974
      %v1976 = vpop.f32.mrb[0].mxu0
      %1977 = vmatprep.mubr.f32.mxu0 %v1828
      %1978 = vmatmul.mubr.f32.gmra.mrb[0].mxu0 %v1434
      %v1979 = vpop.f32.mrb[0].mxu0
      %v1980 = vadd.f32 %v1787, %v1979
      %v1981 = vpop.f32.mrb[0].mxu0
      %1982 = vmatprep.mubr.f32.mxu0 %v1831
      %1983 = vmatmul.mubr.f32.gmra.mrb[0].mxu0 %v1436
      %v1984 = vpop.f32.mrb[0].mxu0
      %v1985 = vadd.f32 %v1792, %v1984
      %v1986 = vpop.f32.mrb[0].mxu0
      %1987 = vdwg.mxu0
      %v1988 = vld [vmem:[#allocation2] sm:$0xfc]
      %v1989 = vld [vmem:[#allocation2 + $0x8] sm:$0xfc]
      %v1990 = vld [vmem:[#allocation2 + $0x110] sm:$0xff]
      %v1991 = vld [vmem:[#allocation2 + $0x118] sm:$0xff]
      %s1992 = scalar_lea.vmem %s1, 720
      %v1993 = vld [vmem:[%s1992] sm:$0xff]
      %v1994 = vld [vmem:[%s1992 + $0x8] sm:$0xff]
      %v1995 = vld [vmem:[%s1992 + $0x10] sm:$0xff]
      %v1996 = vld [vmem:[%s1992 + $0x18] sm:$0xff]
      %v1997 = vld [vmem:[%s1992 + $0x20] sm:$0xff]
      %v1998 = vld [vmem:[%s1992 + $0x28] sm:$0xff]
      %v1999 = vld [vmem:[%s1992 + $0x30] sm:$0xff]
      %v2000 = vld [vmem:[%s1992 + $0x38] sm:$0xff]
      %v2001 = vld [vmem:[%s1992 + $0x40] sm:$0xff]
      %v2002 = vld [vmem:[%s1992 + $0x48] sm:$0xff]
      %v2003 = vld [vmem:[%s1992 + $0x50] sm:$0xff]
      %v2004 = vld [vmem:[%s1992 + $0x58] sm:$0xff]
      %v2005 = vld [vmem:[%s1992 + $0x60] sm:$0xff]
      %v2006 = vld [vmem:[%s1992 + $0x68] sm:$0xff]
      %v2007 = vld [vmem:[%s1992 + $0x70] sm:$0xff]
      %v2008 = vld [vmem:[%s1992 + $0x78] sm:$0xff]
      %v2009 = vld [vmem:[%s1992 + $0x80] sm:$0xff]
      %v2010 = vld [vmem:[%s1992 + $0x88] sm:$0xff]
      %v2015 = vrot.slane %v1988, 2
      %v2016 = vrot.slane %v1404, 2
      %v2017 = vsel %vm952, %v2015, %v2016
      %v2018 = vrot.slane %v1989, 2
      %v2019 = vrot.slane %v1405, 2
      %v2020 = vsel %vm952, %v2018, %v2019
      %v2021 = vrot.slane %v1406, 2
      %v2022 = vsel %vm952, %v2016, %v2021
      %v2023 = vrot.slane %v1407, 2
      %v2024 = vsel %vm952, %v2019, %v2023
      %v2025 = vrot.slane %v1408, 2
      %v2026 = vsel %vm952, %v2021, %v2025
      %v2027 = vrot.slane %v1409, 2
      %v2028 = vsel %vm952, %v2023, %v2027
      %v2029 = vrot.slane %v1410, 2
      %v2030 = vsel %vm952, %v2025, %v2029
      %v2031 = vrot.slane %v1411, 2
      %v2032 = vsel %vm952, %v2027, %v2031
      %v2033 = vrot.slane %v1412, 2
      %v2034 = vsel %vm952, %v2029, %v2033
      %v2035 = vrot.slane %v1413, 2
      %v2036 = vsel %vm952, %v2031, %v2035
      %v2037 = vrot.slane %v1414, 2
      %v2038 = vsel %vm952, %v2033, %v2037
      %v2039 = vrot.slane %v1415, 2
      %v2040 = vsel %vm952, %v2035, %v2039
      %v2041 = vrot.slane %v1416, 2
      %v2042 = vsel %vm952, %v2037, %v2041
      %v2043 = vrot.slane %v1417, 2
      %v2044 = vsel %vm952, %v2039, %v2043
      %v2045 = vrot.slane %v1418, 2
      %v2046 = vsel %vm952, %v2041, %v2045
      %v2047 = vrot.slane %v1419, 2
      %v2048 = vsel %vm952, %v2043, %v2047
      %v2049 = vrot.slane %v1420, 2
      %v2050 = vsel %vm952, %v2045, %v2049
      %v2051 = vrot.slane %v1421, 2
      %v2052 = vsel %vm952, %v2047, %v2051
      %v2053 = vrot.slane %v1422, 2
      %v2054 = vsel %vm952, %v2049, %v2053
      %v2055 = vrot.slane %v1423, 2
      %v2056 = vsel %vm952, %v2051, %v2055
      %v2057 = vrot.slane %v1424, 2
      %v2058 = vsel %vm952, %v2053, %v2057
      %v2059 = vrot.slane %v1425, 2
      %v2060 = vsel %vm952, %v2055, %v2059
      %v2061 = vrot.slane %v1426, 2
      %v2062 = vsel %vm952, %v2057, %v2061
      %v2063 = vrot.slane %v1427, 2
      %v2064 = vsel %vm952, %v2059, %v2063
      %v2065 = vrot.slane %v1428, 2
      %v2066 = vsel %vm952, %v2061, %v2065
      %v2067 = vrot.slane %v1429, 2
      %v2068 = vsel %vm952, %v2063, %v2067
      %v2069 = vrot.slane %v1430, 2
      %v2070 = vsel %vm952, %v2065, %v2069
      %v2071 = vrot.slane %v1431, 2
      %v2072 = vsel %vm952, %v2067, %v2071
      %v2073 = vrot.slane %v1432, 2
      %v2074 = vsel %vm952, %v2069, %v2073
      %v2075 = vrot.slane %v1433, 2
      %v2076 = vsel %vm952, %v2071, %v2075
      %v2077 = vrot.slane %v1434, 2
      %v2078 = vsel %vm952, %v2073, %v2077
      %v2079 = vrot.slane %v1435, 2
      %v2080 = vsel %vm952, %v2075, %v2079
      %v2081 = vrot.slane %v1990, 2
      %v2082 = vsel %vm952, %v2077, %v2081
      %v2083 = vrot.slane %v1991, 2
      %v2084 = vsel %vm952, %v2079, %v2083
      %v2103 = vsel %vm190, %v2020, 0
      %v2105 = vsel %vm190, %v2024, 0
      %v2107 = vsel %vm190, %v2028, 0
      %v2109 = vsel %vm190, %v2032, 0
      %v2111 = vsel %vm190, %v2036, 0
      %v2113 = vsel %vm190, %v2040, 0
      %v2115 = vsel %vm190, %v2044, 0
      %v2117 = vsel %vm190, %v2048, 0
      %v2119 = vsel %vm190, %v2052, 0
      %v2121 = vsel %vm190, %v2056, 0
      %v2123 = vsel %vm190, %v2060, 0
      %v2125 = vsel %vm190, %v2064, 0
      %v2127 = vsel %vm190, %v2068, 0
      %v2129 = vsel %vm190, %v2072, 0
      %v2131 = vsel %vm190, %v2076, 0
      %v2133 = vsel %vm190, %v2080, 0
      %v2135 = vsel %vm190, %v2084, 0
      %v2137 = vsel %vm190, %v2083, 0
      %2139 = vmatprep.subr.mxu0 0.0
      %2140 = vmatpush1.msra.mxu0 %v1993
      %2141 = vmatprep.subr.mxu0 0.0
      %2142 = vmatpush1.msra.mxu0 %v1994
      %2143 = vmatprep.subr.mxu0 0.0
      %2144 = vmatpush1.msra.mxu0 %v1995
      %2145 = vmatprep.subr.mxu0 0.0
      %2146 = vmatpush1.msra.mxu0 %v1996
      %2147 = vmatprep.subr.mxu0 0.0
      %2148 = vmatpush1.msra.mxu0 %v1997
      %2149 = vmatprep.subr.mxu0 0.0
      %2150 = vmatpush1.msra.mxu0 %v1998
      %2151 = vmatprep.subr.mxu0 0.0
      %2152 = vmatpush1.msra.mxu0 %v1999
      %2153 = vmatprep.subr.mxu0 0.0
      %2154 = vmatpush1.msra.mxu0 %v2000
      %2155 = vmatprep.subr.mxu0 0.0
      %2156 = vmatpush1.msra.mxu0 %v2001
      %2157 = vmatprep.subr.mxu0 0.0
      %2158 = vmatpush1.msra.mxu0 %v2002
      %2159 = vmatprep.subr.mxu0 0.0
      %2160 = vmatpush1.msra.mxu0 %v2003
      %2161 = vmatprep.subr.mxu0 0.0
      %2162 = vmatpush1.msra.mxu0 %v2004
      %2163 = vmatprep.subr.mxu0 0.0
      %2164 = vmatpush1.msra.mxu0 %v2005
      %2165 = vmatprep.subr.mxu0 0.0
      %2166 = vmatpush1.msra.mxu0 %v2006
      %2167 = vmatprep.subr.mxu0 0.0
      %2168 = vmatpush1.msra.mxu0 %v2007
      %2169 = vmatprep.subr.mxu0 0.0
      %2170 = vmatpush1.msra.mxu0 %v2008
      %2171 = vmatprep.subr.mxu0 0.0
      %2172 = vmatpush1.msra.mxu0 %v2009
      %2173 = vmatprep.subr.mxu0 0.0
      %2174 = vmatpush1.msra.mxu0 %v2010
      %2175 = vmatprep.subr.mxu0 0.0
      %2176 = vmatpush1.msra.mxu0 0.0
      %2177 = vmatprep.subr.mxu0 0.0
      %2178 = vmatpush1.msra.mxu0 0.0
      %2179 = vmatprep.subr.mxu0 0.0
      %2180 = vmatpush1.msra.mxu0 0.0
      %2181 = vmatprep.subr.mxu0 0.0
      %2182 = vmatpush1.msra.mxu0 0.0
      %2183 = vmatprep.subr.mxu0 0.0
      %2184 = vmatpush1.msra.mxu0 0.0
      %2185 = vmatprep.subr.mxu0 0.0
      %2186 = vmatpush1.msra.mxu0 0.0
      %2187 = vmatprep.subr.mxu0 0.0
      %2188 = vmatpush1.msra.mxu0 0.0
      %2189 = vmatprep.subr.mxu0 0.0
      %2190 = vmatpush1.msra.mxu0 0.0
      %2191 = vmatprep.subr.mxu0 0.0
      %2192 = vmatpush1.msra.mxu0 0.0
      %2193 = vmatprep.subr.mxu0 0.0
      %2194 = vmatpush1.msra.mxu0 0.0
      %2195 = vmatprep.subr.mxu0 0.0
      %2196 = vmatpush1.msra.mxu0 0.0
      %2197 = vmatprep.subr.mxu0 0.0
      %2198 = vmatpush1.msra.mxu0 0.0
      %2199 = vmatprep.subr.mxu0 0.0
      %2200 = vmatpush1.msra.mxu0 0.0
      %2201 = vmatprep.subr.mxu0 0.0
      %2202 = vmatpush1.msra.mxu0 0.0
      %2203 = vmatprep.mubr.f32.mxu0 %v2103
      %2204 = vmatmul.mubr.f32.gmra.mrb[0].mxu0 %v2017
      %v2205 = vpop.f32.mrb[0].mxu0
      %v2206 = vadd.f32 0.0, %v2205
      %v2207 = vpop.f32.mrb[0].mxu0
      %2208 = vmatprep.mubr.f32.mxu0 %v2105
      %2209 = vmatmul.mubr.f32.gmra.mrb[0].mxu0 %v2022
      %v2210 = vpop.f32.mrb[0].mxu0
      %v2211 = vadd.f32 0.0, %v2210
      %v2212 = vpop.f32.mrb[0].mxu0
      %2213 = vmatprep.mubr.f32.mxu0 %v2107
      %2214 = vmatmul.mubr.f32.gmra.mrb[0].mxu0 %v2026
      %v2215 = vpop.f32.mrb[0].mxu0
      %v2216 = vadd.f32 0.0, %v2215
      %v2217 = vpop.f32.mrb[0].mxu0
      %2218 = vmatprep.mubr.f32.mxu0 %v2109
      %2219 = vmatmul.mubr.f32.gmra.mrb[0].mxu0 %v2030
      %v2220 = vpop.f32.mrb[0].mxu0
      %v2221 = vadd.f32 0.0, %v2220
      %v2222 = vpop.f32.mrb[0].mxu0
      %2223 = vmatprep.mubr.f32.mxu0 %v2111
      %2224 = vmatmul.mubr.f32.gmra.mrb[0].mxu0 %v2034
      %v2225 = vpop.f32.mrb[0].mxu0
      %v2226 = vadd.f32 0.0, %v2225
      %v2227 = vpop.f32.mrb[0].mxu0
      %2228 = vmatprep.mubr.f32.mxu0 %v2113
      %2229 = vmatmul.mubr.f32.gmra.mrb[0].mxu0 %v2038
      %v2230 = vpop.f32.mrb[0].mxu0
      %v2231 = vadd.f32 0.0, %v2230
      %v2232 = vpop.f32.mrb[0].mxu0
      %2233 = vmatprep.mubr.f32.mxu0 %v2115
      %2234 = vmatmul.mubr.f32.gmra.mrb[0].mxu0 %v2042
      %v2235 = vpop.f32.mrb[0].mxu0
      %v2236 = vadd.f32 0.0, %v2235
      %v2237 = vpop.f32.mrb[0].mxu0
      %2238 = vmatprep.mubr.f32.mxu0 %v2117
      %2239 = vmatmul.mubr.f32.gmra.mrb[0].mxu0 %v2046
      %v2240 = vpop.f32.mrb[0].mxu0
      %v2241 = vadd.f32 0.0, %v2240
      %v2242 = vpop.f32.mrb[0].mxu0
      %2243 = vmatprep.mubr.f32.mxu0 %v2119
      %2244 = vmatmul.mubr.f32.gmra.mrb[0].mxu0 %v2050
      %v2245 = vpop.f32.mrb[0].mxu0
      %v2246 = vadd.f32 0.0, %v2245
      %v2247 = vpop.f32.mrb[0].mxu0
      %2248 = vmatprep.mubr.f32.mxu0 %v2121
      %2249 = vmatmul.mubr.f32.gmra.mrb[0].mxu0 %v2054
      %v2250 = vpop.f32.mrb[0].mxu0
      %v2251 = vadd.f32 0.0, %v2250
      %v2252 = vpop.f32.mrb[0].mxu0
      %2253 = vmatprep.mubr.f32.mxu0 %v2123
      %2254 = vmatmul.mubr.f32.gmra.mrb[0].mxu0 %v2058
      %v2255 = vpop.f32.mrb[0].mxu0
      %v2256 = vadd.f32 0.0, %v2255
      %v2257 = vpop.f32.mrb[0].mxu0
      %2258 = vmatprep.mubr.f32.mxu0 %v2125
      %2259 = vmatmul.mubr.f32.gmra.mrb[0].mxu0 %v2062
      %v2260 = vpop.f32.mrb[0].mxu0
      %v2261 = vadd.f32 0.0, %v2260
      %v2262 = vpop.f32.mrb[0].mxu0
      %2263 = vmatprep.mubr.f32.mxu0 %v2127
      %2264 = vmatmul.mubr.f32.gmra.mrb[0].mxu0 %v2066
      %v2265 = vpop.f32.mrb[0].mxu0
      %v2266 = vadd.f32 0.0, %v2265
      %v2267 = vpop.f32.mrb[0].mxu0
      %2268 = vmatprep.mubr.f32.mxu0 %v2129
      %2269 = vmatmul.mubr.f32.gmra.mrb[0].mxu0 %v2070
      %v2270 = vpop.f32.mrb[0].mxu0
      %v2271 = vadd.f32 0.0, %v2270
      %v2272 = vpop.f32.mrb[0].mxu0
      %2273 = vmatprep.mubr.f32.mxu0 %v2131
      %2274 = vmatmul.mubr.f32.gmra.mrb[0].mxu0 %v2074
      %v2275 = vpop.f32.mrb[0].mxu0
      %v2276 = vadd.f32 0.0, %v2275
      %v2277 = vpop.f32.mrb[0].mxu0
      %2278 = vmatprep.mubr.f32.mxu0 %v2133
      %2279 = vmatmul.mubr.f32.gmra.mrb[0].mxu0 %v2078
      %v2280 = vpop.f32.mrb[0].mxu0
      %v2281 = vadd.f32 0.0, %v2280
      %v2282 = vpop.f32.mrb[0].mxu0
      %2283 = vmatprep.mubr.f32.mxu0 %v2135
      %2284 = vmatmul.mubr.f32.gmra.mrb[0].mxu0 %v2082
      %v2285 = vpop.f32.mrb[0].mxu0
      %v2286 = vadd.f32 0.0, %v2285
      %v2287 = vpop.f32.mrb[0].mxu0
      %2288 = vmatprep.mubr.f32.mxu0 %v2137
      %2289 = vmatmul.mubr.f32.gmra.mrb[0].mxu0 %v2081
      %v2290 = vpop.f32.mrb[0].mxu0
      %v2291 = vadd.f32 0.0, %v2290
      %v2292 = vpop.f32.mrb[0].mxu0
      %2293 = vdwg.mxu0
      %v2294 = vadd.f32 %v1900, %v2206
      %v2295 = vadd.f32 %v1905, %v2211
      %v2296 = vadd.f32 %v1910, %v2216
      %v2297 = vadd.f32 %v1915, %v2221
      %v2298 = vadd.f32 %v1920, %v2226
      %v2299 = vadd.f32 %v1925, %v2231
      %v2300 = vadd.f32 %v1930, %v2236
      %v2301 = vadd.f32 %v1935, %v2241
      %v2302 = vadd.f32 %v1940, %v2246
      %v2303 = vadd.f32 %v1945, %v2251
      %v2304 = vadd.f32 %v1950, %v2256
      %v2305 = vadd.f32 %v1955, %v2261
      %v2306 = vadd.f32 %v1960, %v2266
      %v2307 = vadd.f32 %v1965, %v2271
      %v2308 = vadd.f32 %v1970, %v2276
      %v2309 = vadd.f32 %v1975, %v2281
      %v2310 = vadd.f32 %v1980, %v2286
      %v2311 = vadd.f32 %v1985, %v2291
      %vm2312 = vcmp.ge.f32.partialorder %v2294, 0.0
      %vm2313 = vcmp.ge.f32.partialorder %v2295, 0.0
      %vm2314 = vcmp.ge.f32.partialorder %v2296, 0.0
      %vm2315 = vcmp.ge.f32.partialorder %v2297, 0.0
      %vm2316 = vcmp.ge.f32.partialorder %v2298, 0.0
      %vm2317 = vcmp.ge.f32.partialorder %v2299, 0.0
      %vm2318 = vcmp.ge.f32.partialorder %v2300, 0.0
      %vm2319 = vcmp.ge.f32.partialorder %v2301, 0.0
      %vm2320 = vcmp.ge.f32.partialorder %v2302, 0.0
      %vm2321 = vcmp.ge.f32.partialorder %v2303, 0.0
      %vm2322 = vcmp.ge.f32.partialorder %v2304, 0.0
      %vm2323 = vcmp.ge.f32.partialorder %v2305, 0.0
      %vm2324 = vcmp.ge.f32.partialorder %v2306, 0.0
      %vm2325 = vcmp.ge.f32.partialorder %v2307, 0.0
      %vm2326 = vcmp.ge.f32.partialorder %v2308, 0.0
      %vm2327 = vcmp.ge.f32.partialorder %v2309, 0.0
      %vm2328 = vcmp.ge.f32.partialorder %v2310, 0.0
      %vm2329 = vcmp.ge.f32.partialorder %v2311, 0.0
      %v2330 = vmul.f32 %v2294, 0.3
      %v2331 = vmul.f32 %v2295, 0.3
      %v2332 = vmul.f32 %v2296, 0.3
      %v2333 = vmul.f32 %v2297, 0.3
      %v2334 = vmul.f32 %v2298, 0.3
      %v2335 = vmul.f32 %v2299, 0.3
      %v2336 = vmul.f32 %v2300, 0.3
      %v2337 = vmul.f32 %v2301, 0.3
      %v2338 = vmul.f32 %v2302, 0.3
      %v2339 = vmul.f32 %v2303, 0.3
      %v2340 = vmul.f32 %v2304, 0.3
      %v2341 = vmul.f32 %v2305, 0.3
      %v2342 = vmul.f32 %v2306, 0.3
      %v2343 = vmul.f32 %v2307, 0.3
      %v2344 = vmul.f32 %v2308, 0.3
      %v2345 = vmul.f32 %v2309, 0.3
      %v2346 = vmul.f32 %v2310, 0.3
      %v2347 = vmul.f32 %v2311, 0.3
      %v2348 = vsel %vm2312, %v2294, %v2330
      %v2349 = vsel %vm2313, %v2295, %v2331
      %v2350 = vsel %vm2314, %v2296, %v2332
      %v2351 = vsel %vm2315, %v2297, %v2333
      %v2352 = vsel %vm2316, %v2298, %v2334
      %v2353 = vsel %vm2317, %v2299, %v2335
      %v2354 = vsel %vm2318, %v2300, %v2336
      %v2355 = vsel %vm2319, %v2301, %v2337
      %v2356 = vsel %vm2320, %v2302, %v2338
      %v2357 = vsel %vm2321, %v2303, %v2339
      %v2358 = vsel %vm2322, %v2304, %v2340
      %v2359 = vsel %vm2323, %v2305, %v2341
      %v2360 = vsel %vm2324, %v2306, %v2342
      %v2361 = vsel %vm2325, %v2307, %v2343
      %v2362 = vsel %vm2326, %v2308, %v2344
      %v2363 = vsel %vm2327, %v2309, %v2345
      %v2364 = vsel %vm2328, %v2310, %v2346
      %v2365 = vsel %vm2329, %v2311, %v2347
      %v2368 = vrot.slane %v2348, 7
      %v2369 = vrot.slane %v2349, 7
      %v2370 = vsel %vm229, %v2368, %v2369
      %2374 = vst [vmem:[#allocation2] sm:$0xfe] %v2368
      %2375 = vst [vmem:[#allocation2 + $0x10] sm:$0xff] %v2370
      %2376 = vst [vmem:[#allocation2 + $0x20] sm:$0x1] %v2369
      %v2380 = vrot.slane %v2350, 7
      %v2381 = vrot.slane %v2351, 7
      %v2382 = vsel %vm229, %v2380, %v2381
      %v2383 = vrot.slane %v2352, 7
      %v2384 = vsel %vm229, %v2381, %v2383
      %2388 = vst [vmem:[#allocation2 + $0x20] sm:$0xf8] %v2380
      %2389 = vst [vmem:[#allocation2 + $0x30] sm:$0xff] %v2382
      %2390 = vst [vmem:[#allocation2 + $0x40] sm:$0x7] %v2384
      %v2393 = vrot.slane %v2353, 7
      %v2394 = vsel %vm229, %v2383, %v2393
      %v2395 = vrot.slane %v2354, 7
      %v2396 = vsel %vm229, %v2393, %v2395
      %2400 = vst [vmem:[#allocation2 + $0x40] sm:$0xe0] %v2383
      %2401 = vst [vmem:[#allocation2 + $0x50] sm:$0xff] %v2394
      %2402 = vst [vmem:[#allocation2 + $0x60] sm:$0x1f] %v2396
      %v2405 = vrot.slane %v2355, 7
      %v2406 = vsel %vm229, %v2395, %v2405
      %v2407 = vrot.slane %v2356, 7
      %v2408 = vsel %vm229, %v2405, %v2407
      %2412 = vst [vmem:[#allocation2 + $0x60] sm:$0x80] %v2395
      %2413 = vst [vmem:[#allocation2 + $0x70] sm:$0xff] %v2406
      %2414 = vst [vmem:[#allocation2 + $0x80] sm:$0x7f] %v2408
      %v2417 = vrot.slane %v2357, 7
      %v2418 = vrot.slane %v2358, 7
      %v2419 = vsel %vm229, %v2417, %v2418
      %2423 = vst [vmem:[#allocation2 + $0x90] sm:$0xfe] %v2417
      %2424 = vst [vmem:[#allocation2 + $0xa0] sm:$0xff] %v2419
      %2425 = vst [vmem:[#allocation2 + $0xb0] sm:$0x1] %v2418
      %v2429 = vrot.slane %v2359, 7
      %v2430 = vrot.slane %v2360, 7
      %v2431 = vsel %vm229, %v2429, %v2430
      %v2432 = vrot.slane %v2361, 7
      %v2433 = vsel %vm229, %v2430, %v2432
      %2437 = vst [vmem:[#allocation2 + $0xb0] sm:$0xf8] %v2429
      %2438 = vst [vmem:[#allocation2 + $0xc0] sm:$0xff] %v2431
      %2439 = vst [vmem:[#allocation2 + $0xd0] sm:$0x7] %v2433
      %v2442 = vrot.slane %v2362, 7
      %v2443 = vsel %vm229, %v2432, %v2442
      %v2444 = vrot.slane %v2363, 7
      %v2445 = vsel %vm229, %v2442, %v2444
      %2449 = vst [vmem:[#allocation2 + $0xd0] sm:$0xe0] %v2432
      %2450 = vst [vmem:[#allocation2 + $0xe0] sm:$0xff] %v2443
      %2451 = vst [vmem:[#allocation2 + $0xf0] sm:$0x1f] %v2445
      %v2454 = vrot.slane %v2364, 7
      %v2455 = vsel %vm229, %v2444, %v2454
      %v2456 = vrot.slane %v2365, 7
      %v2457 = vsel %vm229, %v2454, %v2456
      %2461 = vst [vmem:[#allocation2 + $0xf0] sm:$0x80] %v2444
      %2462 = vst [vmem:[#allocation2 + $0x100] sm:$0xff] %v2455
      %2463 = vst [vmem:[#allocation2 + $0x110] sm:$0x7f] %v2457
      %v2464 = vld [vmem:[#allocation2] sm:$0xff]
      %v2465 = vld [vmem:[#allocation2 + $0x8] sm:$0xff]
      %v2466 = vld [vmem:[#allocation2 + $0x10] sm:$0xff]
      %v2467 = vld [vmem:[#allocation2 + $0x18] sm:$0xff]
      %v2468 = vld [vmem:[#allocation2 + $0x20] sm:$0xff]
      %v2469 = vld [vmem:[#allocation2 + $0x28] sm:$0xff]
      %v2470 = vld [vmem:[#allocation2 + $0x30] sm:$0xff]
      %v2471 = vld [vmem:[#allocation2 + $0x38] sm:$0xff]
      %v2472 = vld [vmem:[#allocation2 + $0x40] sm:$0xff]
      %v2473 = vld [vmem:[#allocation2 + $0x48] sm:$0xff]
      %v2474 = vld [vmem:[#allocation2 + $0x50] sm:$0xff]
      %v2475 = vld [vmem:[#allocation2 + $0x58] sm:$0xff]
      %v2476 = vld [vmem:[#allocation2 + $0x60] sm:$0xff]
      %v2477 = vld [vmem:[#allocation2 + $0x68] sm:$0xff]
      %v2478 = vld [vmem:[#allocation2 + $0x70] sm:$0xff]
      %v2479 = vld [vmem:[#allocation2 + $0x78] sm:$0xff]
      %v2480 = vld [vmem:[#allocation2 + $0x80] sm:$0xff]
      %v2481 = vld [vmem:[#allocation2 + $0x88] sm:$0xff]
      %v2482 = vld [vmem:[#allocation2 + $0x90] sm:$0xff]
      %v2483 = vld [vmem:[#allocation2 + $0x98] sm:$0xff]
      %v2484 = vld [vmem:[#allocation2 + $0xa0] sm:$0xff]
      %v2485 = vld [vmem:[#allocation2 + $0xa8] sm:$0xff]
      %v2486 = vld [vmem:[#allocation2 + $0xb0] sm:$0xff]
      %v2487 = vld [vmem:[#allocation2 + $0xb8] sm:$0xff]
      %v2488 = vld [vmem:[#allocation2 + $0xc0] sm:$0xff]
      %v2489 = vld [vmem:[#allocation2 + $0xc8] sm:$0xff]
      %v2490 = vld [vmem:[#allocation2 + $0xd0] sm:$0xff]
      %v2491 = vld [vmem:[#allocation2 + $0xd8] sm:$0xff]
      %v2492 = vld [vmem:[#allocation2 + $0xe0] sm:$0xff]
      %v2493 = vld [vmem:[#allocation2 + $0xe8] sm:$0xff]
      %v2494 = vld [vmem:[#allocation2 + $0xf0] sm:$0xff]
      %v2495 = vld [vmem:[#allocation2 + $0xf8] sm:$0xff]
      %v2496 = vld [vmem:[#allocation2 + $0x100] sm:$0xff]
      %v2497 = vld [vmem:[#allocation2 + $0x108] sm:$0xff]
      %v2498 = vld [vmem:[#allocation2 + $0x110] sm:$0x3f]
      %v2499 = vld [vmem:[#allocation2 + $0x118] sm:$0x3f]
      %s2500 = scalar_lea.vmem %s1, 864
      %v2501 = vld [vmem:[%s2500] sm:$0xff]
      %v2502 = vld [vmem:[%s2500 + $0x8] sm:$0xff]
      %v2503 = vld [vmem:[%s2500 + $0x10] sm:$0xff]
      %v2504 = vld [vmem:[%s2500 + $0x18] sm:$0xff]
      %v2505 = vld [vmem:[%s2500 + $0x20] sm:$0xff]
      %v2506 = vld [vmem:[%s2500 + $0x28] sm:$0xff]
      %v2507 = vld [vmem:[%s2500 + $0x30] sm:$0xff]
      %v2508 = vld [vmem:[%s2500 + $0x38] sm:$0xff]
      %v2509 = vld [vmem:[%s2500 + $0x40] sm:$0xff]
      %v2510 = vld [vmem:[%s2500 + $0x48] sm:$0xff]
      %v2511 = vld [vmem:[%s2500 + $0x50] sm:$0xff]
      %v2512 = vld [vmem:[%s2500 + $0x58] sm:$0xff]
      %v2513 = vld [vmem:[%s2500 + $0x60] sm:$0xff]
      %v2514 = vld [vmem:[%s2500 + $0x68] sm:$0xff]
      %v2515 = vld [vmem:[%s2500 + $0x70] sm:$0xff]
      %v2516 = vld [vmem:[%s2500 + $0x78] sm:$0xff]
      %v2517 = vld [vmem:[%s2500 + $0x80] sm:$0xff]
      %v2518 = vld [vmem:[%s2500 + $0x88] sm:$0xff]
      %v2519 = vld [vmem:[#allocation2] sm:$0xfe]
      %v2520 = vld [vmem:[#allocation2 + $0x8] sm:$0xfe]
      %v2521 = vld [vmem:[#allocation2 + $0x110] sm:$0x7f]
      %v2522 = vld [vmem:[#allocation2 + $0x118] sm:$0x7f]
      %s2523 = scalar_lea.vmem %s1, 1008
      %v2524 = vld [vmem:[%s2523] sm:$0xff]
      %v2525 = vld [vmem:[%s2523 + $0x8] sm:$0xff]
      %v2526 = vld [vmem:[%s2523 + $0x10] sm:$0xff]
      %v2527 = vld [vmem:[%s2523 + $0x18] sm:$0xff]
      %v2528 = vld [vmem:[%s2523 + $0x20] sm:$0xff]
      %v2529 = vld [vmem:[%s2523 + $0x28] sm:$0xff]
      %v2530 = vld [vmem:[%s2523 + $0x30] sm:$0xff]
      %v2531 = vld [vmem:[%s2523 + $0x38] sm:$0xff]
      %v2532 = vld [vmem:[%s2523 + $0x40] sm:$0xff]
      %v2533 = vld [vmem:[%s2523 + $0x48] sm:$0xff]
      %v2534 = vld [vmem:[%s2523 + $0x50] sm:$0xff]
      %v2535 = vld [vmem:[%s2523 + $0x58] sm:$0xff]
      %v2536 = vld [vmem:[%s2523 + $0x60] sm:$0xff]
      %v2537 = vld [vmem:[%s2523 + $0x68] sm:$0xff]
      %v2538 = vld [vmem:[%s2523 + $0x70] sm:$0xff]
      %v2539 = vld [vmem:[%s2523 + $0x78] sm:$0xff]
      %v2540 = vld [vmem:[%s2523 + $0x80] sm:$0xff]
      %v2541 = vld [vmem:[%s2523 + $0x88] sm:$0xff]
      %v2578 = vrot.slane %v2519, 1
      %v2579 = vrot.slane %v2466, 1
      %v2580 = vsel %vm274, %v2578, %v2579
      %v2581 = vrot.slane %v2520, 1
      %v2582 = vrot.slane %v2467, 1
      %v2583 = vsel %vm274, %v2581, %v2582
      %v2584 = vrot.slane %v2468, 1
      %v2585 = vsel %vm274, %v2579, %v2584
      %v2586 = vrot.slane %v2469, 1
      %v2587 = vsel %vm274, %v2582, %v2586
      %v2588 = vrot.slane %v2470, 1
      %v2589 = vsel %vm274, %v2584, %v2588
      %v2590 = vrot.slane %v2471, 1
      %v2591 = vsel %vm274, %v2586, %v2590
      %v2592 = vrot.slane %v2472, 1
      %v2593 = vsel %vm274, %v2588, %v2592
      %v2594 = vrot.slane %v2473, 1
      %v2595 = vsel %vm274, %v2590, %v2594
      %v2596 = vrot.slane %v2474, 1
      %v2597 = vsel %vm274, %v2592, %v2596
      %v2598 = vrot.slane %v2475, 1
      %v2599 = vsel %vm274, %v2594, %v2598
      %v2600 = vrot.slane %v2476, 1
      %v2601 = vsel %vm274, %v2596, %v2600
      %v2602 = vrot.slane %v2477, 1
      %v2603 = vsel %vm274, %v2598, %v2602
      %v2604 = vrot.slane %v2478, 1
      %v2605 = vsel %vm274, %v2600, %v2604
      %v2606 = vrot.slane %v2479, 1
      %v2607 = vsel %vm274, %v2602, %v2606
      %v2608 = vrot.slane %v2480, 1
      %v2609 = vsel %vm274, %v2604, %v2608
      %v2610 = vrot.slane %v2481, 1
      %v2611 = vsel %vm274, %v2606, %v2610
      %v2612 = vrot.slane %v2482, 1
      %v2613 = vsel %vm274, %v2608, %v2612
      %v2614 = vrot.slane %v2483, 1
      %v2615 = vsel %vm274, %v2610, %v2614
      %v2616 = vrot.slane %v2484, 1
      %v2617 = vsel %vm274, %v2612, %v2616
      %v2618 = vrot.slane %v2485, 1
      %v2619 = vsel %vm274, %v2614, %v2618
      %v2620 = vrot.slane %v2486, 1
      %v2621 = vsel %vm274, %v2616, %v2620
      %v2622 = vrot.slane %v2487, 1
      %v2623 = vsel %vm274, %v2618, %v2622
      %v2624 = vrot.slane %v2488, 1
      %v2625 = vsel %vm274, %v2620, %v2624
      %v2626 = vrot.slane %v2489, 1
      %v2627 = vsel %vm274, %v2622, %v2626
      %v2628 = vrot.slane %v2490, 1
      %v2629 = vsel %vm274, %v2624, %v2628
      %v2630 = vrot.slane %v2491, 1
      %v2631 = vsel %vm274, %v2626, %v2630
      %v2632 = vrot.slane %v2492, 1
      %v2633 = vsel %vm274, %v2628, %v2632
      %v2634 = vrot.slane %v2493, 1
      %v2635 = vsel %vm274, %v2630, %v2634
      %v2636 = vrot.slane %v2494, 1
      %v2637 = vsel %vm274, %v2632, %v2636
      %v2638 = vrot.slane %v2495, 1
      %v2639 = vsel %vm274, %v2634, %v2638
      %v2640 = vrot.slane %v2496, 1
      %v2641 = vsel %vm274, %v2636, %v2640
      %v2642 = vrot.slane %v2497, 1
      %v2643 = vsel %vm274, %v2638, %v2642
      %v2644 = vrot.slane %v2521, 1
      %v2645 = vsel %vm274, %v2640, %v2644
      %v2646 = vrot.slane %v2522, 1
      %v2647 = vsel %vm274, %v2642, %v2646
      %v2666 = vsel %vm190, %v2583, 0
      %v2668 = vsel %vm190, %v2587, 0
      %v2670 = vsel %vm190, %v2591, 0
      %v2672 = vsel %vm190, %v2595, 0
      %v2674 = vsel %vm190, %v2599, 0
      %v2676 = vsel %vm190, %v2603, 0
      %v2678 = vsel %vm190, %v2607, 0
      %v2680 = vsel %vm190, %v2611, 0
      %v2682 = vsel %vm190, %v2615, 0
      %v2684 = vsel %vm190, %v2619, 0
      %v2686 = vsel %vm190, %v2623, 0
      %v2688 = vsel %vm190, %v2627, 0
      %v2690 = vsel %vm190, %v2631, 0
      %v2692 = vsel %vm190, %v2635, 0
      %v2694 = vsel %vm190, %v2639, 0
      %v2696 = vsel %vm190, %v2643, 0
      %v2698 = vsel %vm190, %v2647, 0
      %v2700 = vsel %vm190, %v2646, 0
      %2702 = vmatprep.subr.mxu0 0.0
      %2703 = vmatpush1.msra.mxu0 %v2524
      %2704 = vmatprep.subr.mxu0 0.0
      %2705 = vmatpush1.msra.mxu0 %v2525
      %2706 = vmatprep.subr.mxu0 0.0
      %2707 = vmatpush1.msra.mxu0 %v2526
      %2708 = vmatprep.subr.mxu0 0.0
      %2709 = vmatpush1.msra.mxu0 %v2527
      %2710 = vmatprep.subr.mxu0 0.0
      %2711 = vmatpush1.msra.mxu0 %v2528
      %2712 = vmatprep.subr.mxu0 0.0
      %2713 = vmatpush1.msra.mxu0 %v2529
      %2714 = vmatprep.subr.mxu0 0.0
      %2715 = vmatpush1.msra.mxu0 %v2530
      %2716 = vmatprep.subr.mxu0 0.0
      %2717 = vmatpush1.msra.mxu0 %v2531
      %2718 = vmatprep.subr.mxu0 0.0
      %2719 = vmatpush1.msra.mxu0 %v2532
      %2720 = vmatprep.subr.mxu0 0.0
      %2721 = vmatpush1.msra.mxu0 %v2533
      %2722 = vmatprep.subr.mxu0 0.0
      %2723 = vmatpush1.msra.mxu0 %v2534
      %2724 = vmatprep.subr.mxu0 0.0
      %2725 = vmatpush1.msra.mxu0 %v2535
      %2726 = vmatprep.subr.mxu0 0.0
      %2727 = vmatpush1.msra.mxu0 %v2536
      %2728 = vmatprep.subr.mxu0 0.0
      %2729 = vmatpush1.msra.mxu0 %v2537
      %2730 = vmatprep.subr.mxu0 0.0
      %2731 = vmatpush1.msra.mxu0 %v2538
      %2732 = vmatprep.subr.mxu0 0.0
      %2733 = vmatpush1.msra.mxu0 %v2539
      %2734 = vmatprep.subr.mxu0 0.0
      %2735 = vmatpush1.msra.mxu0 %v2540
      %2736 = vmatprep.subr.mxu0 0.0
      %2737 = vmatpush1.msra.mxu0 %v2541
      %2738 = vmatprep.subr.mxu0 0.0
      %2739 = vmatpush1.msra.mxu0 0.0
      %2740 = vmatprep.subr.mxu0 0.0
      %2741 = vmatpush1.msra.mxu0 0.0
      %2742 = vmatprep.subr.mxu0 0.0
      %2743 = vmatpush1.msra.mxu0 0.0
      %2744 = vmatprep.subr.mxu0 0.0
      %2745 = vmatpush1.msra.mxu0 0.0
      %2746 = vmatprep.subr.mxu0 0.0
      %2747 = vmatpush1.msra.mxu0 0.0
      %2748 = vmatprep.subr.mxu0 0.0
      %2749 = vmatpush1.msra.mxu0 0.0
      %2750 = vmatprep.subr.mxu0 0.0
      %2751 = vmatpush1.msra.mxu0 0.0
      %2752 = vmatprep.subr.mxu0 0.0
      %2753 = vmatpush1.msra.mxu0 0.0
      %2754 = vmatprep.subr.mxu0 0.0
      %2755 = vmatpush1.msra.mxu0 0.0
      %2756 = vmatprep.subr.mxu0 0.0
      %2757 = vmatpush1.msra.mxu0 0.0
      %2758 = vmatprep.subr.mxu0 0.0
      %2759 = vmatpush1.msra.mxu0 0.0
      %2760 = vmatprep.subr.mxu0 0.0
      %2761 = vmatpush1.msra.mxu0 0.0
      %2762 = vmatprep.subr.mxu0 0.0
      %2763 = vmatpush1.msra.mxu0 0.0
      %2764 = vmatprep.subr.mxu0 0.0
      %2765 = vmatpush1.msra.mxu0 0.0
      %2766 = vmatprep.mubr.f32.mxu0 %v2666
      %2767 = vmatmul.mubr.f32.gmra.mrb[0].mxu0 %v2580
      %v2768 = vpop.f32.mrb[0].mxu0
      %v2769 = vadd.f32 0.0, %v2768
      %v2770 = vpop.f32.mrb[0].mxu0
      %2771 = vmatprep.mubr.f32.mxu0 %v2668
      %2772 = vmatmul.mubr.f32.gmra.mrb[0].mxu0 %v2585
      %v2773 = vpop.f32.mrb[0].mxu0
      %v2774 = vadd.f32 0.0, %v2773
      %v2775 = vpop.f32.mrb[0].mxu0
      %2776 = vmatprep.mubr.f32.mxu0 %v2670
      %2777 = vmatmul.mubr.f32.gmra.mrb[0].mxu0 %v2589
      %v2778 = vpop.f32.mrb[0].mxu0
      %v2779 = vadd.f32 0.0, %v2778
      %v2780 = vpop.f32.mrb[0].mxu0
      %2781 = vmatprep.mubr.f32.mxu0 %v2672
      %2782 = vmatmul.mubr.f32.gmra.mrb[0].mxu0 %v2593
      %v2783 = vpop.f32.mrb[0].mxu0
      %v2784 = vadd.f32 0.0, %v2783
      %v2785 = vpop.f32.mrb[0].mxu0
      %2786 = vmatprep.mubr.f32.mxu0 %v2674
      %2787 = vmatmul.mubr.f32.gmra.mrb[0].mxu0 %v2597
      %v2788 = vpop.f32.mrb[0].mxu0
      %v2789 = vadd.f32 0.0, %v2788
      %v2790 = vpop.f32.mrb[0].mxu0
      %2791 = vmatprep.mubr.f32.mxu0 %v2676
      %2792 = vmatmul.mubr.f32.gmra.mrb[0].mxu0 %v2601
      %v2793 = vpop.f32.mrb[0].mxu0
      %v2794 = vadd.f32 0.0, %v2793
      %v2795 = vpop.f32.mrb[0].mxu0
      %2796 = vmatprep.mubr.f32.mxu0 %v2678
      %2797 = vmatmul.mubr.f32.gmra.mrb[0].mxu0 %v2605
      %v2798 = vpop.f32.mrb[0].mxu0
      %v2799 = vadd.f32 0.0, %v2798
      %v2800 = vpop.f32.mrb[0].mxu0
      %2801 = vmatprep.mubr.f32.mxu0 %v2680
      %2802 = vmatmul.mubr.f32.gmra.mrb[0].mxu0 %v2609
      %v2803 = vpop.f32.mrb[0].mxu0
      %v2804 = vadd.f32 0.0, %v2803
      %v2805 = vpop.f32.mrb[0].mxu0
      %2806 = vmatprep.mubr.f32.mxu0 %v2682
      %2807 = vmatmul.mubr.f32.gmra.mrb[0].mxu0 %v2613
      %v2808 = vpop.f32.mrb[0].mxu0
      %v2809 = vadd.f32 0.0, %v2808
      %v2810 = vpop.f32.mrb[0].mxu0
      %2811 = vmatprep.mubr.f32.mxu0 %v2684
      %2812 = vmatmul.mubr.f32.gmra.mrb[0].mxu0 %v2617
      %v2813 = vpop.f32.mrb[0].mxu0
      %v2814 = vadd.f32 0.0, %v2813
      %v2815 = vpop.f32.mrb[0].mxu0
      %2816 = vmatprep.mubr.f32.mxu0 %v2686
      %2817 = vmatmul.mubr.f32.gmra.mrb[0].mxu0 %v2621
      %v2818 = vpop.f32.mrb[0].mxu0
      %v2819 = vadd.f32 0.0, %v2818
      %v2820 = vpop.f32.mrb[0].mxu0
      %2821 = vmatprep.mubr.f32.mxu0 %v2688
      %2822 = vmatmul.mubr.f32.gmra.mrb[0].mxu0 %v2625
      %v2823 = vpop.f32.mrb[0].mxu0
      %v2824 = vadd.f32 0.0, %v2823
      %v2825 = vpop.f32.mrb[0].mxu0
      %2826 = vmatprep.mubr.f32.mxu0 %v2690
      %2827 = vmatmul.mubr.f32.gmra.mrb[0].mxu0 %v2629
      %v2828 = vpop.f32.mrb[0].mxu0
      %v2829 = vadd.f32 0.0, %v2828
      %v2830 = vpop.f32.mrb[0].mxu0
      %2831 = vmatprep.mubr.f32.mxu0 %v2692
      %2832 = vmatmul.mubr.f32.gmra.mrb[0].mxu0 %v2633
      %v2833 = vpop.f32.mrb[0].mxu0
      %v2834 = vadd.f32 0.0, %v2833
      %v2835 = vpop.f32.mrb[0].mxu0
      %2836 = vmatprep.mubr.f32.mxu0 %v2694
      %2837 = vmatmul.mubr.f32.gmra.mrb[0].mxu0 %v2637
      %v2838 = vpop.f32.mrb[0].mxu0
      %v2839 = vadd.f32 0.0, %v2838
      %v2840 = vpop.f32.mrb[0].mxu0
      %2841 = vmatprep.mubr.f32.mxu0 %v2696
      %2842 = vmatmul.mubr.f32.gmra.mrb[0].mxu0 %v2641
      %v2843 = vpop.f32.mrb[0].mxu0
      %v2844 = vadd.f32 0.0, %v2843
      %v2845 = vpop.f32.mrb[0].mxu0
      %2846 = vmatprep.mubr.f32.mxu0 %v2698
      %2847 = vmatmul.mubr.f32.gmra.mrb[0].mxu0 %v2645
      %v2848 = vpop.f32.mrb[0].mxu0
      %v2849 = vadd.f32 0.0, %v2848
      %v2850 = vpop.f32.mrb[0].mxu0
      %2851 = vmatprep.mubr.f32.mxu0 %v2700
      %2852 = vmatmul.mubr.f32.gmra.mrb[0].mxu0 %v2644
      %v2853 = vpop.f32.mrb[0].mxu0
      %v2854 = vadd.f32 0.0, %v2853
      %v2855 = vpop.f32.mrb[0].mxu0
      %2856 = vdwg.mxu0
      %v2858 = vsel %vm190, %v2465, 0
      %v2860 = vsel %vm190, %v2467, 0
      %v2862 = vsel %vm190, %v2469, 0
      %v2864 = vsel %vm190, %v2471, 0
      %v2866 = vsel %vm190, %v2473, 0
      %v2868 = vsel %vm190, %v2475, 0
      %v2870 = vsel %vm190, %v2477, 0
      %v2872 = vsel %vm190, %v2479, 0
      %v2874 = vsel %vm190, %v2481, 0
      %v2876 = vsel %vm190, %v2483, 0
      %v2878 = vsel %vm190, %v2485, 0
      %v2880 = vsel %vm190, %v2487, 0
      %v2882 = vsel %vm190, %v2489, 0
      %v2884 = vsel %vm190, %v2491, 0
      %v2886 = vsel %vm190, %v2493, 0
      %v2888 = vsel %vm190, %v2495, 0
      %v2890 = vsel %vm190, %v2497, 0
      %v2893 = vsel %vm190, %v2499, 0
      %2895 = vmatprep.subr.mxu0 0.0
      %2896 = vmatpush1.msra.mxu0 %v2501
      %2897 = vmatprep.subr.mxu0 0.0
      %2898 = vmatpush1.msra.mxu0 %v2502
      %2899 = vmatprep.subr.mxu0 0.0
      %2900 = vmatpush1.msra.mxu0 %v2503
      %2901 = vmatprep.subr.mxu0 0.0
      %2902 = vmatpush1.msra.mxu0 %v2504
      %2903 = vmatprep.subr.mxu0 0.0
      %2904 = vmatpush1.msra.mxu0 %v2505
      %2905 = vmatprep.subr.mxu0 0.0
      %2906 = vmatpush1.msra.mxu0 %v2506
      %2907 = vmatprep.subr.mxu0 0.0
      %2908 = vmatpush1.msra.mxu0 %v2507
      %2909 = vmatprep.subr.mxu0 0.0
      %2910 = vmatpush1.msra.mxu0 %v2508
      %2911 = vmatprep.subr.mxu0 0.0
      %2912 = vmatpush1.msra.mxu0 %v2509
      %2913 = vmatprep.subr.mxu0 0.0
      %2914 = vmatpush1.msra.mxu0 %v2510
      %2915 = vmatprep.subr.mxu0 0.0
      %2916 = vmatpush1.msra.mxu0 %v2511
      %2917 = vmatprep.subr.mxu0 0.0
      %2918 = vmatpush1.msra.mxu0 %v2512
      %2919 = vmatprep.subr.mxu0 0.0
      %2920 = vmatpush1.msra.mxu0 %v2513
      %2921 = vmatprep.subr.mxu0 0.0
      %2922 = vmatpush1.msra.mxu0 %v2514
      %2923 = vmatprep.subr.mxu0 0.0
      %2924 = vmatpush1.msra.mxu0 %v2515
      %2925 = vmatprep.subr.mxu0 0.0
      %2926 = vmatpush1.msra.mxu0 %v2516
      %2927 = vmatprep.subr.mxu0 0.0
      %2928 = vmatpush1.msra.mxu0 %v2517
      %2929 = vmatprep.subr.mxu0 0.0
      %2930 = vmatpush1.msra.mxu0 %v2518
      %2931 = vmatprep.subr.mxu0 0.0
      %2932 = vmatpush1.msra.mxu0 0.0
      %2933 = vmatprep.subr.mxu0 0.0
      %2934 = vmatpush1.msra.mxu0 0.0
      %2935 = vmatprep.subr.mxu0 0.0
      %2936 = vmatpush1.msra.mxu0 0.0
      %2937 = vmatprep.subr.mxu0 0.0
      %2938 = vmatpush1.msra.mxu0 0.0
      %2939 = vmatprep.subr.mxu0 0.0
      %2940 = vmatpush1.msra.mxu0 0.0
      %2941 = vmatprep.subr.mxu0 0.0
      %2942 = vmatpush1.msra.mxu0 0.0
      %2943 = vmatprep.subr.mxu0 0.0
      %2944 = vmatpush1.msra.mxu0 0.0
      %2945 = vmatprep.subr.mxu0 0.0
      %2946 = vmatpush1.msra.mxu0 0.0
      %2947 = vmatprep.subr.mxu0 0.0
      %2948 = vmatpush1.msra.mxu0 0.0
      %2949 = vmatprep.subr.mxu0 0.0
      %2950 = vmatpush1.msra.mxu0 0.0
      %2951 = vmatprep.subr.mxu0 0.0
      %2952 = vmatpush1.msra.mxu0 0.0
      %2953 = vmatprep.subr.mxu0 0.0
      %2954 = vmatpush1.msra.mxu0 0.0
      %2955 = vmatprep.subr.mxu0 0.0
      %2956 = vmatpush1.msra.mxu0 0.0
      %2957 = vmatprep.subr.mxu0 0.0
      %2958 = vmatpush1.msra.mxu0 0.0
      %2959 = vmatprep.mubr.f32.mxu0 %v2858
      %2960 = vmatmul.mubr.f32.gmra.mrb[0].mxu0 %v2464
      %v2961 = vpop.f32.mrb[0].mxu0
      %v2962 = vadd.f32 %v2769, %v2961
      %v2963 = vpop.f32.mrb[0].mxu0
      %2964 = vmatprep.mubr.f32.mxu0 %v2860
      %2965 = vmatmul.mubr.f32.gmra.mrb[0].mxu0 %v2466
      %v2966 = vpop.f32.mrb[0].mxu0
      %v2967 = vadd.f32 %v2774, %v2966
      %v2968 = vpop.f32.mrb[0].mxu0
      %2969 = vmatprep.mubr.f32.mxu0 %v2862
      %2970 = vmatmul.mubr.f32.gmra.mrb[0].mxu0 %v2468
      %v2971 = vpop.f32.mrb[0].mxu0
      %v2972 = vadd.f32 %v2779, %v2971
      %v2973 = vpop.f32.mrb[0].mxu0
      %2974 = vmatprep.mubr.f32.mxu0 %v2864
      %2975 = vmatmul.mubr.f32.gmra.mrb[0].mxu0 %v2470
      %v2976 = vpop.f32.mrb[0].mxu0
      %v2977 = vadd.f32 %v2784, %v2976
      %v2978 = vpop.f32.mrb[0].mxu0
      %2979 = vmatprep.mubr.f32.mxu0 %v2866
      %2980 = vmatmul.mubr.f32.gmra.mrb[0].mxu0 %v2472
      %v2981 = vpop.f32.mrb[0].mxu0
      %v2982 = vadd.f32 %v2789, %v2981
      %v2983 = vpop.f32.mrb[0].mxu0
      %2984 = vmatprep.mubr.f32.mxu0 %v2868
      %2985 = vmatmul.mubr.f32.gmra.mrb[0].mxu0 %v2474
      %v2986 = vpop.f32.mrb[0].mxu0
      %v2987 = vadd.f32 %v2794, %v2986
      %v2988 = vpop.f32.mrb[0].mxu0
      %2989 = vmatprep.mubr.f32.mxu0 %v2870
      %2990 = vmatmul.mubr.f32.gmra.mrb[0].mxu0 %v2476
      %v2991 = vpop.f32.mrb[0].mxu0
      %v2992 = vadd.f32 %v2799, %v2991
      %v2993 = vpop.f32.mrb[0].mxu0
      %2994 = vmatprep.mubr.f32.mxu0 %v2872
      %2995 = vmatmul.mubr.f32.gmra.mrb[0].mxu0 %v2478
      %v2996 = vpop.f32.mrb[0].mxu0
      %v2997 = vadd.f32 %v2804, %v2996
      %v2998 = vpop.f32.mrb[0].mxu0
      %2999 = vmatprep.mubr.f32.mxu0 %v2874
      %3000 = vmatmul.mubr.f32.gmra.mrb[0].mxu0 %v2480
      %v3001 = vpop.f32.mrb[0].mxu0
      %v3002 = vadd.f32 %v2809, %v3001
      %v3003 = vpop.f32.mrb[0].mxu0
      %3004 = vmatprep.mubr.f32.mxu0 %v2876
      %3005 = vmatmul.mubr.f32.gmra.mrb[0].mxu0 %v2482
      %v3006 = vpop.f32.mrb[0].mxu0
      %v3007 = vadd.f32 %v2814, %v3006
      %v3008 = vpop.f32.mrb[0].mxu0
      %3009 = vmatprep.mubr.f32.mxu0 %v2878
      %3010 = vmatmul.mubr.f32.gmra.mrb[0].mxu0 %v2484
      %v3011 = vpop.f32.mrb[0].mxu0
      %v3012 = vadd.f32 %v2819, %v3011
      %v3013 = vpop.f32.mrb[0].mxu0
      %3014 = vmatprep.mubr.f32.mxu0 %v2880
      %3015 = vmatmul.mubr.f32.gmra.mrb[0].mxu0 %v2486
      %v3016 = vpop.f32.mrb[0].mxu0
      %v3017 = vadd.f32 %v2824, %v3016
      %v3018 = vpop.f32.mrb[0].mxu0
      %3019 = vmatprep.mubr.f32.mxu0 %v2882
      %3020 = vmatmul.mubr.f32.gmra.mrb[0].mxu0 %v2488
      %v3021 = vpop.f32.mrb[0].mxu0
      %v3022 = vadd.f32 %v2829, %v3021
      %v3023 = vpop.f32.mrb[0].mxu0
      %3024 = vmatprep.mubr.f32.mxu0 %v2884
      %3025 = vmatmul.mubr.f32.gmra.mrb[0].mxu0 %v2490
      %v3026 = vpop.f32.mrb[0].mxu0
      %v3027 = vadd.f32 %v2834, %v3026
      %v3028 = vpop.f32.mrb[0].mxu0
      %3029 = vmatprep.mubr.f32.mxu0 %v2886
      %3030 = vmatmul.mubr.f32.gmra.mrb[0].mxu0 %v2492
      %v3031 = vpop.f32.mrb[0].mxu0
      %v3032 = vadd.f32 %v2839, %v3031
      %v3033 = vpop.f32.mrb[0].mxu0
      %3034 = vmatprep.mubr.f32.mxu0 %v2888
      %3035 = vmatmul.mubr.f32.gmra.mrb[0].mxu0 %v2494
      %v3036 = vpop.f32.mrb[0].mxu0
      %v3037 = vadd.f32 %v2844, %v3036
      %v3038 = vpop.f32.mrb[0].mxu0
      %3039 = vmatprep.mubr.f32.mxu0 %v2890
      %3040 = vmatmul.mubr.f32.gmra.mrb[0].mxu0 %v2496
      %v3041 = vpop.f32.mrb[0].mxu0
      %v3042 = vadd.f32 %v2849, %v3041
      %v3043 = vpop.f32.mrb[0].mxu0
      %3044 = vmatprep.mubr.f32.mxu0 %v2893
      %3045 = vmatmul.mubr.f32.gmra.mrb[0].mxu0 %v2498
      %v3046 = vpop.f32.mrb[0].mxu0
      %v3047 = vadd.f32 %v2854, %v3046
      %v3048 = vpop.f32.mrb[0].mxu0
      %3049 = vdwg.mxu0
      %v3050 = vld [vmem:[#allocation2] sm:$0xfc]
      %v3051 = vld [vmem:[#allocation2 + $0x8] sm:$0xfc]
      %v3052 = vld [vmem:[#allocation2 + $0x110] sm:$0xff]
      %v3053 = vld [vmem:[#allocation2 + $0x118] sm:$0xff]
      %s3054 = scalar_lea.vmem %s1, 1152
      %v3055 = vld [vmem:[%s3054] sm:$0xff]
      %v3056 = vld [vmem:[%s3054 + $0x8] sm:$0xff]
      %v3057 = vld [vmem:[%s3054 + $0x10] sm:$0xff]
      %v3058 = vld [vmem:[%s3054 + $0x18] sm:$0xff]
      %v3059 = vld [vmem:[%s3054 + $0x20] sm:$0xff]
      %v3060 = vld [vmem:[%s3054 + $0x28] sm:$0xff]
      %v3061 = vld [vmem:[%s3054 + $0x30] sm:$0xff]
      %v3062 = vld [vmem:[%s3054 + $0x38] sm:$0xff]
      %v3063 = vld [vmem:[%s3054 + $0x40] sm:$0xff]
      %v3064 = vld [vmem:[%s3054 + $0x48] sm:$0xff]
      %v3065 = vld [vmem:[%s3054 + $0x50] sm:$0xff]
      %v3066 = vld [vmem:[%s3054 + $0x58] sm:$0xff]
      %v3067 = vld [vmem:[%s3054 + $0x60] sm:$0xff]
      %v3068 = vld [vmem:[%s3054 + $0x68] sm:$0xff]
      %v3069 = vld [vmem:[%s3054 + $0x70] sm:$0xff]
      %v3070 = vld [vmem:[%s3054 + $0x78] sm:$0xff]
      %v3071 = vld [vmem:[%s3054 + $0x80] sm:$0xff]
      %v3072 = vld [vmem:[%s3054 + $0x88] sm:$0xff]
      %v3077 = vrot.slane %v3050, 2
      %v3078 = vrot.slane %v2466, 2
      %v3079 = vsel %vm952, %v3077, %v3078
      %v3080 = vrot.slane %v3051, 2
      %v3081 = vrot.slane %v2467, 2
      %v3082 = vsel %vm952, %v3080, %v3081
      %v3083 = vrot.slane %v2468, 2
      %v3084 = vsel %vm952, %v3078, %v3083
      %v3085 = vrot.slane %v2469, 2
      %v3086 = vsel %vm952, %v3081, %v3085
      %v3087 = vrot.slane %v2470, 2
      %v3088 = vsel %vm952, %v3083, %v3087
      %v3089 = vrot.slane %v2471, 2
      %v3090 = vsel %vm952, %v3085, %v3089
      %v3091 = vrot.slane %v2472, 2
      %v3092 = vsel %vm952, %v3087, %v3091
      %v3093 = vrot.slane %v2473, 2
      %v3094 = vsel %vm952, %v3089, %v3093
      %v3095 = vrot.slane %v2474, 2
      %v3096 = vsel %vm952, %v3091, %v3095
      %v3097 = vrot.slane %v2475, 2
      %v3098 = vsel %vm952, %v3093, %v3097
      %v3099 = vrot.slane %v2476, 2
      %v3100 = vsel %vm952, %v3095, %v3099
      %v3101 = vrot.slane %v2477, 2
      %v3102 = vsel %vm952, %v3097, %v3101
      %v3103 = vrot.slane %v2478, 2
      %v3104 = vsel %vm952, %v3099, %v3103
      %v3105 = vrot.slane %v2479, 2
      %v3106 = vsel %vm952, %v3101, %v3105
      %v3107 = vrot.slane %v2480, 2
      %v3108 = vsel %vm952, %v3103, %v3107
      %v3109 = vrot.slane %v2481, 2
      %v3110 = vsel %vm952, %v3105, %v3109
      %v3111 = vrot.slane %v2482, 2
      %v3112 = vsel %vm952, %v3107, %v3111
      %v3113 = vrot.slane %v2483, 2
      %v3114 = vsel %vm952, %v3109, %v3113
      %v3115 = vrot.slane %v2484, 2
      %v3116 = vsel %vm952, %v3111, %v3115
      %v3117 = vrot.slane %v2485, 2
      %v3118 = vsel %vm952, %v3113, %v3117
      %v3119 = vrot.slane %v2486, 2
      %v3120 = vsel %vm952, %v3115, %v3119
      %v3121 = vrot.slane %v2487, 2
      %v3122 = vsel %vm952, %v3117, %v3121
      %v3123 = vrot.slane %v2488, 2
      %v3124 = vsel %vm952, %v3119, %v3123
      %v3125 = vrot.slane %v2489, 2
      %v3126 = vsel %vm952, %v3121, %v3125
      %v3127 = vrot.slane %v2490, 2
      %v3128 = vsel %vm952, %v3123, %v3127
      %v3129 = vrot.slane %v2491, 2
      %v3130 = vsel %vm952, %v3125, %v3129
      %v3131 = vrot.slane %v2492, 2
      %v3132 = vsel %vm952, %v3127, %v3131
      %v3133 = vrot.slane %v2493, 2
      %v3134 = vsel %vm952, %v3129, %v3133
      %v3135 = vrot.slane %v2494, 2
      %v3136 = vsel %vm952, %v3131, %v3135
      %v3137 = vrot.slane %v2495, 2
      %v3138 = vsel %vm952, %v3133, %v3137
      %v3139 = vrot.slane %v2496, 2
      %v3140 = vsel %vm952, %v3135, %v3139
      %v3141 = vrot.slane %v2497, 2
      %v3142 = vsel %vm952, %v3137, %v3141
      %v3143 = vrot.slane %v3052, 2
      %v3144 = vsel %vm952, %v3139, %v3143
      %v3145 = vrot.slane %v3053, 2
      %v3146 = vsel %vm952, %v3141, %v3145
      %v3165 = vsel %vm190, %v3082, 0
      %v3167 = vsel %vm190, %v3086, 0
      %v3169 = vsel %vm190, %v3090, 0
      %v3171 = vsel %vm190, %v3094, 0
      %v3173 = vsel %vm190, %v3098, 0
      %v3175 = vsel %vm190, %v3102, 0
      %v3177 = vsel %vm190, %v3106, 0
      %v3179 = vsel %vm190, %v3110, 0
      %v3181 = vsel %vm190, %v3114, 0
      %v3183 = vsel %vm190, %v3118, 0
      %v3185 = vsel %vm190, %v3122, 0
      %v3187 = vsel %vm190, %v3126, 0
      %v3189 = vsel %vm190, %v3130, 0
      %v3191 = vsel %vm190, %v3134, 0
      %v3193 = vsel %vm190, %v3138, 0
      %v3195 = vsel %vm190, %v3142, 0
      %v3197 = vsel %vm190, %v3146, 0
      %v3199 = vsel %vm190, %v3145, 0
      %3201 = vmatprep.subr.mxu0 0.0
      %3202 = vmatpush1.msra.mxu0 %v3055
      %3203 = vmatprep.subr.mxu0 0.0
      %3204 = vmatpush1.msra.mxu0 %v3056
      %3205 = vmatprep.subr.mxu0 0.0
      %3206 = vmatpush1.msra.mxu0 %v3057
      %3207 = vmatprep.subr.mxu0 0.0
      %3208 = vmatpush1.msra.mxu0 %v3058
      %3209 = vmatprep.subr.mxu0 0.0
      %3210 = vmatpush1.msra.mxu0 %v3059
      %3211 = vmatprep.subr.mxu0 0.0
      %3212 = vmatpush1.msra.mxu0 %v3060
      %3213 = vmatprep.subr.mxu0 0.0
      %3214 = vmatpush1.msra.mxu0 %v3061
      %3215 = vmatprep.subr.mxu0 0.0
      %3216 = vmatpush1.msra.mxu0 %v3062
      %3217 = vmatprep.subr.mxu0 0.0
      %3218 = vmatpush1.msra.mxu0 %v3063
      %3219 = vmatprep.subr.mxu0 0.0
      %3220 = vmatpush1.msra.mxu0 %v3064
      %3221 = vmatprep.subr.mxu0 0.0
      %3222 = vmatpush1.msra.mxu0 %v3065
      %3223 = vmatprep.subr.mxu0 0.0
      %3224 = vmatpush1.msra.mxu0 %v3066
      %3225 = vmatprep.subr.mxu0 0.0
      %3226 = vmatpush1.msra.mxu0 %v3067
      %3227 = vmatprep.subr.mxu0 0.0
      %3228 = vmatpush1.msra.mxu0 %v3068
      %3229 = vmatprep.subr.mxu0 0.0
      %3230 = vmatpush1.msra.mxu0 %v3069
      %3231 = vmatprep.subr.mxu0 0.0
      %3232 = vmatpush1.msra.mxu0 %v3070
      %3233 = vmatprep.subr.mxu0 0.0
      %3234 = vmatpush1.msra.mxu0 %v3071
      %3235 = vmatprep.subr.mxu0 0.0
      %3236 = vmatpush1.msra.mxu0 %v3072
      %3237 = vmatprep.subr.mxu0 0.0
      %3238 = vmatpush1.msra.mxu0 0.0
      %3239 = vmatprep.subr.mxu0 0.0
      %3240 = vmatpush1.msra.mxu0 0.0
      %3241 = vmatprep.subr.mxu0 0.0
      %3242 = vmatpush1.msra.mxu0 0.0
      %3243 = vmatprep.subr.mxu0 0.0
      %3244 = vmatpush1.msra.mxu0 0.0
      %3245 = vmatprep.subr.mxu0 0.0
      %3246 = vmatpush1.msra.mxu0 0.0
      %3247 = vmatprep.subr.mxu0 0.0
      %3248 = vmatpush1.msra.mxu0 0.0
      %3249 = vmatprep.subr.mxu0 0.0
      %3250 = vmatpush1.msra.mxu0 0.0
      %3251 = vmatprep.subr.mxu0 0.0
      %3252 = vmatpush1.msra.mxu0 0.0
      %3253 = vmatprep.subr.mxu0 0.0
      %3254 = vmatpush1.msra.mxu0 0.0
      %3255 = vmatprep.subr.mxu0 0.0
      %3256 = vmatpush1.msra.mxu0 0.0
      %3257 = vmatprep.subr.mxu0 0.0
      %3258 = vmatpush1.msra.mxu0 0.0
      %3259 = vmatprep.subr.mxu0 0.0
      %3260 = vmatpush1.msra.mxu0 0.0
      %3261 = vmatprep.subr.mxu0 0.0
      %3262 = vmatpush1.msra.mxu0 0.0
      %3263 = vmatprep.subr.mxu0 0.0
      %3264 = vmatpush1.msra.mxu0 0.0
      %3265 = vmatprep.mubr.f32.mxu0 %v3165
      %3266 = vmatmul.mubr.f32.gmra.mrb[0].mxu0 %v3079
      %v3267 = vpop.f32.mrb[0].mxu0
      %v3268 = vadd.f32 0.0, %v3267
      %v3269 = vpop.f32.mrb[0].mxu0
      %3270 = vmatprep.mubr.f32.mxu0 %v3167
      %3271 = vmatmul.mubr.f32.gmra.mrb[0].mxu0 %v3084
      %v3272 = vpop.f32.mrb[0].mxu0
      %v3273 = vadd.f32 0.0, %v3272
      %v3274 = vpop.f32.mrb[0].mxu0
      %3275 = vmatprep.mubr.f32.mxu0 %v3169
      %3276 = vmatmul.mubr.f32.gmra.mrb[0].mxu0 %v3088
      %v3277 = vpop.f32.mrb[0].mxu0
      %v3278 = vadd.f32 0.0, %v3277
      %v3279 = vpop.f32.mrb[0].mxu0
      %3280 = vmatprep.mubr.f32.mxu0 %v3171
      %3281 = vmatmul.mubr.f32.gmra.mrb[0].mxu0 %v3092
      %v3282 = vpop.f32.mrb[0].mxu0
      %v3283 = vadd.f32 0.0, %v3282
      %v3284 = vpop.f32.mrb[0].mxu0
      %3285 = vmatprep.mubr.f32.mxu0 %v3173
      %3286 = vmatmul.mubr.f32.gmra.mrb[0].mxu0 %v3096
      %v3287 = vpop.f32.mrb[0].mxu0
      %v3288 = vadd.f32 0.0, %v3287
      %v3289 = vpop.f32.mrb[0].mxu0
      %3290 = vmatprep.mubr.f32.mxu0 %v3175
      %3291 = vmatmul.mubr.f32.gmra.mrb[0].mxu0 %v3100
      %v3292 = vpop.f32.mrb[0].mxu0
      %v3293 = vadd.f32 0.0, %v3292
      %v3294 = vpop.f32.mrb[0].mxu0
      %3295 = vmatprep.mubr.f32.mxu0 %v3177
      %3296 = vmatmul.mubr.f32.gmra.mrb[0].mxu0 %v3104
      %v3297 = vpop.f32.mrb[0].mxu0
      %v3298 = vadd.f32 0.0, %v3297
      %v3299 = vpop.f32.mrb[0].mxu0
      %3300 = vmatprep.mubr.f32.mxu0 %v3179
      %3301 = vmatmul.mubr.f32.gmra.mrb[0].mxu0 %v3108
      %v3302 = vpop.f32.mrb[0].mxu0
      %v3303 = vadd.f32 0.0, %v3302
      %v3304 = vpop.f32.mrb[0].mxu0
      %3305 = vmatprep.mubr.f32.mxu0 %v3181
      %3306 = vmatmul.mubr.f32.gmra.mrb[0].mxu0 %v3112
      %v3307 = vpop.f32.mrb[0].mxu0
      %v3308 = vadd.f32 0.0, %v3307
      %v3309 = vpop.f32.mrb[0].mxu0
      %3310 = vmatprep.mubr.f32.mxu0 %v3183
      %3311 = vmatmul.mubr.f32.gmra.mrb[0].mxu0 %v3116
      %v3312 = vpop.f32.mrb[0].mxu0
      %v3313 = vadd.f32 0.0, %v3312
      %v3314 = vpop.f32.mrb[0].mxu0
      %3315 = vmatprep.mubr.f32.mxu0 %v3185
      %3316 = vmatmul.mubr.f32.gmra.mrb[0].mxu0 %v3120
      %v3317 = vpop.f32.mrb[0].mxu0
      %v3318 = vadd.f32 0.0, %v3317
      %v3319 = vpop.f32.mrb[0].mxu0
      %3320 = vmatprep.mubr.f32.mxu0 %v3187
      %3321 = vmatmul.mubr.f32.gmra.mrb[0].mxu0 %v3124
      %v3322 = vpop.f32.mrb[0].mxu0
      %v3323 = vadd.f32 0.0, %v3322
      %v3324 = vpop.f32.mrb[0].mxu0
      %3325 = vmatprep.mubr.f32.mxu0 %v3189
      %3326 = vmatmul.mubr.f32.gmra.mrb[0].mxu0 %v3128
      %v3327 = vpop.f32.mrb[0].mxu0
      %v3328 = vadd.f32 0.0, %v3327
      %v3329 = vpop.f32.mrb[0].mxu0
      %3330 = vmatprep.mubr.f32.mxu0 %v3191
      %3331 = vmatmul.mubr.f32.gmra.mrb[0].mxu0 %v3132
      %v3332 = vpop.f32.mrb[0].mxu0
      %v3333 = vadd.f32 0.0, %v3332
      %v3334 = vpop.f32.mrb[0].mxu0
      %3335 = vmatprep.mubr.f32.mxu0 %v3193
      %3336 = vmatmul.mubr.f32.gmra.mrb[0].mxu0 %v3136
      %v3337 = vpop.f32.mrb[0].mxu0
      %v3338 = vadd.f32 0.0, %v3337
      %v3339 = vpop.f32.mrb[0].mxu0
      %3340 = vmatprep.mubr.f32.mxu0 %v3195
      %3341 = vmatmul.mubr.f32.gmra.mrb[0].mxu0 %v3140
      %v3342 = vpop.f32.mrb[0].mxu0
      %v3343 = vadd.f32 0.0, %v3342
      %v3344 = vpop.f32.mrb[0].mxu0
      %3345 = vmatprep.mubr.f32.mxu0 %v3197
      %3346 = vmatmul.mubr.f32.gmra.mrb[0].mxu0 %v3144
      %v3347 = vpop.f32.mrb[0].mxu0
      %v3348 = vadd.f32 0.0, %v3347
      %v3349 = vpop.f32.mrb[0].mxu0
      %3350 = vmatprep.mubr.f32.mxu0 %v3199
      %3351 = vmatmul.mubr.f32.gmra.mrb[0].mxu0 %v3143
      %v3352 = vpop.f32.mrb[0].mxu0
      %v3353 = vadd.f32 0.0, %v3352
      %v3354 = vpop.f32.mrb[0].mxu0
      %3355 = vdwg.mxu0
      %v3356 = vadd.f32 %v2962, %v3268
      %v3357 = vadd.f32 %v2967, %v3273
      %v3358 = vadd.f32 %v2972, %v3278
      %v3359 = vadd.f32 %v2977, %v3283
      %v3360 = vadd.f32 %v2982, %v3288
      %v3361 = vadd.f32 %v2987, %v3293
      %v3362 = vadd.f32 %v2992, %v3298
      %v3363 = vadd.f32 %v2997, %v3303
      %v3364 = vadd.f32 %v3002, %v3308
      %v3365 = vadd.f32 %v3007, %v3313
      %v3366 = vadd.f32 %v3012, %v3318
      %v3367 = vadd.f32 %v3017, %v3323
      %v3368 = vadd.f32 %v3022, %v3328
      %v3369 = vadd.f32 %v3027, %v3333
      %v3370 = vadd.f32 %v3032, %v3338
      %v3371 = vadd.f32 %v3037, %v3343
      %v3372 = vadd.f32 %v3042, %v3348
      %v3373 = vadd.f32 %v3047, %v3353
      %3374 = vst [vmem:[%s184] sm:$0xff] %v3356
      %3375 = vst [vmem:[%s184 + $0x8] sm:$0xff] %v3357
      %v3376 = vadd.f32 %v3356, %v3357
      %v3377 = vrot.slane %v3376, 4
      %v3378 = vadd.f32 %v3376, %v3377
      %v3379 = vrot.slane %v3378, 2
      %v3380 = vadd.f32 %v3378, %v3379
      %v3381 = vrot.slane %v3380, 1
      %v3382 = vadd.f32 %v3380, %v3381
      %v3383 = vadd.f32 %v3382, 0.0
      %v3384 = vmul.f32 %v3356, %v3356
      %v3385 = vmul.f32 %v3357, %v3357
      %v3386 = vadd.f32 %v3384, %v3385
      %v3387 = vrot.slane %v3386, 4
      %v3388 = vadd.f32 %v3386, %v3387
      %v3389 = vrot.slane %v3388, 2
      %v3390 = vadd.f32 %v3388, %v3389
      %v3391 = vrot.slane %v3390, 1
      %v3392 = vadd.f32 %v3390, %v3391
      %v3393 = vadd.f32 %v3392, 0.0
      %s3394 = scalar_lea.vmem %s184, 16
      %3395 = vst [vmem:[%s3394 - $0x2] sm:$0xfc] %v3358
      %3396 = vst [vmem:[%s3394 + $0x6] sm:$0xff] %v3359
      %3397 = vst [vmem:[%s3394 + $0xe] sm:$0x3] %v3360
      %v3401 = vrot.slane %v3358, 2
      %v3402 = vrot.slane %v3359, 2
      %v3403 = vsel %vm952, %v3401, %v3402
      %v3404 = vrot.slane %v3360, 2
      %v3405 = vsel %vm952, %v3402, %v3404
      %v3408 = vadd.f32 %v3403, %v3405
      %v3409 = vrot.slane %v3408, 4
      %v3410 = vadd.f32 %v3408, %v3409
      %v3411 = vrot.slane %v3410, 2
      %v3412 = vadd.f32 %v3410, %v3411
      %v3413 = vrot.slane %v3412, 1
      %v3414 = vadd.f32 %v3412, %v3413
      %v3415 = vadd.f32 %v3383, %v3414
      %v3416 = vmul.f32 %v3358, %v3358
      %v3417 = vmul.f32 %v3359, %v3359
      %v3418 = vmul.f32 %v3360, %v3360
      %v3422 = vrot.slane %v3416, 2
      %v3423 = vrot.slane %v3417, 2
      %v3424 = vsel %vm952, %v3422, %v3423
      %v3425 = vrot.slane %v3418, 2
      %v3426 = vsel %vm952, %v3423, %v3425
      %v3429 = vadd.f32 %v3424, %v3426
      %v3430 = vrot.slane %v3429, 4
      %v3431 = vadd.f32 %v3429, %v3430
      %v3432 = vrot.slane %v3431, 2
      %v3433 = vadd.f32 %v3431, %v3432
      %v3434 = vrot.slane %v3433, 1
      %v3435 = vadd.f32 %v3433, %v3434
      %v3436 = vadd.f32 %v3393, %v3435
      %s3437 = scalar_lea.vmem %s184, 32
      %3438 = vst [vmem:[%s3437 - $0x4] sm:$0xf0] %v3360
      %3439 = vst [vmem:[%s3437 + $0x4] sm:$0xff] %v3361
      %3440 = vst [vmem:[%s3437 + $0xc] sm:$0xf] %v3362
      %vm3443 = vcmask 1043456
      %v3444 = vrot.slane %v3360, 4
      %v3445 = vrot.slane %v3361, 4
      %v3446 = vsel %vm3443, %v3444, %v3445
      %v3447 = vrot.slane %v3362, 4
      %v3448 = vsel %vm3443, %v3445, %v3447
      %v3451 = vadd.f32 %v3446, %v3448
      %v3452 = vrot.slane %v3451, 4
      %v3453 = vadd.f32 %v3451, %v3452
      %v3454 = vrot.slane %v3453, 2
      %v3455 = vadd.f32 %v3453, %v3454
      %v3456 = vrot.slane %v3455, 1
      %v3457 = vadd.f32 %v3455, %v3456
      %v3458 = vadd.f32 %v3415, %v3457
      %v3459 = vmul.f32 %v3361, %v3361
      %v3460 = vmul.f32 %v3362, %v3362
      %v3463 = vrot.slane %v3418, 4
      %v3464 = vrot.slane %v3459, 4
      %v3465 = vsel %vm3443, %v3463, %v3464
      %v3466 = vrot.slane %v3460, 4
      %v3467 = vsel %vm3443, %v3464, %v3466
      %v3470 = vadd.f32 %v3465, %v3467
      %v3471 = vrot.slane %v3470, 4
      %v3472 = vadd.f32 %v3470, %v3471
      %v3473 = vrot.slane %v3472, 2
      %v3474 = vadd.f32 %v3472, %v3473
      %v3475 = vrot.slane %v3474, 1
      %v3476 = vadd.f32 %v3474, %v3475
      %v3477 = vadd.f32 %v3436, %v3476
      %s3478 = scalar_lea.vmem %s184, 48
      %3479 = vst [vmem:[%s3478 - $0x6] sm:$0xc0] %v3362
      %3480 = vst [vmem:[%s3478 + $0x2] sm:$0xff] %v3363
      %3481 = vst [vmem:[%s3478 + $0xa] sm:$0x3f] %v3364
      %vm3484 = vcmask 1041408
      %v3485 = vrot.slane %v3362, 6
      %v3486 = vrot.slane %v3363, 6
      %v3487 = vsel %vm3484, %v3485, %v3486
      %v3488 = vrot.slane %v3364, 6
      %v3489 = vsel %vm3484, %v3486, %v3488
      %v3492 = vadd.f32 %v3487, %v3489
      %v3493 = vrot.slane %v3492, 4
      %v3494 = vadd.f32 %v3492, %v3493
      %v3495 = vrot.slane %v3494, 2
      %v3496 = vadd.f32 %v3494, %v3495
      %v3497 = vrot.slane %v3496, 1
      %v3498 = vadd.f32 %v3496, %v3497
      %v3499 = vadd.f32 %v3458, %v3498
      %v3500 = vmul.f32 %v3363, %v3363
      %v3501 = vmul.f32 %v3364, %v3364
      %v3504 = vrot.slane %v3460, 6
      %v3505 = vrot.slane %v3500, 6
      %v3506 = vsel %vm3484, %v3504, %v3505
      %v3507 = vrot.slane %v3501, 6
      %v3508 = vsel %vm3484, %v3505, %v3507
      %v3511 = vadd.f32 %v3506, %v3508
      %v3512 = vrot.slane %v3511, 4
      %v3513 = vadd.f32 %v3511, %v3512
      %v3514 = vrot.slane %v3513, 2
      %v3515 = vadd.f32 %v3513, %v3514
      %v3516 = vrot.slane %v3515, 1
      %v3517 = vadd.f32 %v3515, %v3516
      %v3518 = vadd.f32 %v3477, %v3517
      %s3519 = scalar_lea.vmem %s184, 64
      %3520 = vst [vmem:[%s3519] sm:$0xff] %v3365
      %3521 = vst [vmem:[%s3519 + $0x8] sm:$0xff] %v3366
      %v3522 = vadd.f32 %v3365, %v3366
      %v3523 = vrot.slane %v3522, 4
      %v3524 = vadd.f32 %v3522, %v3523
      %v3525 = vrot.slane %v3524, 2
      %v3526 = vadd.f32 %v3524, %v3525
      %v3527 = vrot.slane %v3526, 1
      %v3528 = vadd.f32 %v3526, %v3527
      %v3529 = vadd.f32 %v3499, %v3528
      %v3530 = vmul.f32 %v3365, %v3365
      %v3531 = vmul.f32 %v3366, %v3366
      %v3532 = vadd.f32 %v3530, %v3531
      %v3533 = vrot.slane %v3532, 4
      %v3534 = vadd.f32 %v3532, %v3533
      %v3535 = vrot.slane %v3534, 2
      %v3536 = vadd.f32 %v3534, %v3535
      %v3537 = vrot.slane %v3536, 1
      %v3538 = vadd.f32 %v3536, %v3537
      %v3539 = vadd.f32 %v3518, %v3538
      %s3540 = scalar_lea.vmem %s184, 80
      %3541 = vst [vmem:[%s3540 - $0x2] sm:$0xfc] %v3367
      %3542 = vst [vmem:[%s3540 + $0x6] sm:$0xff] %v3368
      %3543 = vst [vmem:[%s3540 + $0xe] sm:$0x3] %v3369
      %v3547 = vrot.slane %v3367, 2
      %v3548 = vrot.slane %v3368, 2
      %v3549 = vsel %vm952, %v3547, %v3548
      %v3550 = vrot.slane %v3369, 2
      %v3551 = vsel %vm952, %v3548, %v3550
      %v3554 = vadd.f32 %v3549, %v3551
      %v3555 = vrot.slane %v3554, 4
      %v3556 = vadd.f32 %v3554, %v3555
      %v3557 = vrot.slane %v3556, 2
      %v3558 = vadd.f32 %v3556, %v3557
      %v3559 = vrot.slane %v3558, 1
      %v3560 = vadd.f32 %v3558, %v3559
      %v3561 = vadd.f32 %v3529, %v3560
      %v3562 = vmul.f32 %v3367, %v3367
      %v3563 = vmul.f32 %v3368, %v3368
      %v3564 = vmul.f32 %v3369, %v3369
      %v3568 = vrot.slane %v3562, 2
      %v3569 = vrot.slane %v3563, 2
      %v3570 = vsel %vm952, %v3568, %v3569
      %v3571 = vrot.slane %v3564, 2
      %v3572 = vsel %vm952, %v3569, %v3571
      %v3575 = vadd.f32 %v3570, %v3572
      %v3576 = vrot.slane %v3575, 4
      %v3577 = vadd.f32 %v3575, %v3576
      %v3578 = vrot.slane %v3577, 2
      %v3579 = vadd.f32 %v3577, %v3578
      %v3580 = vrot.slane %v3579, 1
      %v3581 = vadd.f32 %v3579, %v3580
      %v3582 = vadd.f32 %v3539, %v3581
      %s3583 = scalar_lea.vmem %s184, 96
      %3584 = vst [vmem:[%s3583 - $0x4] sm:$0xf0] %v3369
      %3585 = vst [vmem:[%s3583 + $0x4] sm:$0xff] %v3370
      %3586 = vst [vmem:[%s3583 + $0xc] sm:$0xf] %v3371
      %v3589 = vrot.slane %v3369, 4
      %v3590 = vrot.slane %v3370, 4
      %v3591 = vsel %vm3443, %v3589, %v3590
      %v3592 = vrot.slane %v3371, 4
      %v3593 = vsel %vm3443, %v3590, %v3592
      %v3596 = vadd.f32 %v3591, %v3593
      %v3597 = vrot.slane %v3596, 4
      %v3598 = vadd.f32 %v3596, %v3597
      %v3599 = vrot.slane %v3598, 2
      %v3600 = vadd.f32 %v3598, %v3599
      %v3601 = vrot.slane %v3600, 1
      %v3602 = vadd.f32 %v3600, %v3601
      %v3603 = vadd.f32 %v3561, %v3602
      %v3604 = vmul.f32 %v3370, %v3370
      %v3605 = vmul.f32 %v3371, %v3371
      %v3608 = vrot.slane %v3564, 4
      %v3609 = vrot.slane %v3604, 4
      %v3610 = vsel %vm3443, %v3608, %v3609
      %v3611 = vrot.slane %v3605, 4
      %v3612 = vsel %vm3443, %v3609, %v3611
      %v3615 = vadd.f32 %v3610, %v3612
      %v3616 = vrot.slane %v3615, 4
      %v3617 = vadd.f32 %v3615, %v3616
      %v3618 = vrot.slane %v3617, 2
      %v3619 = vadd.f32 %v3617, %v3618
      %v3620 = vrot.slane %v3619, 1
      %v3621 = vadd.f32 %v3619, %v3620
      %v3622 = vadd.f32 %v3582, %v3621
      %s3623 = scalar_lea.vmem %s184, 112
      %3624 = vst [vmem:[%s3623 - $0x6] sm:$0xc0] %v3371
      %3625 = vst [vmem:[%s3623 + $0x2] sm:$0xff] %v3372
      %3626 = vst [vmem:[%s3623 + $0xa] sm:$0x3f] %v3373
      %v3629 = vrot.slane %v3371, 6
      %v3630 = vrot.slane %v3372, 6
      %v3631 = vsel %vm3484, %v3629, %v3630
      %v3632 = vrot.slane %v3373, 6
      %v3633 = vsel %vm3484, %v3630, %v3632
      %v3636 = vadd.f32 %v3631, %v3633
      %v3637 = vrot.slane %v3636, 4
      %v3638 = vadd.f32 %v3636, %v3637
      %v3639 = vrot.slane %v3638, 2
      %v3640 = vadd.f32 %v3638, %v3639
      %v3641 = vrot.slane %v3640, 1
      %v3642 = vadd.f32 %v3640, %v3641
      %v3643 = vadd.f32 %v3603, %v3642
      %v3644 = vmul.f32 %v3372, %v3372
      %v3645 = vmul.f32 %v3373, %v3373
      %v3648 = vrot.slane %v3605, 6
      %v3649 = vrot.slane %v3644, 6
      %v3650 = vsel %vm3484, %v3648, %v3649
      %v3651 = vrot.slane %v3645, 6
      %v3652 = vsel %vm3484, %v3649, %v3651
      %v3655 = vadd.f32 %v3650, %v3652
      %v3656 = vrot.slane %v3655, 4
      %v3657 = vadd.f32 %v3655, %v3656
      %v3658 = vrot.slane %v3657, 2
      %v3659 = vadd.f32 %v3657, %v3658
      %v3660 = vrot.slane %v3659, 1
      %v3661 = vadd.f32 %v3659, %v3660
      %v3662 = vadd.f32 %v3622, %v3661
      %v3663 = vsel %vm229, %v3643, %v3662
      %3664 = vst [vmem:[%s189] sm:$0x3] %v3663
      %s3665 = smul.u32 8, %s15
      %p3666 = scmp.lt.s32.totalorder %s3665, 15
      %s3667 = scalar_select %p3666, %s3665, 15
      %s3668 = smul.addr %s3667, 2
      %s3669 = smul.addr %s3668, 8
      %s3670 = scalar_lea.vmem %s2, %s3669
      %p3671 = scmp.lt.s32.totalorder %s15, 1
      %s3672 = scalar_select %p3671, %s15, 1
      %s3673 = smul.addr %s3672, 2
      %s3674 = scalar_lea.vmem %s3, %s3673
      // Predicated region
      $region29: #{conv_transpose_block_forward.2} parent=27 // pred_check
        %p3675 = pneg %p80
      $region30: #{conv_transpose_block_forward.2} parent=27 // pred_check_branch
        %3677 = sbr.rel (%p3675) target = $region32
      $region31: #{conv_transpose_block_forward.2} parent=27 // pred_region
        %s3678 = smul.u32 8, %s15
      $region32: #{conv_transpose_block_forward.2} parent=27 // pred_fallthru
        _
      // Predicated region
      $region33: #{conv_transpose_block_forward.2} parent=27 // pred_check
        %p3679 = pneg %p106
      $region34: #{conv_transpose_block_forward.2} parent=27 // pred_check_branch
        %3681 = sbr.rel (%p3679) target = $region36
      $region35: #{conv_transpose_block_forward.2} parent=27 // pred_region
        _
      $region36: #{conv_transpose_block_forward.2} parent=27 // pred_fallthru
        _
    $region28: #{conv_transpose_block_forward.2} parent=5 // pred_fallthru
      _
    %p3682 = scmp.le.s32.totalorder 2, %s10
    // Predicated region
    $region37: #{conv_transpose_block_forward.2} parent=5 // pred_check
      %p3683 = pneg %p3682
    $region38: #{conv_transpose_block_forward.2} parent=5 // pred_check_branch
      %3685 = sbr.rel (%p3683) target = $region40
    $region39: #{conv_transpose_block_forward.2} parent=5 // pred_region
      %s3686 = ssub.s32 %s10, 2
      // Predicated region
      $region41: #{conv_transpose_block_forward.2} parent=39 // pred_check
        %p3687 = pneg %p86
      $region42: #{conv_transpose_block_forward.2} parent=39 // pred_check_branch
        %3689 = sbr.rel (%p3687) target = $region44
      $region43: #{conv_transpose_block_forward.2} parent=39 // pred_region
        %s3690 = smul.u32 8, %s16
        %p3691 = scmp.lt.s32.totalorder %s3690, 15
        %s3692 = scalar_select %p3691, %s3690, 15
        %s3693 = smul.addr %s3692, 2
        %s3694 = smul.addr %s3693, 8
        %s3695 = scalar_lea.vmem %s2, %s3694
      $region44: #{conv_transpose_block_forward.2} parent=39 // pred_fallthru
        _
      // Predicated region
      $region45: #{conv_transpose_block_forward.2} parent=39 // pred_check
        %p3696 = pneg %p112
      $region46: #{conv_transpose_block_forward.2} parent=39 // pred_check_branch
        %3698 = sbr.rel (%p3696) target = $region48
      $region47: #{conv_transpose_block_forward.2} parent=39 // pred_region
        %p3699 = scmp.lt.s32.totalorder %s16, 1
        %s3700 = scalar_select %p3699, %s16, 1
        %s3701 = smul.addr %s3700, 2
        %s3702 = scalar_lea.vmem %s3, %s3701
      $region48: #{conv_transpose_block_forward.2} parent=39 // pred_fallthru
        _
    $region40: #{conv_transpose_block_forward.2} parent=5 // pred_fallthru
      _
  $region6: #{conv_transpose_block_forward.2} parent=0 // loop_footer
    %s14 = sadd.s32 1, %s10
  $region7: #{conv_transpose_block_forward.2} parent=0 // loop_footer_branch
    %9 = sbr.rel target = $region3
  $region8: #{conv_transpose_block_forward.2} parent=0 // loop_exit
    _

</llo_original>
